<compile_context>
chip_gen: v7x
topology: tpu7x:2x2x1
jax: 0.10.0
libtpu: 0.0.40
codegen_flags: <defaults>
</compile_context>

<pallas_src>
import functools

import jax
import jax.numpy as jnp
from jax.experimental import pallas as pl
from jax.experimental.pallas import tpu as pltpu


def _round_up(x, m):
    return (x + m - 1) // m * m


def _row_block(m, target):
    # Full extent for small inputs (always legal), `target` rows otherwise.
    return m if m <= target else target


# --------------------------- fused activations ------------------------------

_SQRT_HALF = 0.7071067811865476


def _erf_poly(x):
    # Abramowitz & Stegun 7.1.26 rational approximation, |error| <= 1.5e-7
    # (f32-resolution exact).  Built only from ops with guaranteed Mosaic
    # lowering (exp / mul / add / select / div).
    p = 0.3275911
    a1, a2, a3, a4, a5 = (0.254829592, -0.284496736, 1.421413741,
                          -1.453152027, 1.061405429)
    sign = jnp.where(x >= 0.0, 1.0, -1.0)
    ax = jnp.abs(x)
    t = 1.0 / (1.0 + p * ax)
    poly = ((((a5 * t + a4) * t + a3) * t + a2) * t + a1) * t
    return sign * (1.0 - poly * jnp.exp(-ax * ax))


def _gelu_exact(x):
    # torch nn.GELU() default (erf form), fused into the matmul epilogue.
    # TODO(synk): switch to jax.lax.erf once Mosaic erf lowering is relied on.
    return 0.5 * x * (1.0 + _erf_poly(x * _SQRT_HALF))


# ----------------------------- tiled matmul ---------------------------------

def _matmul_kernel(x_ref, w_ref, o_ref, acc_ref, *, act):
    @pl.when(pl.program_id(2) == 0)
    def _():
        acc_ref[...] = jnp.zeros_like(acc_ref)

    acc_ref[...] += jnp.dot(x_ref[...], w_ref[...],
                            preferred_element_type=jnp.float32)

    @pl.when(pl.program_id(2) == pl.num_programs(2) - 1)
    def _():
        r = acc_ref[...]
        if act is not None:
            r = act(r)
        o_ref[...] = r.astype(o_ref.dtype)


def _matmul_bias_kernel(x_ref, w_ref, b_ref, o_ref, acc_ref, *, act):
    @pl.when(pl.program_id(2) == 0)
    def _():
        acc_ref[...] = jnp.zeros_like(acc_ref)

    acc_ref[...] += jnp.dot(x_ref[...], w_ref[...],
                            preferred_element_type=jnp.float32)

    @pl.when(pl.program_id(2) == pl.num_programs(2) - 1)
    def _():
        r = acc_ref[...] + b_ref[...]
        if act is not None:
            r = act(r)
        o_ref[...] = r.astype(o_ref.dtype)


def matmul(x, w, b=None, *, out_dtype=jnp.float32,
           compute_dtype=jnp.bfloat16, tm=512, tn=512, tk=512,
           activation=None):
    """Tiled (M,K)@(K,N) with optional fused bias + activation epilogue.

    bf16 MXU inputs / f32 accumulation; inputs already in compute_dtype are
    passed through untouched (weights are pre-cast once in prepare_params).
    """
    m, k = x.shape
    k2, n = w.shape
    assert k == k2
    tm_ = m if m <= tm else tm
    tn_ = n if n <= tn else tn
    tk_ = k if k <= tk else tk
    mp, np_, kp = _round_up(m, tm_), _round_up(n, tn_), _round_up(k, tk_)

    xc = x if x.dtype == compute_dtype else x.astype(compute_dtype)
    wc = w if w.dtype == compute_dtype else w.astype(compute_dtype)
    # TODO(synk): handle ragged M/N/K with partial tiles instead of padding.
    if (mp, kp) != (m, k):
        xc = jnp.pad(xc, ((0, mp - m), (0, kp - k)))
    if (kp, np_) != (k, n):
        wc = jnp.pad(wc, ((0, kp - k), (0, np_ - n)))

    grid = (mp // tm_, np_ // tn_, kp // tk_)
    x_spec = pl.BlockSpec((tm_, tk_), lambda i, j, kk: (i, kk))
    w_spec = pl.BlockSpec((tk_, tn_), lambda i, j, kk: (kk, j))
    o_spec = pl.BlockSpec((tm_, tn_), lambda i, j, kk: (i, j))
    params = pltpu.CompilerParams(
        dimension_semantics=("parallel", "parallel", "arbitrary"))
    scratch = [pltpu.VMEM((tm_, tn_), jnp.float32)]

    if b is None:
        out = pl.pallas_call(
            functools.partial(_matmul_kernel, act=activation), grid=grid,
            in_specs=[x_spec, w_spec], out_specs=o_spec,
            out_shape=jax.ShapeDtypeStruct((mp, np_), out_dtype),
            scratch_shapes=scratch, compiler_params=params,
        )(xc, wc)
    else:
        bc = b.astype(jnp.float32).reshape(1, n)
        if np_ != n:
            bc = jnp.pad(bc, ((0, 0), (0, np_ - n)))
        b_spec = pl.BlockSpec((1, tn_), lambda i, j, kk: (0, j))
        out = pl.pallas_call(
            functools.partial(_matmul_bias_kernel, act=activation), grid=grid,
            in_specs=[x_spec, w_spec, b_spec], out_specs=o_spec,
            out_shape=jax.ShapeDtypeStruct((mp, np_), out_dtype),
            scratch_shapes=scratch, compiler_params=params,
        )(xc, wc, bc)
    if (mp, np_) != (m, n):
        out = out[:m, :n]
    return out


# ------------------------------- RMSNorm ------------------------------------

def _rmsnorm_kernel(x_ref, w_ref, o_ref, *, eps):
    # PyTorch reference: norm = ||x||_2(dim=-1, keepdim); rms =
    # sqrt(mean(norm^2, -1) + eps).  The mean runs over a size-1 axis, so
    # rms == sqrt(sum(x^2) + eps) (no 1/D factor).  out = w * x / rms.
    x = x_ref[...].astype(jnp.float32)
    ss = jnp.sum(x * x, axis=-1, keepdims=True)
    o_ref[...] = ((x * jax.lax.rsqrt(ss + eps)) * w_ref[...]).astype(o_ref.dtype)


def rmsnorm(x, w, eps, *, block_rows=256, out_dtype=None):
    shape = x.shape
    d = shape[-1]
    x2 = x.reshape(-1, d)
    m = x2.shape[0]
    rb = _row_block(m, block_rows)
    mp = _round_up(m, rb)
    if mp != m:
        x2 = jnp.pad(x2, ((0, mp - m), (0, 0)))
    out_dtype = x.dtype if out_dtype is None else out_dtype
    out = pl.pallas_call(
        functools.partial(_rmsnorm_kernel, eps=eps),
        grid=(mp // rb,),
        in_specs=[pl.BlockSpec((rb, d), lambda i: (i, 0)),
                  pl.BlockSpec((1, d), lambda i: (0, 0))],
        out_specs=pl.BlockSpec((rb, d), lambda i: (i, 0)),
        out_shape=jax.ShapeDtypeStruct((mp, d), out_dtype),
        compiler_params=pltpu.CompilerParams(
            dimension_semantics=("parallel",)),
    )(x2, w.reshape(1, d))
    if mp != m:
        out = out[:m]
    return out.reshape(shape)


def _gated_rmsnorm_kernel(y_ref, z_ref, w_ref, o_ref, *, eps, inv_d):
    # Mamba2 RMSNormGated (norm_before_gate=False): g = y * silu(z);
    # out = g * rsqrt(mean(g^2) + eps) * weight.  Compute in f32 (v5e VPU/EUP
    # have no bf16), stream bf16 at the HBM boundary.
    y = y_ref[...].astype(jnp.float32)
    z = z_ref[...].astype(jnp.float32)
    g = y * (z * (1.0 / (1.0 + jnp.exp(-z))))
    var = jnp.sum(g * g, axis=-1, keepdims=True) * inv_d
    o_ref[...] = ((g * jax.lax.rsqrt(var + eps)) * w_ref[...]).astype(o_ref.dtype)


def gated_rmsnorm(y, z, w, eps=1e-5, *, block_rows=256, out_dtype=None):
    shape = y.shape
    d = shape[-1]
    y2 = y.reshape(-1, d)
    z2 = z.reshape(-1, d)
    m = y2.shape[0]
    rb = _row_block(m, block_rows)
    mp = _round_up(m, rb)
    if mp != m:
        y2 = jnp.pad(y2, ((0, mp - m), (0, 0)))
        z2 = jnp.pad(z2, ((0, mp - m), (0, 0)))
    out_dtype = y.dtype if out_dtype is None else out_dtype
    out = pl.pallas_call(
        functools.partial(_gated_rmsnorm_kernel, eps=eps, inv_d=1.0 / d),
        grid=(mp // rb,),
        in_specs=[pl.BlockSpec((rb, d), lambda i: (i, 0)),
                  pl.BlockSpec((rb, d), lambda i: (i, 0)),
                  pl.BlockSpec((1, d), lambda i: (0, 0))],
        out_specs=pl.BlockSpec((rb, d), lambda i: (i, 0)),
        out_shape=jax.ShapeDtypeStruct((mp, d), out_dtype),
        compiler_params=pltpu.CompilerParams(
            dimension_semantics=("parallel",)),
    )(y2, z2, w.reshape(1, d))
    if mp != m:
        out = out[:m]
    return out.reshape(shape)


# ------------------------ causal depthwise conv + SiLU ----------------------

def _conv_silu_kernel(xp_ref, w_ref, b_ref, o_ref):
    # Causal depthwise conv1d (cross-correlation, left zero-padded) fused with
    # the conv bias and SiLU.  Per-tap loads come straight from the ref (no
    # full-block value relayouts per shift).
    k_sz = w_ref.shape[1]
    seq = o_ref.shape[1]
    acc = b_ref[0].astype(jnp.float32) + jnp.zeros(o_ref.shape[1:], jnp.float32)
    for k in range(k_sz):
        acc = acc + (w_ref[0, k:k + 1, :].astype(jnp.float32) *
                     xp_ref[0, k:k + seq, :].astype(jnp.float32))
    o_ref[0] = (acc * (1.0 / (1.0 + jnp.exp(-acc)))).astype(o_ref.dtype)


def _pick_channel_tile(c, target=1024):
    if c <= target:
        return c
    for t in (1024, 512, 256, 128):
        if c % t == 0:
            return t
    # TODO(synk): pad the channel axis for widths with no 128-multiple divisor.
    return c


def causal_conv_silu(x, w_t, b_r, d_conv, *, channel_tile=1024,
                     out_dtype=jnp.bfloat16):
    # x: (B, L, C) activations; w_t: (1, K, C) depthwise taps; b_r: (1, 1, C).
    # Channels (not time) are chunked: the depthwise conv is independent per
    # channel, so this bounds VMEM with no halo logic at long L.
    bsz, seq, c = x.shape
    ct = _pick_channel_tile(c, channel_tile)
    xp = jnp.pad(x, ((0, 0), (d_conv - 1, 0), (0, 0)))
    return pl.pallas_call(
        _conv_silu_kernel,
        grid=(bsz, c // ct),
        in_specs=[pl.BlockSpec((1, seq + d_conv - 1, ct),
                               lambda i, j: (i, 0, j)),
                  pl.BlockSpec((1, d_conv, ct), lambda i, j: (0, 0, j)),
                  pl.BlockSpec((1, 1, ct), lambda i, j: (0, 0, j))],
        out_specs=pl.BlockSpec((1, seq, ct), lambda i, j: (i, 0, j)),
        out_shape=jax.ShapeDtypeStruct((bsz, seq, c), out_dtype),
        compiler_params=pltpu.CompilerParams(
            dimension_semantics=("parallel", "parallel")),
    )(xp, w_t, b_r)


# ---------------------- chunked SSD selective-state scan --------------------

def _ssd_chunk_kernel(x_ref, dt_ref, b_ref, c_ref, a_ref, d_ref, dtb_ref,
                      y_ref, state_ref, *, hpb, groups_in_block, headdim,
                      d_state):
    """One (head-block, batch, L-chunk) step of the chunked SSD scan.

    Grid = (head_blocks, batch, chunks); the chunk axis is 'arbitrary' and the
    (hpb, N, P) state scratch is carried across it, re-zeroed whenever a new
    (head-block, batch) sequence starts.
    """
    chunk_id = pl.program_id(2)

    @pl.when(chunk_id == 0)
    def _():
        state_ref[...] = jnp.zeros_like(state_ref)

    lc = dt_ref.shape[2]
    p = headdim
    n = d_state
    hpg_local = hpb // groups_in_block

    xb = x_ref[0]                                    # (Lc, hpb*P)   bf16
    b_all = b_ref[0]                                 # (Lc, Gblk*N)  bf16
    c_all = c_ref[0]                                 # (Lc, Gblk*N)  bf16
    a_row = a_ref[0]                                 # (1, hpb) f32, negative
    d_row = d_ref[0]                                 # (1, hpb) f32
    dtb_row = dtb_ref[0]                             # (1, hpb) f32

    # ---- hoisted per-chunk work, all heads of the block at once (f32) ------
    dt_raw = dt_ref[0, 0].astype(jnp.float32) + dtb_row           # (Lc, hpb)
    dt_all = jnp.where(dt_raw > 20.0, dt_raw,
                       jnp.log(1.0 + jnp.exp(dt_raw)))            # softplus
    dta = dt_all * a_row                                          # <= 0

    row = jax.lax.broadcasted_iota(jnp.int32, (lc, lc), 0)
    col = jax.lax.broadcasted_iota(jnp.int32, (lc, lc), 1)
    causal = row >= col
    tril = causal.astype(jnp.float32)

    # inclusive cumulative sum over time for every head: one MXU matmul
    seg = jnp.dot(tril, dta, preferred_element_type=jnp.float32)  # (Lc, hpb)
    total = seg[lc - 1:lc, :]                                     # (1, hpb)
    exp_seg = jnp.exp(seg)                                        # <= 1
    exp_rev = jnp.exp(total - seg)                                # <= 1
    exp_tot = jnp.exp(total)                                      # (1, hpb)

    # ---- C @ B^T once per group (heads in a group share B/C) ---------------
    gms = []
    for g in range(groups_in_block):
        bm = b_all[:, g * n:(g + 1) * n]
        cm = c_all[:, g * n:(g + 1) * n]
        gms.append(jax.lax.dot_general(
            cm, bm, (((1,), (1,)), ((), ())),
            preferred_element_type=jnp.float32))                  # (Lc, Lc)

    # ---- per-head MXU work: bf16 operands, f32 accumulation ----------------
    # TODO(synk): for very large head blocks, switch to lax.fori_loop with
    # dynamic head indexing and pair heads so every store is a 128-lane vst.
    for h in range(hpb):
        g = h // hpg_local
        x_h = xb[:, h * p:(h + 1) * p]                            # (Lc, P) bf16
        dt_h = dt_all[:, h:h + 1]                                 # (Lc, 1) f32
        xdt = (x_h * dt_h).astype(jnp.bfloat16)                   # dt folded in

        # masked decay matrix: numerically safe difference form; the exp runs
        # on a bf16 argument (it only feeds the MXU), halving EUP pressure on
        # v6e / v7x.
        seg_h = seg[:, h:h + 1]
        dec = jnp.exp(jnp.where(causal, seg_h - seg_h.T,
                                -jnp.inf).astype(jnp.bfloat16))   # (Lc, Lc)
        mm = (gms[g] * dec).astype(jnp.bfloat16)

        # intra-chunk + inter-chunk + skip connection
        y = jnp.dot(mm, xdt, preferred_element_type=jnp.float32)
        cexp = (c_all[:, g * n:(g + 1) * n] *
                exp_seg[:, h:h + 1]).astype(jnp.bfloat16)
        y = y + jnp.dot(cexp, state_ref[h].astype(jnp.bfloat16),
                        preferred_element_type=jnp.float32)
        y = y + d_row[:, h:h + 1] * x_h
        y_ref[0, :, h * p:(h + 1) * p] = y.astype(y_ref.dtype)

        # state carry: s_out = exp(total) s_in + sum_s exp(total-seg_s) dt_s B_s x_s^T
        bexp = (b_all[:, g * n:(g + 1) * n] *
                exp_rev[:, h:h + 1]).astype(jnp.bfloat16)
        snew = jax.lax.dot_general(bexp, xdt, (((0,), (0,)), ((), ())),
                                   preferred_element_type=jnp.float32)
        state_ref[h] = exp_tot[:, h:h + 1] * state_ref[h] + snew


def _pick_head_blocks(nheads, headdim, ngroups, d_state, target=8):
    """Split heads across a leading 'parallel' grid axis.

    Helps v7x megacore when batch is small and keeps the unrolled in-kernel
    head loop short.  Only splits when the resulting lane widths stay legal
    (multiples of 128) for the x / B / C BlockSpecs.
    """
    if ngroups > 1:
        hpg = nheads // ngroups
        if (hpg * headdim) % 128 == 0 and d_state % 128 == 0:
            return ngroups, hpg
        return 1, nheads
    for hpb in (target, 4, 2):
        if hpb < nheads and nheads % hpb == 0 and (hpb * headdim) % 128 == 0:
            return nheads // hpb, hpb
    return 1, nheads


def ssm_scan(xs, dt, bm, cm, a, d, dt_bias, *, nheads, headdim, ngroups,
             d_state, chunk=128, out_dtype=jnp.bfloat16):
    # xs: (B, L, H*P); dt: (B, L, H); bm/cm: (B, L, G*N); a/d/dt_bias: (H,)
    # Batch-major activation layouts (no HBM transposes of the big tensors);
    # time is chunked on the grid and the state lives in persistent VMEM.
    bsz, seq, _ = xs.shape
    lc = seq if seq <= chunk else chunk
    lp = _round_up(seq, lc)
    if lp != seq:
        padt = ((0, 0), (0, lp - seq), (0, 0))
        xs = jnp.pad(xs, padt)
        bm = jnp.pad(bm, padt)
        cm = jnp.pad(cm, padt)
        dt = jnp.pad(dt, padt)

    nhb, hpb = _pick_head_blocks(nheads, headdim, ngroups, d_state)
    gib = ngroups if nhb == 1 else 1              # groups per head-block
    hpw = hpb * headdim
    bcw = gib * d_state
    per_group_bc = (nhb > 1 and ngroups > 1)

    # Head-block-major layouts for the small per-head tensors keep their last
    # block dim equal to the full array dim (always layout-legal).
    dt_r = jnp.transpose(dt.reshape(bsz, lp, nhb, hpb), (2, 0, 1, 3))
    a_r = a.reshape(nhb, 1, hpb)
    d_r = d.reshape(nhb, 1, hpb)
    dtb_r = dt_bias.reshape(nhb, 1, hpb)

    if per_group_bc:
        bc_map = lambda hb, b, c: (b, c, hb)
    else:
        bc_map = lambda hb, b, c: (b, c, 0)

    kernel = functools.partial(_ssd_chunk_kernel, hpb=hpb,
                               groups_in_block=gib, headdim=headdim,
                               d_state=d_state)
    y = pl.pallas_call(
        kernel,
        grid=(nhb, bsz, lp // lc),
        in_specs=[
            pl.BlockSpec((1, lc, hpw), lambda hb, b, c: (b, c, hb)),
            pl.BlockSpec((1, 1, lc, hpb), lambda hb, b, c: (hb, b, c, 0)),
            pl.BlockSpec((1, lc, bcw), bc_map),
            pl.BlockSpec((1, lc, bcw), bc_map),
            pl.BlockSpec((1, 1, hpb), lambda hb, b, c: (hb, 0, 0)),
            pl.BlockSpec((1, 1, hpb), lambda hb, b, c: (hb, 0, 0)),
            pl.BlockSpec((1, 1, hpb), lambda hb, b, c: (hb, 0, 0)),
        ],
        out_specs=pl.BlockSpec((1, lc, hpw), lambda hb, b, c: (b, c, hb)),
        out_shape=jax.ShapeDtypeStruct((bsz, lp, nheads * headdim), out_dtype),
        scratch_shapes=[pltpu.VMEM((hpb, d_state, headdim), jnp.float32)],
        compiler_params=pltpu.CompilerParams(
            dimension_semantics=("parallel", "parallel", "arbitrary")),
    )(xs, dt_r, bm, cm, a_r, d_r, dtb_r)
    if lp != seq:
        y = y[:, :seq]
    return y


# ------------------------------ model glue ----------------------------------

def init_params(key, d_model, d_state, d_conv, expand, headdim=64, ngroups=1):
    d_inner = expand * d_model
    nheads = d_inner // headdim
    conv_dim = d_inner + 2 * ngroups * d_state
    d_in_proj = 2 * d_inner + 2 * ngroups * d_state + nheads
    ks = jax.random.split(key, 8)
    return {
        "norm1_w": jnp.ones((d_model,), jnp.float32),
        "norm2_w": jnp.ones((d_model,), jnp.float32),
        "in_proj_w": 0.02 * jax.random.normal(ks[0], (d_model, d_in_proj), jnp.float32),
        "conv_w": 0.1 * jax.random.normal(ks[1], (conv_dim, d_conv), jnp.float32),
        "conv_b": 0.01 * jax.random.normal(ks[2], (conv_dim,), jnp.float32),
        "A_log": jnp.log(jnp.arange(1, nheads + 1, dtype=jnp.float32)),
        "D": jnp.ones((nheads,), jnp.float32),
        "dt_bias": jnp.full((nheads,), -2.0, jnp.float32),
        "mamba_norm_w": jnp.ones((d_inner,), jnp.float32),
        "out_proj_w": 0.02 * jax.random.normal(ks[3], (d_inner, d_model), jnp.float32),
        "mlp_w1": 0.02 * jax.random.normal(ks[4], (d_model, 4 * d_model), jnp.float32),
        "mlp_b1": 0.01 * jax.random.normal(ks[5], (4 * d_model,), jnp.float32),
        "mlp_w2": 0.02 * jax.random.normal(ks[6], (4 * d_model, d_model), jnp.float32),
        "mlp_b2": 0.01 * jax.random.normal(ks[7], (d_model,), jnp.float32),
    }


def prepare_params(p, compute_dtype=jnp.bfloat16):
    """One-time parameter prep: bf16 weight copies and pre-shaped conv params
    (keeps per-step weight cast/pad/transpose traffic out of the forward)."""
    q = dict(p)
    for k in ("in_proj_w", "out_proj_w", "mlp_w1", "mlp_w2"):
        q[k] = p[k].astype(compute_dtype)
    d_conv = p["conv_w"].shape[1]
    conv_dim = p["conv_w"].shape[0]
    q["conv_w_t"] = p["conv_w"].T.reshape(1, d_conv, conv_dim).astype(jnp.float32)
    q["conv_b_r"] = p["conv_b"].reshape(1, 1, conv_dim).astype(jnp.float32)
    q["neg_A"] = -jnp.exp(p["A_log"])
    return q


def mamba2_forward(u, p, *, d_state, d_conv, expand, headdim=64, ngroups=1):
    bsz, seq, d_model = u.shape
    d_inner = expand * d_model
    nheads = d_inner // headdim
    zxbcdt = matmul(u.reshape(bsz * seq, d_model), p["in_proj_w"],
                    out_dtype=jnp.bfloat16).reshape(bsz, seq, -1)
    z = zxbcdt[..., :d_inner]
    xBC = zxbcdt[..., d_inner:2 * d_inner + 2 * ngroups * d_state]
    dt = zxbcdt[..., 2 * d_inner + 2 * ngroups * d_state:]
    # TODO(synk): at widths that are multiples of 128, the conv / scan kernels
    # could consume zxbcdt / the conv output directly via index_map column
    # offsets and skip these wrapper slices.
    xBC = causal_conv_silu(xBC, p["conv_w_t"], p["conv_b_r"], d_conv)
    xs = xBC[..., :d_inner]
    bmat = xBC[..., d_inner:d_inner + ngroups * d_state]
    cmat = xBC[..., d_inner + ngroups * d_state:]
    y = ssm_scan(xs, dt, bmat, cmat, p["neg_A"], p["D"], p["dt_bias"],
                 nheads=nheads, headdim=headdim, ngroups=ngroups,
                 d_state=d_state)
    y = gated_rmsnorm(y, z, p["mamba_norm_w"], eps=1e-5,
                      out_dtype=jnp.bfloat16)
    return matmul(y.reshape(bsz * seq, d_inner), p["out_proj_w"],
                  out_dtype=jnp.float32).reshape(bsz, seq, d_model)


def mamba_block_forward(x, p, *, d_state, d_conv, expand, rmsnorm_eps=1e-6):
    bsz, seq, d_model = x.shape
    # TODO(synk): dropout layers are treated as eval-mode identity.
    h = rmsnorm(x, p["norm1_w"], rmsnorm_eps, out_dtype=jnp.bfloat16)
    x = x + mamba2_forward(h, p, d_state=d_state, d_conv=d_conv, expand=expand)
    h = rmsnorm(x, p["norm2_w"], rmsnorm_eps, out_dtype=jnp.bfloat16)
    # exact (erf) GELU fused into the mlp_w1 epilogue -> no extra HBM round
    # trip for the (B*L, 4*d_model) activation.
    a = matmul(h.reshape(bsz * seq, d_model), p["mlp_w1"], p["mlp_b1"],
               out_dtype=jnp.bfloat16, activation=_gelu_exact)
    o = matmul(a, p["mlp_w2"], p["mlp_b2"], out_dtype=jnp.float32)
    return x + o.reshape(bsz, seq, d_model)


if __name__ == "__main__":
    d_model, d_state, d_conv, expand = 32, 16, 4, 2
    batch, seq = 2, 8
    key = jax.random.PRNGKey(0)
    kx, kp = jax.random.split(key)
    x = jax.random.normal(kx, (batch, seq, d_model), jnp.float32)
    params = prepare_params(init_params(kp, d_model, d_state, d_conv, expand))
    fwd = jax.jit(functools.partial(mamba_block_forward, d_state=d_state,
                                    d_conv=d_conv, expand=expand))
    out = jax.block_until_ready(fwd(x, params))
    assert out.shape == (batch, seq, d_model)
    assert bool(jnp.all(jnp.isfinite(out)))
    print("KERNEL_OK")
</pallas_src>

<mosaic_0001>
module attributes {stable_mosaic.version = 11 : i64} {
  func.func @_rmsnorm_kernel(%arg0: i32, %arg1: memref<16x32xf32, #tpu.memory_space<vmem>>, %arg2: memref<1x32xf32, #tpu.memory_space<vmem>>, %arg3: memref<16x32xbf16, #tpu.memory_space<vmem>>) attributes {dimension_semantics = [#tpu.dimension_semantics<parallel>], iteration_bounds = array<i64: 1>, scalar_prefetch = 0 : i64, scratch_operands = 0 : i64, tpu.core_type = #tpu.core_type<tc>, window_params = [{transform_indices = @transform_0, window_bounds = array<i64: 16, 32>}, {pipeline_mode = #tpu.pipeline_mode<synchronous>, transform_indices = @transform_1, window_bounds = array<i64: 1, 32>}, {transform_indices = @transform_2, window_bounds = array<i64: 16, 32>}]} {
    %c0 = arith.constant 0 : index
    %c0_0 = arith.constant 0 : index
    %0 = vector.load %arg1[%c0, %c0_0] : memref<16x32xf32, #tpu.memory_space<vmem>>, vector<16x32xf32>
    %1 = arith.mulf %0, %0 : vector<16x32xf32>
    %cst = arith.constant dense<0.000000e+00> : vector<16xf32>
    %2 = vector.multi_reduction <add>, %1, %cst [1] : vector<16x32xf32> to vector<16xf32>
    %3 = vector.shape_cast %2 : vector<16xf32> to vector<16x1xf32>
    %cst_1 = arith.constant 9.99999997E-7 : f32
    %4 = vector.broadcast %cst_1 : f32 to vector<16x1xf32>
    %5 = arith.addf %3, %4 : vector<16x1xf32>
    %6 = math.rsqrt %5 : vector<16x1xf32>
    %7 = vector.broadcast %6 : vector<16x1xf32> to vector<16x32xf32>
    %8 = arith.mulf %0, %7 : vector<16x32xf32>
    %c0_2 = arith.constant 0 : index
    %c0_3 = arith.constant 0 : index
    %9 = vector.load %arg2[%c0_2, %c0_3] : memref<1x32xf32, #tpu.memory_space<vmem>>, vector<1x32xf32>
    %10 = vector.broadcast %9 : vector<1x32xf32> to vector<16x32xf32>
    %11 = arith.mulf %8, %10 : vector<16x32xf32>
    %12 = arith.truncf %11 : vector<16x32xf32> to vector<16x32xbf16>
    %c0_4 = arith.constant 0 : index
    %c0_5 = arith.constant 0 : index
    %13 = vector.load %arg3[%c0_4, %c0_5] : memref<16x32xbf16, #tpu.memory_space<vmem>>, vector<16x32xbf16>
    tpu.vector_store %arg3[%c0_4, %c0_5], %12 {strides = array<i32>} : memref<16x32xbf16, #tpu.memory_space<vmem>>, vector<16x32xbf16>,
    return
  }
  func.func @transform_0(%arg0: i32) -> (i32, i32) {
    %c0_i32 = arith.constant 0 : i32
    %c0_i32_0 = arith.constant 0 : i32
    return %arg0, %c0_i32 : i32, i32
  }
  func.func @transform_1(%arg0: i32) -> (i32, i32) {
    %c0_i32 = arith.constant 0 : i32
    %c0_i32_0 = arith.constant 0 : i32
    %c0_i32_1 = arith.constant 0 : i32
    return %c0_i32, %c0_i32_0 : i32, i32
  }
  func.func @transform_2(%arg0: i32) -> (i32, i32) {
    %c0_i32 = arith.constant 0 : i32
    %c0_i32_0 = arith.constant 0 : i32
    return %arg0, %c0_i32 : i32, i32
  }
}

module attributes {stable_mosaic.version = 11 : i64} {
  func.func @_matmul_kernel(%arg0: i32, %arg1: i32, %arg2: i32, %arg3: memref<16x32xbf16, #tpu.memory_space<vmem>>, %arg4: memref<32x161xbf16, #tpu.memory_space<vmem>>, %arg5: memref<16x161xbf16, #tpu.memory_space<vmem>>, %arg6: memref<16x161xf32, #tpu.memory_space<vmem>>) attributes {dimension_semantics = [#tpu.dimension_semantics<parallel>, #tpu.dimension_semantics<parallel>, #tpu.dimension_semantics<arbitrary>], iteration_bounds = array<i64: 1, 1, 1>, scalar_prefetch = 0 : i64, scratch_operands = 1 : i64, tpu.core_type = #tpu.core_type<tc>, window_params = [{transform_indices = @transform_0, window_bounds = array<i64: 16, 32>}, {transform_indices = @transform_1, window_bounds = array<i64: 32, 161>}, {transform_indices = @transform_2, window_bounds = array<i64: 16, 161>}]} {
    %c0_i32 = arith.constant 0 : i32
    %0 = arith.cmpi eq, %arg2, %c0_i32 : i32
    %1 = arith.extui %0 : i1 to i32
    %c0_i32_0 = arith.constant 0 : i32
    %2 = arith.cmpi ne, %1, %c0_i32_0 : i32
    scf.if %2 {
      %cst_10 = arith.constant 0.000000e+00 : f32
      %12 = vector.broadcast %cst_10 : f32 to vector<16x161xf32>
      %c0_11 = arith.constant 0 : index
      %c0_12 = arith.constant 0 : index
      %13 = vector.load %arg6[%c0_11, %c0_12] : memref<16x161xf32, #tpu.memory_space<vmem>>, vector<16x161xf32>
      tpu.vector_store %arg6[%c0_11, %c0_12], %12 {strides = array<i32>} : memref<16x161xf32, #tpu.memory_space<vmem>>, vector<16x161xf32>,
    } else {
    }
    %c0 = arith.constant 0 : index
    %c0_1 = arith.constant 0 : index
    %3 = vector.load %arg6[%c0, %c0_1] : memref<16x161xf32, #tpu.memory_space<vmem>>, vector<16x161xf32>
    %c0_2 = arith.constant 0 : index
    %c0_3 = arith.constant 0 : index
    %4 = vector.load %arg3[%c0_2, %c0_3] : memref<16x32xbf16, #tpu.memory_space<vmem>>, vector<16x32xbf16>
    %c0_4 = arith.constant 0 : index
    %c0_5 = arith.constant 0 : index
    %5 = vector.load %arg4[%c0_4, %c0_5] : memref<32x161xbf16, #tpu.memory_space<vmem>>, vector<32x161xbf16>
    %cst = arith.constant dense<0.000000e+00> : vector<16x161xf32>
    %6 = tpu.matmul %4, %5, %cst {dimension_numbers = #tpu.dot_dimension_numbers<[1], [0], [0], [1], [0, 0, 1, 1], [], []>} : vector<16x32xbf16>, vector<32x161xbf16>, vector<16x161xf32> -> vector<16x161xf32>
    %7 = arith.addf %3, %6 : vector<16x161xf32>
    %c0_6 = arith.constant 0 : index
    %c0_7 = arith.constant 0 : index
    %8 = vector.load %arg6[%c0_6, %c0_7] : memref<16x161xf32, #tpu.memory_space<vmem>>, vector<16x161xf32>
    tpu.vector_store %arg6[%c0_6, %c0_7], %7 {strides = array<i32>} : memref<16x161xf32, #tpu.memory_space<vmem>>, vector<16x161xf32>,
    %c0_i32_8 = arith.constant 0 : i32
    %9 = arith.cmpi eq, %arg2, %c0_i32_8 : i32
    %10 = arith.extui %9 : i1 to i32
    %c0_i32_9 = arith.constant 0 : i32
    %11 = arith.cmpi ne, %10, %c0_i32_9 : i32
    scf.if %11 {
      %c0_10 = arith.constant 0 : index
      %c0_11 = arith.constant 0 : index
      %12 = vector.load %arg6[%c0_10, %c0_11] : memref<16x161xf32, #tpu.memory_space<vmem>>, vector<16x161xf32>
      %13 = arith.truncf %12 : vector<16x161xf32> to vector<16x161xbf16>
      %c0_12 = arith.constant 0 : index
      %c0_13 = arith.constant 0 : index
      %14 = vector.load %arg5[%c0_12, %c0_13] : memref<16x161xbf16, #tpu.memory_space<vmem>>, vector<16x161xbf16>
      tpu.vector_store %arg5[%c0_12, %c0_13], %13 {strides = array<i32>} : memref<16x161xbf16, #tpu.memory_space<vmem>>, vector<16x161xbf16>,
    } else {
    }
    return
  }
  func.func @transform_0(%arg0: i32, %arg1: i32, %arg2: i32) -> (i32, i32) {
    %c0_i32 = arith.constant 0 : i32
    return %arg0, %arg2 : i32, i32
  }
  func.func @transform_1(%arg0: i32, %arg1: i32, %arg2: i32) -> (i32, i32) {
    %c0_i32 = arith.constant 0 : i32
    return %arg2, %arg1 : i32, i32
  }
  func.func @transform_2(%arg0: i32, %arg1: i32, %arg2: i32) -> (i32, i32) {
    %c0_i32 = arith.constant 0 : i32
    return %arg0, %arg1 : i32, i32
  }
}

module attributes {stable_mosaic.version = 11 : i64} {
  func.func @_conv_silu_kernel(%arg0: i32, %arg1: i32, %arg2: memref<1x11x96xbf16, #tpu.memory_space<vmem>>, %arg3: memref<1x4x96xf32, #tpu.memory_space<vmem>>, %arg4: memref<1x1x96xf32, #tpu.memory_space<vmem>>, %arg5: memref<1x8x96xbf16, #tpu.memory_space<vmem>>) attributes {dimension_semantics = [#tpu.dimension_semantics<parallel>, #tpu.dimension_semantics<parallel>], iteration_bounds = array<i64: 2, 1>, scalar_prefetch = 0 : i64, scratch_operands = 0 : i64, tpu.core_type = #tpu.core_type<tc>, window_params = [{transform_indices = @transform_0, window_bounds = array<i64: 1, 11, 96>}, {transform_indices = @transform_1, window_bounds = array<i64: 1, 4, 96>}, {transform_indices = @transform_2, window_bounds = array<i64: 1, 1, 96>}, {transform_indices = @transform_3, window_bounds = array<i64: 1, 8, 96>}]} {
    %c0 = arith.constant 0 : index
    %c0_0 = arith.constant 0 : index
    %c0_1 = arith.constant 0 : index
    %0 = vector.load %arg4[%c0, %c0_0, %c0_1] : memref<1x1x96xf32, #tpu.memory_space<vmem>>, vector<1x1x96xf32>
    %1 = vector.shape_cast %0 : vector<1x1x96xf32> to vector<1x96xf32>
    %cst = arith.constant 0.000000e+00 : f32
    %2 = vector.broadcast %cst : f32 to vector<8x96xf32>
    %3 = vector.broadcast %1 : vector<1x96xf32> to vector<8x96xf32>
    %4 = arith.addf %3, %2 : vector<8x96xf32>
    %c0_2 = arith.constant 0 : index
    %c0_3 = arith.constant 0 : index
    %c0_4 = arith.constant 0 : index
    %5 = vector.load %arg3[%c0_2, %c0_3, %c0_4] : memref<1x4x96xf32, #tpu.memory_space<vmem>>, vector<1x1x96xf32>
    %6 = vector.shape_cast %5 : vector<1x1x96xf32> to vector<1x96xf32>
    %c0_5 = arith.constant 0 : index
    %c0_6 = arith.constant 0 : index
    %c0_7 = arith.constant 0 : index
    %7 = vector.load %arg2[%c0_5, %c0_6, %c0_7] : memref<1x11x96xbf16, #tpu.memory_space<vmem>>, vector<1x8x96xbf16>
    %8 = vector.shape_cast %7 : vector<1x8x96xbf16> to vector<8x96xbf16>
    %9 = arith.extf %8 : vector<8x96xbf16> to vector<8x96xf32>
    %10 = vector.broadcast %6 : vector<1x96xf32> to vector<8x96xf32>
    %11 = arith.mulf %10, %9 : vector<8x96xf32>
    %12 = arith.addf %4, %11 : vector<8x96xf32>
    %c0_8 = arith.constant 0 : index
    %c1 = arith.constant 1 : index
    %c0_9 = arith.constant 0 : index
    %13 = vector.load %arg3[%c0_8, %c1, %c0_9] : memref<1x4x96xf32, #tpu.memory_space<vmem>>, vector<1x1x96xf32>
    %14 = vector.shape_cast %13 : vector<1x1x96xf32> to vector<1x96xf32>
    %c0_10 = arith.constant 0 : index
    %c1_11 = arith.constant 1 : index
    %c0_12 = arith.constant 0 : index
    %15 = vector.load %arg2[%c0_10, %c1_11, %c0_12] : memref<1x11x96xbf16, #tpu.memory_space<vmem>>, vector<1x8x96xbf16>
    %16 = vector.shape_cast %15 : vector<1x8x96xbf16> to vector<8x96xbf16>
    %17 = arith.extf %16 : vector<8x96xbf16> to vector<8x96xf32>
    %18 = vector.broadcast %14 : vector<1x96xf32> to vector<8x96xf32>
    %19 = arith.mulf %18, %17 : vector<8x96xf32>
    %20 = arith.addf %12, %19 : vector<8x96xf32>
    %c0_13 = arith.constant 0 : index
    %c2 = arith.constant 2 : index
    %c0_14 = arith.constant 0 : index
    %21 = vector.load %arg3[%c0_13, %c2, %c0_14] : memref<1x4x96xf32, #tpu.memory_space<vmem>>, vector<1x1x96xf32>
    %22 = vector.shape_cast %21 : vector<1x1x96xf32> to vector<1x96xf32>
    %c0_15 = arith.constant 0 : index
    %c2_16 = arith.constant 2 : index
    %c0_17 = arith.constant 0 : index
    %23 = vector.load %arg2[%c0_15, %c2_16, %c0_17] : memref<1x11x96xbf16, #tpu.memory_space<vmem>>, vector<1x8x96xbf16>
    %24 = vector.shape_cast %23 : vector<1x8x96xbf16> to vector<8x96xbf16>
    %25 = arith.extf %24 : vector<8x96xbf16> to vector<8x96xf32>
    %26 = vector.broadcast %22 : vector<1x96xf32> to vector<8x96xf32>
    %27 = arith.mulf %26, %25 : vector<8x96xf32>
    %28 = arith.addf %20, %27 : vector<8x96xf32>
    %c0_18 = arith.constant 0 : index
    %c3 = arith.constant 3 : index
    %c0_19 = arith.constant 0 : index
    %29 = vector.load %arg3[%c0_18, %c3, %c0_19] : memref<1x4x96xf32, #tpu.memory_space<vmem>>, vector<1x1x96xf32>
    %30 = vector.shape_cast %29 : vector<1x1x96xf32> to vector<1x96xf32>
    %c0_20 = arith.constant 0 : index
    %c3_21 = arith.constant 3 : index
    %c0_22 = arith.constant 0 : index
    %31 = vector.load %arg2[%c0_20, %c3_21, %c0_22] : memref<1x11x96xbf16, #tpu.memory_space<vmem>>, vector<1x8x96xbf16>
    %32 = vector.shape_cast %31 : vector<1x8x96xbf16> to vector<8x96xbf16>
    %33 = arith.extf %32 : vector<8x96xbf16> to vector<8x96xf32>
    %34 = vector.broadcast %30 : vector<1x96xf32> to vector<8x96xf32>
    %35 = arith.mulf %34, %33 : vector<8x96xf32>
    %36 = arith.addf %28, %35 : vector<8x96xf32>
    %cst_23 = arith.constant 0.000000e+00 : f32
    %37 = vector.broadcast %cst_23 : f32 to vector<8x96xf32>
    %38 = arith.subf %37, %36 : vector<8x96xf32>
    %39 = math.exp %38 : vector<8x96xf32>
    %cst_24 = arith.constant 1.000000e+00 : f32
    %40 = vector.broadcast %cst_24 : f32 to vector<8x96xf32>
    %41 = arith.addf %40, %39 : vector<8x96xf32>
    %cst_25 = arith.constant 1.000000e+00 : f32
    %42 = vector.broadcast %cst_25 : f32 to vector<8x96xf32>
    %43 = arith.divf %42, %41 : vector<8x96xf32>
    %44 = arith.mulf %36, %43 : vector<8x96xf32>
    %45 = arith.truncf %44 : vector<8x96xf32> to vector<8x96xbf16>
    %c0_26 = arith.constant 0 : index
    %c0_27 = arith.constant 0 : index
    %c0_28 = arith.constant 0 : index
    %46 = vector.load %arg5[%c0_26, %c0_27, %c0_28] : memref<1x8x96xbf16, #tpu.memory_space<vmem>>, vector<1x8x96xbf16>
    %47 = vector.shape_cast %46 : vector<1x8x96xbf16> to vector<8x96xbf16>
    %48 = vector.shape_cast %45 : vector<8x96xbf16> to vector<1x8x96xbf16>
    tpu.vector_store %arg5[%c0_26, %c0_27, %c0_28], %48 {strides = array<i32>} : memref<1x8x96xbf16, #tpu.memory_space<vmem>>, vector<1x8x96xbf16>,
    return
  }
  func.func @transform_0(%arg0: i32, %arg1: i32) -> (i32, i32, i32) {
    %c0_i32 = arith.constant 0 : i32
    %c0_i32_0 = arith.constant 0 : i32
    return %arg0, %c0_i32, %arg1 : i32, i32, i32
  }
  func.func @transform_1(%arg0: i32, %arg1: i32) -> (i32, i32, i32) {
    %c0_i32 = arith.constant 0 : i32
    %c0_i32_0 = arith.constant 0 : i32
    %c0_i32_1 = arith.constant 0 : i32
    return %c0_i32, %c0_i32_0, %arg1 : i32, i32, i32
  }
  func.func @transform_2(%arg0: i32, %arg1: i32) -> (i32, i32, i32) {
    %c0_i32 = arith.constant 0 : i32
    %c0_i32_0 = arith.constant 0 : i32
    %c0_i32_1 = arith.constant 0 : i32
    return %c0_i32, %c0_i32_0, %arg1 : i32, i32, i32
  }
  func.func @transform_3(%arg0: i32, %arg1: i32) -> (i32, i32, i32) {
    %c0_i32 = arith.constant 0 : i32
    %c0_i32_0 = arith.constant 0 : i32
    return %arg0, %c0_i32, %arg1 : i32, i32, i32
  }
}

module attributes {stable_mosaic.version = 11 : i64} {
  func.func @_ssd_chunk_kernel(%arg0: i32, %arg1: i32, %arg2: i32, %arg3: memref<1x8x64xbf16, #tpu.memory_space<vmem>>, %arg4: memref<1x1x8x1xbf16, #tpu.memory_space<vmem>>, %arg5: memref<1x8x16xbf16, #tpu.memory_space<vmem>>, %arg6: memref<1x8x16xbf16, #tpu.memory_space<vmem>>, %arg7: memref<1x1x1xf32, #tpu.memory_space<vmem>>, %arg8: memref<1x1x1xf32, #tpu.memory_space<vmem>>, %arg9: memref<1x1x1xf32, #tpu.memory_space<vmem>>, %arg10: memref<1x8x64xbf16, #tpu.memory_space<vmem>>, %arg11: memref<1x16x64xf32, #tpu.memory_space<vmem>>) attributes {dimension_semantics = [#tpu.dimension_semantics<parallel>, #tpu.dimension_semantics<parallel>, #tpu.dimension_semantics<arbitrary>], iteration_bounds = array<i64: 1, 2, 1>, scalar_prefetch = 0 : i64, scratch_operands = 1 : i64, tpu.core_type = #tpu.core_type<tc>, window_params = [{transform_indices = @transform_0, window_bounds = array<i64: 1, 8, 64>}, {transform_indices = @transform_1, window_bounds = array<i64: 1, 1, 8, 1>}, {transform_indices = @transform_2, window_bounds = array<i64: 1, 8, 16>}, {transform_indices = @transform_3, window_bounds = array<i64: 1, 8, 16>}, {transform_indices = @transform_4, window_bounds = array<i64: 1, 1, 1>}, {transform_indices = @transform_5, window_bounds = array<i64: 1, 1, 1>}, {transform_indices = @transform_6, window_bounds = array<i64: 1, 1, 1>}, {transform_indices = @transform_7, window_bounds = array<i64: 1, 8, 64>}]} {
    %c0_i32 = arith.constant 0 : i32
    %0 = arith.cmpi eq, %arg2, %c0_i32 : i32
    %1 = arith.extui %0 : i1 to i32
    %c0_i32_0 = arith.constant 0 : i32
    %2 = arith.cmpi ne, %1, %c0_i32_0 : i32
    scf.if %2 {
      %cst_41 = arith.constant 0.000000e+00 : f32
      %88 = vector.broadcast %cst_41 : f32 to vector<1x16x64xf32>
      %c0_42 = arith.constant 0 : index
      %c0_43 = arith.constant 0 : index
      %c0_44 = arith.constant 0 : index
      %89 = vector.load %arg11[%c0_42, %c0_43, %c0_44] : memref<1x16x64xf32, #tpu.memory_space<vmem>>, vector<1x16x64xf32>
      tpu.vector_store %arg11[%c0_42, %c0_43, %c0_44], %88 {strides = array<i32>} : memref<1x16x64xf32, #tpu.memory_space<vmem>>, vector<1x16x64xf32>,
    } else {
    }
    %c0 = arith.constant 0 : index
    %c0_1 = arith.constant 0 : index
    %c0_2 = arith.constant 0 : index
    %3 = vector.load %arg3[%c0, %c0_1, %c0_2] : memref<1x8x64xbf16, #tpu.memory_space<vmem>>, vector<1x8x64xbf16>
    %4 = vector.shape_cast %3 : vector<1x8x64xbf16> to vector<8x64xbf16>
    %c0_3 = arith.constant 0 : index
    %c0_4 = arith.constant 0 : index
    %c0_5 = arith.constant 0 : index
    %5 = vector.load %arg5[%c0_3, %c0_4, %c0_5] : memref<1x8x16xbf16, #tpu.memory_space<vmem>>, vector<1x8x16xbf16>
    %6 = vector.shape_cast %5 : vector<1x8x16xbf16> to vector<8x16xbf16>
    %c0_6 = arith.constant 0 : index
    %c0_7 = arith.constant 0 : index
    %c0_8 = arith.constant 0 : index
    %7 = vector.load %arg6[%c0_6, %c0_7, %c0_8] : memref<1x8x16xbf16, #tpu.memory_space<vmem>>, vector<1x8x16xbf16>
    %8 = vector.shape_cast %7 : vector<1x8x16xbf16> to vector<8x16xbf16>
    %c0_9 = arith.constant 0 : index
    %c0_10 = arith.constant 0 : index
    %c0_11 = arith.constant 0 : index
    %9 = vector.load %arg7[%c0_9, %c0_10, %c0_11] : memref<1x1x1xf32, #tpu.memory_space<vmem>>, vector<1x1x1xf32>
    %10 = vector.shape_cast %9 : vector<1x1x1xf32> to vector<1x1xf32>
    %c0_12 = arith.constant 0 : index
    %c0_13 = arith.constant 0 : index
    %c0_14 = arith.constant 0 : index
    %11 = vector.load %arg8[%c0_12, %c0_13, %c0_14] : memref<1x1x1xf32, #tpu.memory_space<vmem>>, vector<1x1x1xf32>
    %12 = vector.shape_cast %11 : vector<1x1x1xf32> to vector<1x1xf32>
    %c0_15 = arith.constant 0 : index
    %c0_16 = arith.constant 0 : index
    %c0_17 = arith.constant 0 : index
    %13 = vector.load %arg9[%c0_15, %c0_16, %c0_17] : memref<1x1x1xf32, #tpu.memory_space<vmem>>, vector<1x1x1xf32>
    %14 = vector.shape_cast %13 : vector<1x1x1xf32> to vector<1x1xf32>
    %c0_18 = arith.constant 0 : index
    %c0_19 = arith.constant 0 : index
    %c0_20 = arith.constant 0 : index
    %c0_21 = arith.constant 0 : index
    %15 = vector.load %arg4[%c0_18, %c0_19, %c0_20, %c0_21] : memref<1x1x8x1xbf16, #tpu.memory_space<vmem>>, vector<1x1x8x1xbf16>
    %16 = vector.shape_cast %15 : vector<1x1x8x1xbf16> to vector<8x1xbf16>
    %17 = arith.extf %16 : vector<8x1xbf16> to vector<8x1xf32>
    %18 = vector.broadcast %14 : vector<1x1xf32> to vector<8x1xf32>
    %19 = arith.addf %17, %18 : vector<8x1xf32>
    %cst = arith.constant 2.000000e+01 : f32
    %20 = vector.broadcast %cst : f32 to vector<8x1xf32>
    %21 = arith.cmpf ogt, %19, %20 : vector<8x1xf32>
    %22 = math.exp %19 : vector<8x1xf32>
    %cst_22 = arith.constant 1.000000e+00 : f32
    %23 = vector.broadcast %cst_22 : f32 to vector<8x1xf32>
    %24 = arith.addf %23, %22 : vector<8x1xf32>
    %25 = math.log %24 : vector<8x1xf32>
    %26 = arith.select %21, %19, %25 : vector<8x1xi1>, vector<8x1xf32>
    %27 = vector.broadcast %10 : vector<1x1xf32> to vector<8x1xf32>
    %28 = arith.mulf %26, %27 : vector<8x1xf32>
    %29 = tpu.iota {dimensions = array<i32: 0>} : vector<8x8xi32>
    %30 = tpu.iota {dimensions = array<i32: 1>} : vector<8x8xi32>
    %31 = arith.cmpi sge, %29, %30 : vector<8x8xi32>
    %32 = arith.extui %31 : vector<8x8xi1> to vector<8x8xi32>
    %33 = arith.sitofp %32 : vector<8x8xi32> to vector<8x8xf32>
    %cst_23 = arith.constant dense<0.000000e+00> : vector<8x1xf32>
    %34 = tpu.matmul %33, %28, %cst_23 {dimension_numbers = #tpu.dot_dimension_numbers<[1], [0], [0], [1], [0, 0, 1, 1], [], []>} : vector<8x8xf32>, vector<8x1xf32>, vector<8x1xf32> -> vector<8x1xf32>
    %35 = vector.extract_strided_slice %34 {offsets = [7, 0], sizes = [1, 1], strides = [1, 1]} : vector<8x1xf32> to vector<1x1xf32>
    %36 = math.exp %34 : vector<8x1xf32>
    %37 = vector.broadcast %35 : vector<1x1xf32> to vector<8x1xf32>
    %38 = arith.subf %37, %34 : vector<8x1xf32>
    %39 = math.exp %38 : vector<8x1xf32>
    %40 = math.exp %35 : vector<1x1xf32>
    %cst_24 = arith.constant dense<0.000000e+00> : vector<8x8xf32>
    %41 = tpu.matmul %8, %6, %cst_24 {dimension_numbers = #tpu.dot_dimension_numbers<[1], [1], [0], [0], [0, 0, 1, 0], [], []>} : vector<8x16xbf16>, vector<8x16xbf16>, vector<8x8xf32> -> vector<8x8xf32>
    %42 = arith.extf %4 : vector<8x64xbf16> to vector<8x64xf32>
    %43 = vector.broadcast %26 : vector<8x1xf32> to vector<8x64xf32>
    %44 = arith.mulf %42, %43 : vector<8x64xf32>
    %45 = arith.truncf %44 : vector<8x64xf32> to vector<8x64xbf16>
    %46 = tpu.transpose %34, [1, 0] : vector<8x1xf32> -> vector<1x8xf32>
    %47 = vector.broadcast %34 : vector<8x1xf32> to vector<8x8xf32>
    %48 = vector.broadcast %46 : vector<1x8xf32> to vector<8x8xf32>
    %49 = arith.subf %47, %48 : vector<8x8xf32>
    %cst_25 = arith.constant 0xFF800000 : f32
    %50 = vector.broadcast %cst_25 : f32 to vector<8x8xf32>
    %51 = arith.select %31, %49, %50 : vector<8x8xi1>, vector<8x8xf32>
    %52 = arith.truncf %51 : vector<8x8xf32> to vector<8x8xbf16>
    %53 = math.exp %52 : vector<8x8xbf16>
    %54 = arith.extf %53 : vector<8x8xbf16> to vector<8x8xf32>
    %55 = arith.mulf %41, %54 : vector<8x8xf32>
    %56 = arith.truncf %55 : vector<8x8xf32> to vector<8x8xbf16>
    %cst_26 = arith.constant dense<0.000000e+00> : vector<8x64xf32>
    %57 = tpu.matmul %56, %45, %cst_26 {dimension_numbers = #tpu.dot_dimension_numbers<[1], [0], [0], [1], [0, 0, 1, 1], [], []>} : vector<8x8xbf16>, vector<8x64xbf16>, vector<8x64xf32> -> vector<8x64xf32>
    %58 = arith.extf %8 : vector<8x16xbf16> to vector<8x16xf32>
    %59 = vector.broadcast %36 : vector<8x1xf32> to vector<8x16xf32>
    %60 = arith.mulf %58, %59 : vector<8x16xf32>
    %61 = arith.truncf %60 : vector<8x16xf32> to vector<8x16xbf16>
    %c0_27 = arith.constant 0 : index
    %c0_28 = arith.constant 0 : index
    %c0_29 = arith.constant 0 : index
    %62 = vector.load %arg11[%c0_27, %c0_28, %c0_29] : memref<1x16x64xf32, #tpu.memory_space<vmem>>, vector<1x16x64xf32>
    %63 = vector.shape_cast %62 : vector<1x16x64xf32> to vector<16x64xf32>
    %64 = arith.truncf %63 : vector<16x64xf32> to vector<16x64xbf16>
    %cst_30 = arith.constant dense<0.000000e+00> : vector<8x64xf32>
    %65 = tpu.matmul %61, %64, %cst_30 {dimension_numbers = #tpu.dot_dimension_numbers<[1], [0], [0], [1], [0, 0, 1, 1], [], []>} : vector<8x16xbf16>, vector<16x64xbf16>, vector<8x64xf32> -> vector<8x64xf32>
    %66 = arith.addf %57, %65 : vector<8x64xf32>
    %67 = arith.extf %4 : vector<8x64xbf16> to vector<8x64xf32>
    %68 = vector.broadcast %12 : vector<1x1xf32> to vector<8x64xf32>
    %69 = arith.mulf %68, %67 : vector<8x64xf32>
    %70 = arith.addf %66, %69 : vector<8x64xf32>
    %71 = arith.truncf %70 : vector<8x64xf32> to vector<8x64xbf16>
    %c0_31 = arith.constant 0 : index
    %c0_32 = arith.constant 0 : index
    %c0_33 = arith.constant 0 : index
    %72 = vector.load %arg10[%c0_31, %c0_32, %c0_33] : memref<1x8x64xbf16, #tpu.memory_space<vmem>>, vector<1x8x64xbf16>
    %73 = vector.shape_cast %72 : vector<1x8x64xbf16> to vector<8x64xbf16>
    %74 = vector.shape_cast %71 : vector<8x64xbf16> to vector<1x8x64xbf16>
    tpu.vector_store %arg10[%c0_31, %c0_32, %c0_33], %74 {strides = array<i32>} : memref<1x8x64xbf16, #tpu.memory_space<vmem>>, vector<1x8x64xbf16>,
    %75 = arith.extf %6 : vector<8x16xbf16> to vector<8x16xf32>
    %76 = vector.broadcast %39 : vector<8x1xf32> to vector<8x16xf32>
    %77 = arith.mulf %75, %76 : vector<8x16xf32>
    %78 = arith.truncf %77 : vector<8x16xf32> to vector<8x16xbf16>
    %cst_34 = arith.constant dense<0.000000e+00> : vector<16x64xf32>
    %79 = tpu.matmul %78, %45, %cst_34 {dimension_numbers = #tpu.dot_dimension_numbers<[0], [0], [1], [1], [0, 1, 1, 1], [], []>} : vector<8x16xbf16>, vector<8x64xbf16>, vector<16x64xf32> -> vector<16x64xf32>
    %c0_35 = arith.constant 0 : index
    %c0_36 = arith.constant 0 : index
    %c0_37 = arith.constant 0 : index
    %80 = vector.load %arg11[%c0_35, %c0_36, %c0_37] : memref<1x16x64xf32, #tpu.memory_space<vmem>>, vector<1x16x64xf32>
    %81 = vector.shape_cast %80 : vector<1x16x64xf32> to vector<16x64xf32>
    %82 = vector.broadcast %40 : vector<1x1xf32> to vector<16x64xf32>
    %83 = arith.mulf %82, %81 : vector<16x64xf32>
    %84 = arith.addf %83, %79 : vector<16x64xf32>
    %c0_38 = arith.constant 0 : index
    %c0_39 = arith.constant 0 : index
    %c0_40 = arith.constant 0 : index
    %85 = vector.load %arg11[%c0_38, %c0_39, %c0_40] : memref<1x16x64xf32, #tpu.memory_space<vmem>>, vector<1x16x64xf32>
    %86 = vector.shape_cast %85 : vector<1x16x64xf32> to vector<16x64xf32>
    %87 = vector.shape_cast %84 : vector<16x64xf32> to vector<1x16x64xf32>
    tpu.vector_store %arg11[%c0_38, %c0_39, %c0_40], %87 {strides = array<i32>} : memref<1x16x64xf32, #tpu.memory_space<vmem>>, vector<1x16x64xf32>,
    return
  }
  func.func @transform_0(%arg0: i32, %arg1: i32, %arg2: i32) -> (i32, i32, i32) {
    %c0_i32 = arith.constant 0 : i32
    return %arg1, %arg2, %arg0 : i32, i32, i32
  }
  func.func @transform_1(%arg0: i32, %arg1: i32, %arg2: i32) -> (i32, i32, i32, i32) {
    %c0_i32 = arith.constant 0 : i32
    %c0_i32_0 = arith.constant 0 : i32
    return %arg0, %arg1, %arg2, %c0_i32 : i32, i32, i32, i32
  }
  func.func @transform_2(%arg0: i32, %arg1: i32, %arg2: i32) -> (i32, i32, i32) {
    %c0_i32 = arith.constant 0 : i32
    %c0_i32_0 = arith.constant 0 : i32
    return %arg1, %arg2, %c0_i32 : i32, i32, i32
  }
  func.func @transform_3(%arg0: i32, %arg1: i32, %arg2: i32) -> (i32, i32, i32) {
    %c0_i32 = arith.constant 0 : i32
    %c0_i32_0 = arith.constant 0 : i32
    return %arg1, %arg2, %c0_i32 : i32, i32, i32
  }
  func.func @transform_4(%arg0: i32, %arg1: i32, %arg2: i32) -> (i32, i32, i32) {
    %c0_i32 = arith.constant 0 : i32
    %c0_i32_0 = arith.constant 0 : i32
    %c0_i32_1 = arith.constant 0 : i32
    return %arg0, %c0_i32, %c0_i32_0 : i32, i32, i32
  }
  func.func @transform_5(%arg0: i32, %arg1: i32, %arg2: i32) -> (i32, i32, i32) {
    %c0_i32 = arith.constant 0 : i32
    %c0_i32_0 = arith.constant 0 : i32
    %c0_i32_1 = arith.constant 0 : i32
    return %arg0, %c0_i32, %c0_i32_0 : i32, i32, i32
  }
  func.func @transform_6(%arg0: i32, %arg1: i32, %arg2: i32) -> (i32, i32, i32) {
    %c0_i32 = arith.constant 0 : i32
    %c0_i32_0 = arith.constant 0 : i32
    %c0_i32_1 = arith.constant 0 : i32
    return %arg0, %c0_i32, %c0_i32_0 : i32, i32, i32
  }
  func.func @transform_7(%arg0: i32, %arg1: i32, %arg2: i32) -> (i32, i32, i32) {
    %c0_i32 = arith.constant 0 : i32
    return %arg1, %arg2, %arg0 : i32, i32, i32
  }
}

module attributes {stable_mosaic.version = 11 : i64} {
  func.func @_gated_rmsnorm_kernel(%arg0: i32, %arg1: memref<16x64xbf16, #tpu.memory_space<vmem>>, %arg2: memref<16x64xbf16, #tpu.memory_space<vmem>>, %arg3: memref<1x64xf32, #tpu.memory_space<vmem>>, %arg4: memref<16x64xbf16, #tpu.memory_space<vmem>>) attributes {dimension_semantics = [#tpu.dimension_semantics<parallel>], iteration_bounds = array<i64: 1>, scalar_prefetch = 0 : i64, scratch_operands = 0 : i64, tpu.core_type = #tpu.core_type<tc>, window_params = [{transform_indices = @transform_0, window_bounds = array<i64: 16, 64>}, {transform_indices = @transform_1, window_bounds = array<i64: 16, 64>}, {pipeline_mode = #tpu.pipeline_mode<synchronous>, transform_indices = @transform_2, window_bounds = array<i64: 1, 64>}, {transform_indices = @transform_3, window_bounds = array<i64: 16, 64>}]} {
    %c0 = arith.constant 0 : index
    %c0_0 = arith.constant 0 : index
    %0 = vector.load %arg1[%c0, %c0_0] : memref<16x64xbf16, #tpu.memory_space<vmem>>, vector<16x64xbf16>
    %1 = arith.extf %0 : vector<16x64xbf16> to vector<16x64xf32>
    %c0_1 = arith.constant 0 : index
    %c0_2 = arith.constant 0 : index
    %2 = vector.load %arg2[%c0_1, %c0_2] : memref<16x64xbf16, #tpu.memory_space<vmem>>, vector<16x64xbf16>
    %3 = arith.extf %2 : vector<16x64xbf16> to vector<16x64xf32>
    %cst = arith.constant 0.000000e+00 : f32
    %4 = vector.broadcast %cst : f32 to vector<16x64xf32>
    %5 = arith.subf %4, %3 : vector<16x64xf32>
    %6 = math.exp %5 : vector<16x64xf32>
    %cst_3 = arith.constant 1.000000e+00 : f32
    %7 = vector.broadcast %cst_3 : f32 to vector<16x64xf32>
    %8 = arith.addf %7, %6 : vector<16x64xf32>
    %cst_4 = arith.constant 1.000000e+00 : f32
    %9 = vector.broadcast %cst_4 : f32 to vector<16x64xf32>
    %10 = arith.divf %9, %8 : vector<16x64xf32>
    %11 = arith.mulf %3, %10 : vector<16x64xf32>
    %12 = arith.mulf %1, %11 : vector<16x64xf32>
    %13 = arith.mulf %12, %12 : vector<16x64xf32>
    %cst_5 = arith.constant dense<0.000000e+00> : vector<16xf32>
    %14 = vector.multi_reduction <add>, %13, %cst_5 [1] : vector<16x64xf32> to vector<16xf32>
    %15 = vector.shape_cast %14 : vector<16xf32> to vector<16x1xf32>
    %cst_6 = arith.constant 1.562500e-02 : f32
    %16 = vector.broadcast %cst_6 : f32 to vector<16x1xf32>
    %17 = arith.mulf %15, %16 : vector<16x1xf32>
    %cst_7 = arith.constant 9.99999974E-6 : f32
    %18 = vector.broadcast %cst_7 : f32 to vector<16x1xf32>
    %19 = arith.addf %17, %18 : vector<16x1xf32>
    %20 = math.rsqrt %19 : vector<16x1xf32>
    %21 = vector.broadcast %20 : vector<16x1xf32> to vector<16x64xf32>
    %22 = arith.mulf %12, %21 : vector<16x64xf32>
    %c0_8 = arith.constant 0 : index
    %c0_9 = arith.constant 0 : index
    %23 = vector.load %arg3[%c0_8, %c0_9] : memref<1x64xf32, #tpu.memory_space<vmem>>, vector<1x64xf32>
    %24 = vector.broadcast %23 : vector<1x64xf32> to vector<16x64xf32>
    %25 = arith.mulf %22, %24 : vector<16x64xf32>
    %26 = arith.truncf %25 : vector<16x64xf32> to vector<16x64xbf16>
    %c0_10 = arith.constant 0 : index
    %c0_11 = arith.constant 0 : index
    %27 = vector.load %arg4[%c0_10, %c0_11] : memref<16x64xbf16, #tpu.memory_space<vmem>>, vector<16x64xbf16>
    tpu.vector_store %arg4[%c0_10, %c0_11], %26 {strides = array<i32>} : memref<16x64xbf16, #tpu.memory_space<vmem>>, vector<16x64xbf16>,
    return
  }
  func.func @transform_0(%arg0: i32) -> (i32, i32) {
    %c0_i32 = arith.constant 0 : i32
    %c0_i32_0 = arith.constant 0 : i32
    return %arg0, %c0_i32 : i32, i32
  }
  func.func @transform_1(%arg0: i32) -> (i32, i32) {
    %c0_i32 = arith.constant 0 : i32
    %c0_i32_0 = arith.constant 0 : i32
    return %arg0, %c0_i32 : i32, i32
  }
  func.func @transform_2(%arg0: i32) -> (i32, i32) {
    %c0_i32 = arith.constant 0 : i32
    %c0_i32_0 = arith.constant 0 : i32
    %c0_i32_1 = arith.constant 0 : i32
    return %c0_i32, %c0_i32_0 : i32, i32
  }
  func.func @transform_3(%arg0: i32) -> (i32, i32) {
    %c0_i32 = arith.constant 0 : i32
    %c0_i32_0 = arith.constant 0 : i32
    return %arg0, %c0_i32 : i32, i32
  }
}

module attributes {stable_mosaic.version = 11 : i64} {
  func.func @_matmul_kernel(%arg0: i32, %arg1: i32, %arg2: i32, %arg3: memref<16x64xbf16, #tpu.memory_space<vmem>>, %arg4: memref<64x32xbf16, #tpu.memory_space<vmem>>, %arg5: memref<16x32xf32, #tpu.memory_space<vmem>>, %arg6: memref<16x32xf32, #tpu.memory_space<vmem>>) attributes {dimension_semantics = [#tpu.dimension_semantics<parallel>, #tpu.dimension_semantics<parallel>, #tpu.dimension_semantics<arbitrary>], iteration_bounds = array<i64: 1, 1, 1>, scalar_prefetch = 0 : i64, scratch_operands = 1 : i64, tpu.core_type = #tpu.core_type<tc>, window_params = [{transform_indices = @transform_0, window_bounds = array<i64: 16, 64>}, {transform_indices = @transform_1, window_bounds = array<i64: 64, 32>}, {transform_indices = @transform_2, window_bounds = array<i64: 16, 32>}]} {
    %c0_i32 = arith.constant 0 : i32
    %0 = arith.cmpi eq, %arg2, %c0_i32 : i32
    %1 = arith.extui %0 : i1 to i32
    %c0_i32_0 = arith.constant 0 : i32
    %2 = arith.cmpi ne, %1, %c0_i32_0 : i32
    scf.if %2 {
      %cst_10 = arith.constant 0.000000e+00 : f32
      %12 = vector.broadcast %cst_10 : f32 to vector<16x32xf32>
      %c0_11 = arith.constant 0 : index
      %c0_12 = arith.constant 0 : index
      %13 = vector.load %arg6[%c0_11, %c0_12] : memref<16x32xf32, #tpu.memory_space<vmem>>, vector<16x32xf32>
      tpu.vector_store %arg6[%c0_11, %c0_12], %12 {strides = array<i32>} : memref<16x32xf32, #tpu.memory_space<vmem>>, vector<16x32xf32>,
    } else {
    }
    %c0 = arith.constant 0 : index
    %c0_1 = arith.constant 0 : index
    %3 = vector.load %arg6[%c0, %c0_1] : memref<16x32xf32, #tpu.memory_space<vmem>>, vector<16x32xf32>
    %c0_2 = arith.constant 0 : index
    %c0_3 = arith.constant 0 : index
    %4 = vector.load %arg3[%c0_2, %c0_3] : memref<16x64xbf16, #tpu.memory_space<vmem>>, vector<16x64xbf16>
    %c0_4 = arith.constant 0 : index
    %c0_5 = arith.constant 0 : index
    %5 = vector.load %arg4[%c0_4, %c0_5] : memref<64x32xbf16, #tpu.memory_space<vmem>>, vector<64x32xbf16>
    %cst = arith.constant dense<0.000000e+00> : vector<16x32xf32>
    %6 = tpu.matmul %4, %5, %cst {dimension_numbers = #tpu.dot_dimension_numbers<[1], [0], [0], [1], [0, 0, 1, 1], [], []>} : vector<16x64xbf16>, vector<64x32xbf16>, vector<16x32xf32> -> vector<16x32xf32>
    %7 = arith.addf %3, %6 : vector<16x32xf32>
    %c0_6 = arith.constant 0 : index
    %c0_7 = arith.constant 0 : index
    %8 = vector.load %arg6[%c0_6, %c0_7] : memref<16x32xf32, #tpu.memory_space<vmem>>, vector<16x32xf32>
    tpu.vector_store %arg6[%c0_6, %c0_7], %7 {strides = array<i32>} : memref<16x32xf32, #tpu.memory_space<vmem>>, vector<16x32xf32>,
    %c0_i32_8 = arith.constant 0 : i32
    %9 = arith.cmpi eq, %arg2, %c0_i32_8 : i32
    %10 = arith.extui %9 : i1 to i32
    %c0_i32_9 = arith.constant 0 : i32
    %11 = arith.cmpi ne, %10, %c0_i32_9 : i32
    scf.if %11 {
      %c0_10 = arith.constant 0 : index
      %c0_11 = arith.constant 0 : index
      %12 = vector.load %arg6[%c0_10, %c0_11] : memref<16x32xf32, #tpu.memory_space<vmem>>, vector<16x32xf32>
      %c0_12 = arith.constant 0 : index
      %c0_13 = arith.constant 0 : index
      %13 = vector.load %arg5[%c0_12, %c0_13] : memref<16x32xf32, #tpu.memory_space<vmem>>, vector<16x32xf32>
      tpu.vector_store %arg5[%c0_12, %c0_13], %12 {strides = array<i32>} : memref<16x32xf32, #tpu.memory_space<vmem>>, vector<16x32xf32>,
    } else {
    }
    return
  }
  func.func @transform_0(%arg0: i32, %arg1: i32, %arg2: i32) -> (i32, i32) {
    %c0_i32 = arith.constant 0 : i32
    return %arg0, %arg2 : i32, i32
  }
  func.func @transform_1(%arg0: i32, %arg1: i32, %arg2: i32) -> (i32, i32) {
    %c0_i32 = arith.constant 0 : i32
    return %arg2, %arg1 : i32, i32
  }
  func.func @transform_2(%arg0: i32, %arg1: i32, %arg2: i32) -> (i32, i32) {
    %c0_i32 = arith.constant 0 : i32
    return %arg0, %arg1 : i32, i32
  }
}

module attributes {stable_mosaic.version = 11 : i64} {
  func.func @_matmul_bias_kernel(%arg0: i32, %arg1: i32, %arg2: i32, %arg3: memref<16x32xbf16, #tpu.memory_space<vmem>>, %arg4: memref<32x128xbf16, #tpu.memory_space<vmem>>, %arg5: memref<1x128xf32, #tpu.memory_space<vmem>>, %arg6: memref<16x128xbf16, #tpu.memory_space<vmem>>, %arg7: memref<16x128xf32, #tpu.memory_space<vmem>>) attributes {dimension_semantics = [#tpu.dimension_semantics<parallel>, #tpu.dimension_semantics<parallel>, #tpu.dimension_semantics<arbitrary>], iteration_bounds = array<i64: 1, 1, 1>, scalar_prefetch = 0 : i64, scratch_operands = 1 : i64, tpu.core_type = #tpu.core_type<tc>, window_params = [{transform_indices = @transform_0, window_bounds = array<i64: 16, 32>}, {transform_indices = @transform_1, window_bounds = array<i64: 32, 128>}, {transform_indices = @transform_2, window_bounds = array<i64: 1, 128>}, {transform_indices = @transform_3, window_bounds = array<i64: 16, 128>}]} {
    %c0_i32 = arith.constant 0 : i32
    %0 = arith.cmpi eq, %arg2, %c0_i32 : i32
    %1 = arith.extui %0 : i1 to i32
    %c0_i32_0 = arith.constant 0 : i32
    %2 = arith.cmpi ne, %1, %c0_i32_0 : i32
    scf.if %2 {
      %cst_10 = arith.constant 0.000000e+00 : f32
      %12 = vector.broadcast %cst_10 : f32 to vector<16x128xf32>
      %c0_11 = arith.constant 0 : index
      %c0_12 = arith.constant 0 : index
      %13 = vector.load %arg7[%c0_11, %c0_12] : memref<16x128xf32, #tpu.memory_space<vmem>>, vector<16x128xf32>
      tpu.vector_store %arg7[%c0_11, %c0_12], %12 {strides = array<i32>} : memref<16x128xf32, #tpu.memory_space<vmem>>, vector<16x128xf32>,
    } else {
    }
    %c0 = arith.constant 0 : index
    %c0_1 = arith.constant 0 : index
    %3 = vector.load %arg7[%c0, %c0_1] : memref<16x128xf32, #tpu.memory_space<vmem>>, vector<16x128xf32>
    %c0_2 = arith.constant 0 : index
    %c0_3 = arith.constant 0 : index
    %4 = vector.load %arg3[%c0_2, %c0_3] : memref<16x32xbf16, #tpu.memory_space<vmem>>, vector<16x32xbf16>
    %c0_4 = arith.constant 0 : index
    %c0_5 = arith.constant 0 : index
    %5 = vector.load %arg4[%c0_4, %c0_5] : memref<32x128xbf16, #tpu.memory_space<vmem>>, vector<32x128xbf16>
    %cst = arith.constant dense<0.000000e+00> : vector<16x128xf32>
    %6 = tpu.matmul %4, %5, %cst {dimension_numbers = #tpu.dot_dimension_numbers<[1], [0], [0], [1], [0, 0, 1, 1], [], []>} : vector<16x32xbf16>, vector<32x128xbf16>, vector<16x128xf32> -> vector<16x128xf32>
    %7 = arith.addf %3, %6 : vector<16x128xf32>
    %c0_6 = arith.constant 0 : index
    %c0_7 = arith.constant 0 : index
    %8 = vector.load %arg7[%c0_6, %c0_7] : memref<16x128xf32, #tpu.memory_space<vmem>>, vector<16x128xf32>
    tpu.vector_store %arg7[%c0_6, %c0_7], %7 {strides = array<i32>} : memref<16x128xf32, #tpu.memory_space<vmem>>, vector<16x128xf32>,
    %c0_i32_8 = arith.constant 0 : i32
    %9 = arith.cmpi eq, %arg2, %c0_i32_8 : i32
    %10 = arith.extui %9 : i1 to i32
    %c0_i32_9 = arith.constant 0 : i32
    %11 = arith.cmpi ne, %10, %c0_i32_9 : i32
    scf.if %11 {
      %c0_10 = arith.constant 0 : index
      %c0_11 = arith.constant 0 : index
      %12 = vector.load %arg7[%c0_10, %c0_11] : memref<16x128xf32, #tpu.memory_space<vmem>>, vector<16x128xf32>
      %c0_12 = arith.constant 0 : index
      %c0_13 = arith.constant 0 : index
      %13 = vector.load %arg5[%c0_12, %c0_13] : memref<1x128xf32, #tpu.memory_space<vmem>>, vector<1x128xf32>
      %14 = vector.broadcast %13 : vector<1x128xf32> to vector<16x128xf32>
      %15 = arith.addf %12, %14 : vector<16x128xf32>
      %cst_14 = arith.constant 5.000000e-01 : f32
      %16 = vector.broadcast %cst_14 : f32 to vector<16x128xf32>
      %17 = arith.mulf %16, %15 : vector<16x128xf32>
      %cst_15 = arith.constant 0.707106769 : f32
      %18 = vector.broadcast %cst_15 : f32 to vector<16x128xf32>
      %19 = arith.mulf %15, %18 : vector<16x128xf32>
      %cst_16 = arith.constant 0.000000e+00 : f32
      %20 = vector.broadcast %cst_16 : f32 to vector<16x128xf32>
      %21 = arith.cmpf oge, %19, %20 : vector<16x128xf32>
      %cst_17 = arith.constant 1.000000e+00 : f32
      %cst_18 = arith.constant -1.000000e+00 : f32
      %22 = vector.broadcast %cst_17 : f32 to vector<16x128xf32>
      %23 = vector.broadcast %cst_18 : f32 to vector<16x128xf32>
      %24 = arith.select %21, %22, %23 : vector<16x128xi1>, vector<16x128xf32>
      %25 = math.absf %19 : vector<16x128xf32>
      %cst_19 = arith.constant 0.327591091 : f32
      %26 = vector.broadcast %cst_19 : f32 to vector<16x128xf32>
      %27 = arith.mulf %26, %25 : vector<16x128xf32>
      %cst_20 = arith.constant 1.000000e+00 : f32
      %28 = vector.broadcast %cst_20 : f32 to vector<16x128xf32>
      %29 = arith.addf %28, %27 : vector<16x128xf32>
      %cst_21 = arith.constant 1.000000e+00 : f32
      %30 = vector.broadcast %cst_21 : f32 to vector<16x128xf32>
      %31 = arith.divf %30, %29 : vector<16x128xf32>
      %cst_22 = arith.constant 1.06140542 : f32
      %32 = vector.broadcast %cst_22 : f32 to vector<16x128xf32>
      %33 = arith.mulf %32, %31 : vector<16x128xf32>
      %cst_23 = arith.constant -1.45315206 : f32
      %34 = vector.broadcast %cst_23 : f32 to vector<16x128xf32>
      %35 = arith.addf %33, %34 : vector<16x128xf32>
      %36 = arith.mulf %35, %31 : vector<16x128xf32>
      %cst_24 = arith.constant 1.42141378 : f32
      %37 = vector.broadcast %cst_24 : f32 to vector<16x128xf32>
      %38 = arith.addf %36, %37 : vector<16x128xf32>
      %39 = arith.mulf %38, %31 : vector<16x128xf32>
      %cst_25 = arith.constant -0.284496725 : f32
      %40 = vector.broadcast %cst_25 : f32 to vector<16x128xf32>
      %41 = arith.addf %39, %40 : vector<16x128xf32>
      %42 = arith.mulf %41, %31 : vector<16x128xf32>
      %cst_26 = arith.constant 0.254829586 : f32
      %43 = vector.broadcast %cst_26 : f32 to vector<16x128xf32>
      %44 = arith.addf %42, %43 : vector<16x128xf32>
      %45 = arith.mulf %44, %31 : vector<16x128xf32>
      %cst_27 = arith.constant 0.000000e+00 : f32
      %46 = vector.broadcast %cst_27 : f32 to vector<16x128xf32>
      %47 = arith.subf %46, %25 : vector<16x128xf32>
      %48 = arith.mulf %47, %25 : vector<16x128xf32>
      %49 = math.exp %48 : vector<16x128xf32>
      %50 = arith.mulf %45, %49 : vector<16x128xf32>
      %cst_28 = arith.constant 1.000000e+00 : f32
      %51 = vector.broadcast %cst_28 : f32 to vector<16x128xf32>
      %52 = arith.subf %51, %50 : vector<16x128xf32>
      %53 = arith.mulf %24, %52 : vector<16x128xf32>
      %cst_29 = arith.constant 1.000000e+00 : f32
      %54 = vector.broadcast %cst_29 : f32 to vector<16x128xf32>
      %55 = arith.addf %54, %53 : vector<16x128xf32>
      %56 = arith.mulf %17, %55 : vector<16x128xf32>
      %57 = arith.truncf %56 : vector<16x128xf32> to vector<16x128xbf16>
      %c0_30 = arith.constant 0 : index
      %c0_31 = arith.constant 0 : index
      %58 = vector.load %arg6[%c0_30, %c0_31] : memref<16x128xbf16, #tpu.memory_space<vmem>>, vector<16x128xbf16>
      tpu.vector_store %arg6[%c0_30, %c0_31], %57 {strides = array<i32>} : memref<16x128xbf16, #tpu.memory_space<vmem>>, vector<16x128xbf16>,
    } else {
    }
    return
  }
  func.func @transform_0(%arg0: i32, %arg1: i32, %arg2: i32) -> (i32, i32) {
    %c0_i32 = arith.constant 0 : i32
    return %arg0, %arg2 : i32, i32
  }
  func.func @transform_1(%arg0: i32, %arg1: i32, %arg2: i32) -> (i32, i32) {
    %c0_i32 = arith.constant 0 : i32
    return %arg2, %arg1 : i32, i32
  }
  func.func @transform_2(%arg0: i32, %arg1: i32, %arg2: i32) -> (i32, i32) {
    %c0_i32 = arith.constant 0 : i32
    %c0_i32_0 = arith.constant 0 : i32
    return %c0_i32, %arg1 : i32, i32
  }
  func.func @transform_3(%arg0: i32, %arg1: i32, %arg2: i32) -> (i32, i32) {
    %c0_i32 = arith.constant 0 : i32
    return %arg0, %arg1 : i32, i32
  }
}

module attributes {stable_mosaic.version = 11 : i64} {
  func.func @_matmul_bias_kernel(%arg0: i32, %arg1: i32, %arg2: i32, %arg3: memref<16x128xbf16, #tpu.memory_space<vmem>>, %arg4: memref<128x32xbf16, #tpu.memory_space<vmem>>, %arg5: memref<1x32xf32, #tpu.memory_space<vmem>>, %arg6: memref<16x32xf32, #tpu.memory_space<vmem>>, %arg7: memref<16x32xf32, #tpu.memory_space<vmem>>) attributes {dimension_semantics = [#tpu.dimension_semantics<parallel>, #tpu.dimension_semantics<parallel>, #tpu.dimension_semantics<arbitrary>], iteration_bounds = array<i64: 1, 1, 1>, scalar_prefetch = 0 : i64, scratch_operands = 1 : i64, tpu.core_type = #tpu.core_type<tc>, window_params = [{transform_indices = @transform_0, window_bounds = array<i64: 16, 128>}, {transform_indices = @transform_1, window_bounds = array<i64: 128, 32>}, {transform_indices = @transform_2, window_bounds = array<i64: 1, 32>}, {transform_indices = @transform_3, window_bounds = array<i64: 16, 32>}]} {
    %c0_i32 = arith.constant 0 : i32
    %0 = arith.cmpi eq, %arg2, %c0_i32 : i32
    %1 = arith.extui %0 : i1 to i32
    %c0_i32_0 = arith.constant 0 : i32
    %2 = arith.cmpi ne, %1, %c0_i32_0 : i32
    scf.if %2 {
      %cst_10 = arith.constant 0.000000e+00 : f32
      %12 = vector.broadcast %cst_10 : f32 to vector<16x32xf32>
      %c0_11 = arith.constant 0 : index
      %c0_12 = arith.constant 0 : index
      %13 = vector.load %arg7[%c0_11, %c0_12] : memref<16x32xf32, #tpu.memory_space<vmem>>, vector<16x32xf32>
      tpu.vector_store %arg7[%c0_11, %c0_12], %12 {strides = array<i32>} : memref<16x32xf32, #tpu.memory_space<vmem>>, vector<16x32xf32>,
    } else {
    }
    %c0 = arith.constant 0 : index
    %c0_1 = arith.constant 0 : index
    %3 = vector.load %arg7[%c0, %c0_1] : memref<16x32xf32, #tpu.memory_space<vmem>>, vector<16x32xf32>
    %c0_2 = arith.constant 0 : index
    %c0_3 = arith.constant 0 : index
    %4 = vector.load %arg3[%c0_2, %c0_3] : memref<16x128xbf16, #tpu.memory_space<vmem>>, vector<16x128xbf16>
    %c0_4 = arith.constant 0 : index
    %c0_5 = arith.constant 0 : index
    %5 = vector.load %arg4[%c0_4, %c0_5] : memref<128x32xbf16, #tpu.memory_space<vmem>>, vector<128x32xbf16>
    %cst = arith.constant dense<0.000000e+00> : vector<16x32xf32>
    %6 = tpu.matmul %4, %5, %cst {dimension_numbers = #tpu.dot_dimension_numbers<[1], [0], [0], [1], [0, 0, 1, 1], [], []>} : vector<16x128xbf16>, vector<128x32xbf16>, vector<16x32xf32> -> vector<16x32xf32>
    %7 = arith.addf %3, %6 : vector<16x32xf32>
    %c0_6 = arith.constant 0 : index
    %c0_7 = arith.constant 0 : index
    %8 = vector.load %arg7[%c0_6, %c0_7] : memref<16x32xf32, #tpu.memory_space<vmem>>, vector<16x32xf32>
    tpu.vector_store %arg7[%c0_6, %c0_7], %7 {strides = array<i32>} : memref<16x32xf32, #tpu.memory_space<vmem>>, vector<16x32xf32>,
    %c0_i32_8 = arith.constant 0 : i32
    %9 = arith.cmpi eq, %arg2, %c0_i32_8 : i32
    %10 = arith.extui %9 : i1 to i32
    %c0_i32_9 = arith.constant 0 : i32
    %11 = arith.cmpi ne, %10, %c0_i32_9 : i32
    scf.if %11 {
      %c0_10 = arith.constant 0 : index
      %c0_11 = arith.constant 0 : index
      %12 = vector.load %arg7[%c0_10, %c0_11] : memref<16x32xf32, #tpu.memory_space<vmem>>, vector<16x32xf32>
      %c0_12 = arith.constant 0 : index
      %c0_13 = arith.constant 0 : index
      %13 = vector.load %arg5[%c0_12, %c0_13] : memref<1x32xf32, #tpu.memory_space<vmem>>, vector<1x32xf32>
      %14 = vector.broadcast %13 : vector<1x32xf32> to vector<16x32xf32>
      %15 = arith.addf %12, %14 : vector<16x32xf32>
      %c0_14 = arith.constant 0 : index
      %c0_15 = arith.constant 0 : index
      %16 = vector.load %arg6[%c0_14, %c0_15] : memref<16x32xf32, #tpu.memory_space<vmem>>, vector<16x32xf32>
      tpu.vector_store %arg6[%c0_14, %c0_15], %15 {strides = array<i32>} : memref<16x32xf32, #tpu.memory_space<vmem>>, vector<16x32xf32>,
    } else {
    }
    return
  }
  func.func @transform_0(%arg0: i32, %arg1: i32, %arg2: i32) -> (i32, i32) {
    %c0_i32 = arith.constant 0 : i32
    return %arg0, %arg2 : i32, i32
  }
  func.func @transform_1(%arg0: i32, %arg1: i32, %arg2: i32) -> (i32, i32) {
    %c0_i32 = arith.constant 0 : i32
    return %arg2, %arg1 : i32, i32
  }
  func.func @transform_2(%arg0: i32, %arg1: i32, %arg2: i32) -> (i32, i32) {
    %c0_i32 = arith.constant 0 : i32
    %c0_i32_0 = arith.constant 0 : i32
    return %c0_i32, %arg1 : i32, i32
  }
  func.func @transform_3(%arg0: i32, %arg1: i32, %arg2: i32) -> (i32, i32) {
    %c0_i32 = arith.constant 0 : i32
    return %arg0, %arg1 : i32, i32
  }
}

</mosaic_0001>

<llo_original>
// kernel: mamba_block_forward.9
$region0: #{mamba_block_forward.9}
  #allocation0 [shape = 'u32[]', space=smem, size = 0x4, offset = 0x4, fixed_abs, tag = 'smem constant byte address 0x4 - core index']
  #allocation1 [shape = 'u32[144,128]{1,0:T(1,128)}', space=vmem, size = 0x12000, scoped, tag = 'internal scratch']
  %s0 = inlined_call_operand.vmem [shape: f32[16,32], index: 0, kind: input, shape index: {}]
  %s1 = inlined_call_operand.vmem [shape: f32[1,32], index: 1, kind: input, shape index: {}]
  %s2 = inlined_call_operand.vmem [shape: bf16[16,32], index: 2, kind: output, shape index: {}]
  %s3 = sld [smem:[#allocation0]]
  $region18: #{mamba_block_forward.9} parent=0
    _
  %s5 = ssub.s32 1, %s3
  %s6 = scalar_select 0, %s5, %s3
  // Predicated region
  $region2: #{mamba_block_forward.9} parent=0 // pred_check
    _
  $region3: #{mamba_block_forward.9} parent=0 // pred_check_branch
    %8 = sbr.rel (0) target = $region5
  $region4: #{mamba_block_forward.9} parent=0 // pred_region
    _
  $region5: #{mamba_block_forward.9} parent=0 // pred_fallthru
    _
  // Predicated region
  $region6: #{mamba_block_forward.9} parent=0 // pred_check
    _
  $region7: #{mamba_block_forward.9} parent=0 // pred_check_branch
    %10 = sbr.rel (0) target = $region9
  $region8: #{mamba_block_forward.9} parent=0 // pred_region
    _
  $region9: #{mamba_block_forward.9} parent=0 // pred_fallthru
    _
  %v11 = vld [vmem:[%s0] sm:$0xff]
  %v12 = vld [vmem:[%s0 + $0x8] sm:$0xff]
  %v13 = vmul.f32 %v11, %v11
  %v14 = vmul.f32 %v12, %v12
  %vm15 = vcmask 261120
  %v16 = vsel %vm15, %v13, 0.0
  %17 = vadd.xlane.f32.xlu0 %v16
  %v18 = vpop.xlane.xlu0 %17
  %v19 = vsel %vm15, %v14, 0.0
  %20 = vadd.xlane.f32.xlu0 %v19
  %v21 = vpop.xlane.xlu0 %20
  %v22 = vadd.f32 %v18, 1e-06
  %v23 = vadd.f32 %v21, 1e-06
  %v24 = vrsqrt.pop %v22
  %v25 = vrsqrt.pop %v23
  %v26 = vmul.f32 %v11, %v24
  %v27 = vmul.f32 %v12, %v25
  %v28 = vld [vmem:[%s1] sm:$0x1]
  %v30 = vlaneseq
  %v31 = vshrl.u32 %v30, 7
  %v32 = vsub.s32 0, %v31
  %v33 = vrot.slane %v28, %v32
  %v35 = vmul.f32 %v26, %v33
  %v36 = vmul.f32 %v27, %v33
  %v37 = vpack.c.bf16 %v36, %v35
  %v39 = vunpack.c.l.b16 %v37
  %v40 = vunpack.c.h.b16 %v37
  %v41 = vpack.c.b16 %v39, %v39
  %v42 = vpack.c.b16 %v40, %v40
  %vm45 = vcmask 257024
  %46 = vst.msk [vmem:[%s2] sm:$0xf] %vm45, %v41
  %47 = vst.msk [vmem:[%s2 + $0x4] sm:$0xf] %vm45, %v42
  // Predicated region
  $region10: #{mamba_block_forward.9} parent=0 // pred_check
    _
  $region11: #{mamba_block_forward.9} parent=0 // pred_check_branch
    %49 = sbr.rel (0) target = $region13
  $region12: #{mamba_block_forward.9} parent=0 // pred_region
    _
  $region13: #{mamba_block_forward.9} parent=0 // pred_fallthru
    _
  // Predicated region
  $region14: #{mamba_block_forward.9} parent=0 // pred_check
    _
  $region15: #{mamba_block_forward.9} parent=0 // pred_check_branch
    %51 = sbr.rel (0) target = $region17
  $region16: #{mamba_block_forward.9} parent=0 // pred_region
    _
  $region17: #{mamba_block_forward.9} parent=0 // pred_fallthru
    _

// kernel: mamba_block_forward.10
$region0: #{mamba_block_forward.10}
  #allocation0 [shape = 'u32[]', space=smem, size = 0x4, offset = 0x4, fixed_abs, tag = 'smem constant byte address 0x4 - core index']
  #allocation1 [shape = 'u32[144,128]{1,0:T(1,128)}', space=vmem, size = 0x12000, scoped, tag = 'internal scratch']
  #allocation2 [shape = 'f32[16,161]{1,0:T(8,128)}', space=vmem, size = 0x4000, scoped, tag = 'scratch operand']
  %s0 = inlined_call_operand.vmem [shape: bf16[16,32], index: 0, kind: input, shape index: {}]
  %s1 = inlined_call_operand.vmem [shape: bf16[32,161], index: 1, kind: input, shape index: {}]
  %s2 = inlined_call_operand.vmem [shape: bf16[16,161], index: 2, kind: output, shape index: {}]
  %s3 = sld [smem:[#allocation0]]
  $region26: #{mamba_block_forward.10} parent=0
    _
  %s5 = ssub.s32 1, %s3
  %s6 = scalar_select 0, %s5, %s3
  // Predicated region
  $region2: #{mamba_block_forward.10} parent=0 // pred_check
    _
  $region3: #{mamba_block_forward.10} parent=0 // pred_check_branch
    %8 = sbr.rel (0) target = $region5
  $region4: #{mamba_block_forward.10} parent=0 // pred_region
    _
  $region5: #{mamba_block_forward.10} parent=0 // pred_fallthru
    _
  // Predicated region
  $region6: #{mamba_block_forward.10} parent=0 // pred_check
    _
  $region7: #{mamba_block_forward.10} parent=0 // pred_check_branch
    %10 = sbr.rel (0) target = $region9
  $region8: #{mamba_block_forward.10} parent=0 // pred_region
    _
  $region9: #{mamba_block_forward.10} parent=0 // pred_fallthru
    _
  %p12 = scmp.eq.s32.totalorder 0, 0
  // Predicated region
  $region10: #{mamba_block_forward.10} parent=0 // pred_check
    %p13 = pneg %p12
  $region11: #{mamba_block_forward.10} parent=0 // pred_check_branch
    %15 = sbr.rel (%p13) target = $region13
  $region12: #{mamba_block_forward.10} parent=0 // pred_region
    %16 = vst [vmem:[#allocation2] sm:$0xff] 0.0
    %vm17 = vcmask 269312
    %18 = vst.msk [vmem:[#allocation2 + $0x8] sm:$0xff] %vm17, 0.0
    %19 = vst [vmem:[#allocation2 + $0x10] sm:$0xff] 0.0
    %20 = vst.msk [vmem:[#allocation2 + $0x18] sm:$0xff] %vm17, 0.0
  $region13: #{mamba_block_forward.10} parent=0 // pred_fallthru
    _
  %v21 = vld [vmem:[#allocation2] sm:$0xff]
  %v22 = vld [vmem:[#allocation2 + $0x8] sm:$0xff]
  %v23 = vld [vmem:[#allocation2 + $0x10] sm:$0xff]
  %v24 = vld [vmem:[#allocation2 + $0x18] sm:$0xff]
  %v25 = vld [vmem:[%s0] sm:$0xf]
  %v26 = vld [vmem:[%s0 + $0x4] sm:$0xf]
  %v27 = vld [vmem:[%s1] sm:$0xff]
  %v28 = vld [vmem:[%s1 + $0x8] sm:$0xff]
  %v29 = vld [vmem:[%s1 + $0x10] sm:$0xff]
  %v30 = vld [vmem:[%s1 + $0x18] sm:$0xff]
  %v33 = vunpack.c.l.b16 %v25
  %v34 = vunpack.c.l.b16 %v26
  %v35 = vpack.c.b16 %v34, %v33
  %v40 = vunpack.c.l.b16 %v27
  %v41 = vunpack.c.h.b16 %v27
  %v42 = vunpack.c.l.b16 %v28
  %v43 = vunpack.c.h.b16 %v28
  %v44 = vunpack.c.l.b16 %v29
  %v45 = vunpack.c.h.b16 %v29
  %v46 = vunpack.c.l.b16 %v30
  %v47 = vunpack.c.h.b16 %v30
  %v48 = vpack.c.b16 %v42, %v40
  %v49 = vpack.c.b16 %v43, %v41
  %v50 = vpack.c.b16 %v46, %v44
  %v51 = vpack.c.b16 %v47, %v45
  %vm56 = vcmask 261120
  %v58 = vsel %vm56, %v35, 0
  %60 = vmatprep.subr.bf16.mxu0 %v49
  %61 = vmatpush1.bf16.msra.mxu0 %v48
  %62 = vmatprep.subr.bf16.mxu0 %v51
  %63 = vmatpush1.bf16.msra.mxu0 %v50
  %64 = vmatprep.subr.bf16.mxu0 0
  %65 = vmatpush1.bf16.msra.mxu0 0
  %66 = vmatprep.subr.bf16.mxu0 0
  %67 = vmatpush1.bf16.msra.mxu0 0
  %68 = vmatprep.subr.bf16.mxu0 0
  %69 = vmatpush1.bf16.msra.mxu0 0
  %70 = vmatprep.subr.bf16.mxu0 0
  %71 = vmatpush1.bf16.msra.mxu0 0
  %72 = vmatprep.subr.bf16.mxu0 0
  %73 = vmatpush1.bf16.msra.mxu0 0
  %74 = vmatprep.subr.bf16.mxu0 0
  %75 = vmatpush1.bf16.msra.mxu0 0
  %76 = vmatprep.subr.bf16.mxu0 0
  %77 = vmatpush1.bf16.msra.mxu0 0
  %78 = vmatprep.subr.bf16.mxu0 0
  %79 = vmatpush1.bf16.msra.mxu0 0
  %80 = vmatprep.subr.bf16.mxu0 0
  %81 = vmatpush1.bf16.msra.mxu0 0
  %82 = vmatprep.subr.bf16.mxu0 0
  %83 = vmatpush1.bf16.msra.mxu0 0
  %84 = vmatprep.subr.bf16.mxu0 0
  %85 = vmatpush1.bf16.msra.mxu0 0
  %86 = vmatprep.subr.bf16.mxu0 0
  %87 = vmatpush1.bf16.msra.mxu0 0
  %88 = vmatprep.subr.bf16.mxu0 0
  %89 = vmatpush1.bf16.msra.mxu0 0
  %90 = vmatprep.subr.bf16.mxu0 0
  %91 = vmatpush1.bf16.msra.mxu0 0
  %92 = vmatprep.mubr.bf16.mxu0 0
  %93 = vmatmul.mubr.bf16.gmra.mrb[0].mxu0 %v58
  %v94 = vpop.f32.mrb[0].mxu0
  %v95 = vadd.f32 0.0, %v94
  %v96 = vpop.f32.mrb[0].mxu0
  %v97 = vadd.f32 0.0, %v96
  %v98 = vpop.f32.mrb[0].mxu0
  %v99 = vadd.f32 0.0, %v98
  %v100 = vpop.f32.mrb[0].mxu0
  %v101 = vadd.f32 0.0, %v100
  %102 = vdwg.mxu0
  %v103 = vadd.f32 %v21, %v95
  %v104 = vadd.f32 %v22, %v97
  %v105 = vadd.f32 %v23, %v99
  %v106 = vadd.f32 %v24, %v101
  %107 = vst [vmem:[#allocation2] sm:$0xff] %v103
  %vm108 = vcmask 269312
  %109 = vst.msk [vmem:[#allocation2 + $0x8] sm:$0xff] %vm108, %v104
  %110 = vst [vmem:[#allocation2 + $0x10] sm:$0xff] %v105
  %111 = vst.msk [vmem:[#allocation2 + $0x18] sm:$0xff] %vm108, %v106
  // Predicated region
  $region14: #{mamba_block_forward.10} parent=0 // pred_check
    %p112 = pneg %p12
  $region15: #{mamba_block_forward.10} parent=0 // pred_check_branch
    %114 = sbr.rel (%p112) target = $region17
  $region16: #{mamba_block_forward.10} parent=0 // pred_region
    %v115 = vld [vmem:[#allocation2] sm:$0xff]
    %v116 = vld [vmem:[#allocation2 + $0x8] sm:$0xff]
    %v117 = vld [vmem:[#allocation2 + $0x10] sm:$0xff]
    %v118 = vld [vmem:[#allocation2 + $0x18] sm:$0xff]
    %v119 = vpack.c.bf16 %v117, %v115
    %v120 = vpack.c.bf16 %v118, %v116
    %v123 = vunpack.c.l.b16 %v119
    %v124 = vunpack.c.l.b16 %v120
    %v125 = vunpack.c.h.b16 %v119
    %v126 = vunpack.c.h.b16 %v120
    %v127 = vpack.c.b16 %v124, %v123
    %v128 = vpack.c.b16 %v126, %v125
    %vm131 = vcmask 1043456
    %vm132 = vcmask 269316
    %vm133 = vmor %vm132, %vm131
    %134 = vst.msk [vmem:[%s2] sm:$0xff] %vm133, %v127
    %135 = vst.msk [vmem:[%s2 + $0x8] sm:$0xff] %vm133, %v128
  $region17: #{mamba_block_forward.10} parent=0 // pred_fallthru
    _
  // Predicated region
  $region18: #{mamba_block_forward.10} parent=0 // pred_check
    _
  $region19: #{mamba_block_forward.10} parent=0 // pred_check_branch
    %137 = sbr.rel (0) target = $region21
  $region20: #{mamba_block_forward.10} parent=0 // pred_region
    _
  $region21: #{mamba_block_forward.10} parent=0 // pred_fallthru
    _
  // Predicated region
  $region22: #{mamba_block_forward.10} parent=0 // pred_check
    _
  $region23: #{mamba_block_forward.10} parent=0 // pred_check_branch
    %139 = sbr.rel (0) target = $region25
  $region24: #{mamba_block_forward.10} parent=0 // pred_region
    _
  $region25: #{mamba_block_forward.10} parent=0 // pred_fallthru
    _

// kernel: mamba_block_forward.11
$region0: #{mamba_block_forward.11}
  #allocation0 [shape = 'u32[]', space=smem, size = 0x4, offset = 0x4, fixed_abs, tag = 'smem constant byte address 0x4 - core index']
  #allocation1 [shape = 'u32[144,128]{1,0:T(1,128)}', space=vmem, size = 0x12000, scoped, tag = 'internal scratch']
  %s0 = inlined_call_operand.vmem [shape: bf16[2,11,96], index: 0, kind: input, shape index: {}]
  %s1 = inlined_call_operand.vmem [shape: f32[1,4,96], index: 1, kind: input, shape index: {}]
  %s2 = inlined_call_operand.vmem [shape: f32[1,1,96], index: 2, kind: input, shape index: {}]
  %s3 = inlined_call_operand.vmem [shape: bf16[2,8,96], index: 3, kind: output, shape index: {}]
  %s4 = sld [smem:[#allocation0]]
  $region45: #{mamba_block_forward.11} parent=0
    _
  %s6 = ssub.s32 1, %s4
  %s7 = scalar_select 0, %s6, %s4
  loop: start=0, step=1, limit=4
  $region2: #{mamba_block_forward.11} parent=0 // loop_pre_header
    _
  $region3: #{mamba_block_forward.11} parent=0 // loop_header
    %s9 = sphi 0, %s13
    %p10 = scmp.ge.s32.totalorder %s9, 4
    %s16 = sphi 0, %s28
    %s17 = sphi 0, %s24
    %s18 = sphi 0, %s16
    %s19 = sphi 0, %s17
    %s20 = sphi 0, %s18
    %s21 = sphi 0, %s19
    %s33 = sphi 0, %s35
    %s36 = sphi 0, %s33
    %s37 = sphi 0, %s36
    %s53 = sphi 0, %s37
    %s59 = sphi 0, %s61
    %s62 = sphi 0, %s59
    %s63 = sphi 0, %s62
    %s79 = sphi 0, %s63
    %s85 = sphi 0, %s87
    %s88 = sphi 0, %s85
    %s89 = sphi 0, %s88
    %s105 = sphi 0, %s89
    %s113 = sphi 0, %s115
    %s116 = sphi 0, %s113
    %s117 = sphi 0, %s116
    %s133 = sphi 0, %s117
  $region4: #{mamba_block_forward.11} parent=0 // loop_header_branch
    %12 = sbr.rel (%p10) target = $region8
  $region5: #{mamba_block_forward.11} parent=0 // loop_body
    %s14 = ssub.s32 %s9, 1
    %s15 = ssub.s32 %s9, 2
    %s22 = sadd.s32 1, %s17
    %p23 = scmp.ge.s32.totalorder %s22, 1
    %s24 = scalar_select %p23, 0, %s22
    %s25 = sadd.s32 1, %s16
    %s26 = scalar_select %p23, %s25, %s16
    %p27 = scmp.ge.s32.totalorder %s26, 2
    %s28 = scalar_select %p27, 0, %s26
    %s29 = ssub.s32 %s16, %s28
    %s30 = ssub.s32 %s17, %s24
    %s31 = sor.u32 %s29, %s30
    %p32 = scmp.eq.s32.totalorder %s31, 0
    %s34 = sadd.s32 %s33, 1
    %s35 = scalar_select %p32, %s33, %s34
    %p38 = pneg %p32
    %p39 = scmp.eq.s32.totalorder %s9, 1
    %p40 = por %p38, %p39
    %p41 = scmp.ne.s32.totalorder %s33, %s36
    %p42 = scmp.eq.s32.totalorder %s9, 0
    %p43 = por %p41, %p42
    %p44 = scmp.ne.s32.totalorder %s33, %s36
    %p45 = scmp.eq.s32.totalorder %s14, 1
    %p46 = por %p44, %p45
    %p47 = scmp.ne.s32.totalorder %s36, %s37
    %p48 = scmp.eq.s32.totalorder %s14, 0
    %p49 = por %p47, %p48
    %p50 = scmp.ne.s32.totalorder %s36, %s37
    %p51 = scmp.eq.s32.totalorder %s15, 1
    %p52 = por %p50, %p51
    %p54 = scmp.ne.s32.totalorder %s37, %s53
    %p55 = scmp.eq.s32.totalorder %s15, 0
    %p56 = por %p54, %p55
    %s57 = ssub.s32 %s17, %s24
    %p58 = scmp.eq.s32.totalorder %s57, 0
    %s60 = sadd.s32 %s59, 1
    %s61 = scalar_select %p58, %s59, %s60
    %p64 = pneg %p58
    %p65 = scmp.eq.s32.totalorder %s9, 1
    %p66 = por %p64, %p65
    %p67 = scmp.ne.s32.totalorder %s59, %s62
    %p68 = scmp.eq.s32.totalorder %s9, 0
    %p69 = por %p67, %p68
    %p70 = scmp.ne.s32.totalorder %s59, %s62
    %p71 = scmp.eq.s32.totalorder %s14, 1
    %p72 = por %p70, %p71
    %p73 = scmp.ne.s32.totalorder %s62, %s63
    %p74 = scmp.eq.s32.totalorder %s14, 0
    %p75 = por %p73, %p74
    %p76 = scmp.ne.s32.totalorder %s62, %s63
    %p77 = scmp.eq.s32.totalorder %s15, 1
    %p78 = por %p76, %p77
    %p80 = scmp.ne.s32.totalorder %s63, %s79
    %p81 = scmp.eq.s32.totalorder %s15, 0
    %p82 = por %p80, %p81
    %s83 = ssub.s32 %s17, %s24
    %p84 = scmp.eq.s32.totalorder %s83, 0
    %s86 = sadd.s32 %s85, 1
    %s87 = scalar_select %p84, %s85, %s86
    %p90 = pneg %p84
    %p91 = scmp.eq.s32.totalorder %s9, 1
    %p92 = por %p90, %p91
    %p93 = scmp.ne.s32.totalorder %s85, %s88
    %p94 = scmp.eq.s32.totalorder %s9, 0
    %p95 = por %p93, %p94
    %p96 = scmp.ne.s32.totalorder %s85, %s88
    %p97 = scmp.eq.s32.totalorder %s14, 1
    %p98 = por %p96, %p97
    %p99 = scmp.ne.s32.totalorder %s88, %s89
    %p100 = scmp.eq.s32.totalorder %s14, 0
    %p101 = por %p99, %p100
    %p102 = scmp.ne.s32.totalorder %s88, %s89
    %p103 = scmp.eq.s32.totalorder %s15, 1
    %p104 = por %p102, %p103
    %p106 = scmp.ne.s32.totalorder %s89, %s105
    %p107 = scmp.eq.s32.totalorder %s15, 0
    %p108 = por %p106, %p107
    %s109 = ssub.s32 %s16, %s28
    %s110 = ssub.s32 %s17, %s24
    %s111 = sor.u32 %s109, %s110
    %p112 = scmp.eq.s32.totalorder %s111, 0
    %s114 = sadd.s32 %s113, 1
    %s115 = scalar_select %p112, %s113, %s114
    %p118 = pneg %p112
    %p119 = scmp.eq.s32.totalorder %s9, 1
    %p120 = por %p118, %p119
    %p121 = scmp.ne.s32.totalorder %s113, %s116
    %p122 = scmp.eq.s32.totalorder %s9, 0
    %p123 = por %p121, %p122
    %p124 = scmp.ne.s32.totalorder %s113, %s116
    %p125 = scmp.eq.s32.totalorder %s14, 1
    %p126 = por %p124, %p125
    %p127 = scmp.ne.s32.totalorder %s116, %s117
    %p128 = scmp.eq.s32.totalorder %s14, 0
    %p129 = por %p127, %p128
    %p130 = scmp.ne.s32.totalorder %s116, %s117
    %p131 = scmp.eq.s32.totalorder %s15, 1
    %p132 = por %p130, %p131
    %p134 = scmp.ne.s32.totalorder %s117, %s133
    %p135 = scmp.eq.s32.totalorder %s15, 0
    %p136 = por %p134, %p135
    %p137 = scmp.le.s32.totalorder 1, %s9
    %p138 = scmp.lt.s32.totalorder %s9, 3
    %p139 = pnand %p137, %p138
    %p140 = pneg %p139
    // Predicated region
    $region9: #{mamba_block_forward.11} parent=5 // pred_check
      _
    $region10: #{mamba_block_forward.11} parent=5 // pred_check_branch
      %142 = sbr.rel (%p139) target = $region12
    $region11: #{mamba_block_forward.11} parent=5 // pred_region
      %s143 = ssub.s32 %s9, 1
      // Predicated region
      $region13: #{mamba_block_forward.11} parent=11 // pred_check
        %p144 = pneg %p75
      $region14: #{mamba_block_forward.11} parent=11 // pred_check_branch
        %146 = sbr.rel (%p144) target = $region16
      $region15: #{mamba_block_forward.11} parent=11 // pred_region
        %p147 = scmp.lt.s32.totalorder %s19, 0
        %s148 = scalar_select %p147, %s19, 0
        %s149 = smul.addr %s148, 4
        %s150 = scalar_lea.vmem %s1, %s149
      $region16: #{mamba_block_forward.11} parent=11 // pred_fallthru
        _
      // Predicated region
      $region17: #{mamba_block_forward.11} parent=11 // pred_check
        %p151 = pneg %p101
      $region18: #{mamba_block_forward.11} parent=11 // pred_check_branch
        %153 = sbr.rel (%p151) target = $region20
      $region19: #{mamba_block_forward.11} parent=11 // pred_region
        %p154 = scmp.lt.s32.totalorder %s19, 0
        %s155 = scalar_select %p154, %s19, 0
        %s156 = scalar_lea.vmem %s2, %s155
      $region20: #{mamba_block_forward.11} parent=11 // pred_fallthru
        _
    $region12: #{mamba_block_forward.11} parent=5 // pred_fallthru
      _
    %p157 = scmp.lt.s32.totalorder %s9, 2
    // Predicated region
    $region21: #{mamba_block_forward.11} parent=5 // pred_check
      %p158 = pneg %p157
    $region22: #{mamba_block_forward.11} parent=5 // pred_check_branch
      %160 = sbr.rel (%p158) target = $region24
    $region23: #{mamba_block_forward.11} parent=5 // pred_region
      // Predicated region
      $region25: #{mamba_block_forward.11} parent=23 // pred_check
        %p161 = pneg %p43
      $region26: #{mamba_block_forward.11} parent=23 // pred_check_branch
        %163 = sbr.rel (%p161) target = $region28
      $region27: #{mamba_block_forward.11} parent=23 // pred_region
        %p164 = scmp.lt.s32.totalorder %s16, 1
        %s165 = scalar_select %p164, %s16, 1
        %p166 = scmp.lt.s32.totalorder %s17, 0
        %s167 = scalar_select %p166, %s17, 0
        %s168 = smul.addr %s165, 2
        %s169 = sadd.s32 %s167, %s168
        %s170 = smul.addr %s169, 4
        %s171 = scalar_lea.vmem %s0, %s170
      $region28: #{mamba_block_forward.11} parent=23 // pred_fallthru
        _
    $region24: #{mamba_block_forward.11} parent=5 // pred_fallthru
      _
    %p172 = scmp.le.s32.totalorder 1, %s9
    %p173 = scmp.lt.s32.totalorder %s9, 3
    %p174 = pnand %p172, %p173
    %p175 = pneg %p174
    // Predicated region
    $region29: #{mamba_block_forward.11} parent=5 // pred_check
      _
    $region30: #{mamba_block_forward.11} parent=5 // pred_check_branch
      %177 = sbr.rel (%p174) target = $region32
    $region31: #{mamba_block_forward.11} parent=5 // pred_region
      %s178 = ssub.s32 %s9, 1
      %p179 = scmp.lt.s32.totalorder %s18, 1
      %s180 = scalar_select %p179, %s18, 1
      %p181 = scmp.lt.s32.totalorder %s19, 0
      %s182 = scalar_select %p181, %s19, 0
      %s183 = smul.addr %s180, 2
      %s184 = sadd.s32 %s182, %s183
      %s185 = smul.addr %s184, 4
      %s186 = scalar_lea.vmem %s0, %s185
      %p187 = pneg %p49
      %p188 = pneg %p46
      %p189 = scmp.lt.s32.totalorder %s19, 0
      %s190 = scalar_select %p189, %s19, 0
      %s191 = smul.addr %s190, 4
      %s192 = scalar_lea.vmem %s1, %s191
      %p193 = pneg %p75
      %p194 = pneg %p72
      %p195 = scmp.lt.s32.totalorder %s19, 0
      %s196 = scalar_select %p195, %s19, 0
      %s197 = scalar_lea.vmem %s2, %s196
      %p198 = pneg %p101
      %p199 = pneg %p98
      %p200 = pneg %p129
      %p201 = pneg %p126
      %p202 = scmp.lt.s32.totalorder %s18, 1
      %s203 = scalar_select %p202, %s18, 1
      %p204 = scmp.lt.s32.totalorder %s19, 0
      %s205 = scalar_select %p204, %s19, 0
      %s206 = sadd.s32 %s205, %s203
      %s207 = smul.addr %s206, 4
      %s208 = scalar_lea.vmem %s3, %s207
      %p209 = scmp.lt.s32.totalorder %s18, 1
      %s210 = scalar_select %p209, %s18, 1
      %p211 = scmp.lt.s32.totalorder %s19, 0
      %s212 = scalar_select %p211, %s19, 0
      %s213 = smul.addr %s210, 2
      %s214 = sadd.s32 %s212, %s213
      %s215 = smul.addr %s214, 4
      %s216 = scalar_lea.vmem %s0, %s215
      %p217 = scmp.lt.s32.totalorder %s19, 0
      %s218 = scalar_select %p217, %s19, 0
      %s219 = smul.addr %s218, 4
      %s220 = scalar_lea.vmem %s1, %s219
      %p221 = scmp.lt.s32.totalorder %s19, 0
      %s222 = scalar_select %p221, %s19, 0
      %s223 = scalar_lea.vmem %s2, %s222
      %p224 = scmp.lt.s32.totalorder %s18, 1
      %s225 = scalar_select %p224, %s18, 1
      %p226 = scmp.lt.s32.totalorder %s19, 0
      %s227 = scalar_select %p226, %s19, 0
      %s228 = sadd.s32 %s227, %s225
      %s229 = smul.addr %s228, 4
      %s230 = scalar_lea.vmem %s3, %s229
      %v231 = vld [vmem:[%s223] sm:$0x1]
      %v233 = vlaneseq
      %v234 = vshrl.u32 %v233, 7
      %v235 = vsub.s32 0, %v234
      %v236 = vrot.slane %v231, %v235
      %v238 = vadd.f32 %v236, 0.0
      %v239 = vld [vmem:[%s220] sm:$0x1]
      %v240 = vld [vmem:[%s216] sm:$0xf]
      %v241 = vunpack.c.l.bf16 %v240
      %v242 = vlaneseq
      %v243 = vshrl.u32 %v242, 7
      %v244 = vsub.s32 0, %v243
      %v245 = vrot.slane %v239, %v244
      %v246 = vmul.f32 %v245, %v241
      %v247 = vadd.f32 %v238, %v246
      %v248 = vld [vmem:[%s220 + $0x1] sm:$0x1]
      %v249 = vld [vmem:[%s216 + $0x4] sm:$0x1]
      %v250 = vunpack.c.l.bf16 %v249
      %v251 = vlaneseq
      %v252 = vshrl.u32 %v251, 7
      %v253 = vsub.s32 0, %v252
      %v254 = vrot.slane %v248, %v253
      %v255 = vmul.f32 %v254, %v241
      %v256 = vmul.f32 %v254, %v250
      %vm259 = vcmask 1046528
      %v260 = vrot.slane %v255, 1
      %v261 = vrot.slane %v256, 1
      %v262 = vsel %vm259, %v260, %v261
      %v264 = vadd.f32 %v247, %v262
      %v265 = vld [vmem:[%s220 + $0x2] sm:$0x1]
      %v266 = vld [vmem:[%s216] sm:$0xe]
      %v267 = vunpack.c.l.bf16 %v266
      %v268 = vlaneseq
      %v269 = vshrl.u32 %v268, 7
      %v270 = vsub.s32 0, %v269
      %v271 = vrot.slane %v265, %v270
      %v272 = vmul.f32 %v271, %v267
      %v273 = vmul.f32 %v271, %v250
      %vm276 = vcmask 1045504
      %v277 = vrot.slane %v272, 2
      %v278 = vrot.slane %v273, 2
      %v279 = vsel %vm276, %v277, %v278
      %v281 = vadd.f32 %v264, %v279
      %v282 = vld [vmem:[%s220 + $0x3] sm:$0x1]
      %v283 = vld [vmem:[%s216 + $0x4] sm:$0x3]
      %v284 = vunpack.c.l.bf16 %v283
      %v285 = vlaneseq
      %v286 = vshrl.u32 %v285, 7
      %v287 = vsub.s32 0, %v286
      %v288 = vrot.slane %v282, %v287
      %v289 = vmul.f32 %v288, %v267
      %v290 = vmul.f32 %v288, %v284
      %vm293 = vcmask 1044480
      %v294 = vrot.slane %v289, 3
      %v295 = vrot.slane %v290, 3
      %v296 = vsel %vm293, %v294, %v295
      %v298 = vadd.f32 %v281, %v296
      %v299 = vsub.f32 0.0, %v298
      %v300 = vmul.f32 %v299, 1.442695
      %v301 = vpow.pop %v300
      %v302 = vadd.f32 %v301, 1.0
      %v303 = vrcp.pop %v302
      %v304 = vmul.f32 1.0, %v303
      %v305 = vmul.f32 %v298, %v304
      %v306 = vpack.c.bf16 %v305, %v305
      %vm307 = vcmask 781312
      %308 = vst.msk [vmem:[%s230] sm:$0xf] %vm307, %v306
      %p309 = scmp.lt.s32.totalorder %s18, 1
      %s310 = scalar_select %p309, %s18, 1
      %p311 = scmp.lt.s32.totalorder %s19, 0
      %s312 = scalar_select %p311, %s19, 0
      %s313 = sadd.s32 %s312, %s310
      %s314 = smul.addr %s313, 4
      %s315 = scalar_lea.vmem %s3, %s314
      // Predicated region
      $region33: #{mamba_block_forward.11} parent=31 // pred_check
        %p316 = pneg %p126
      $region34: #{mamba_block_forward.11} parent=31 // pred_check_branch
        %318 = sbr.rel (%p316) target = $region36
      $region35: #{mamba_block_forward.11} parent=31 // pred_region
        _
      $region36: #{mamba_block_forward.11} parent=31 // pred_fallthru
        _
    $region32: #{mamba_block_forward.11} parent=5 // pred_fallthru
      _
    %p319 = scmp.le.s32.totalorder 2, %s9
    // Predicated region
    $region37: #{mamba_block_forward.11} parent=5 // pred_check
      %p320 = pneg %p319
    $region38: #{mamba_block_forward.11} parent=5 // pred_check_branch
      %322 = sbr.rel (%p320) target = $region40
    $region39: #{mamba_block_forward.11} parent=5 // pred_region
      %s323 = ssub.s32 %s9, 2
      // Predicated region
      $region41: #{mamba_block_forward.11} parent=39 // pred_check
        %p324 = pneg %p132
      $region42: #{mamba_block_forward.11} parent=39 // pred_check_branch
        %326 = sbr.rel (%p324) target = $region44
      $region43: #{mamba_block_forward.11} parent=39 // pred_region
        %p327 = scmp.lt.s32.totalorder %s20, 1
        %s328 = scalar_select %p327, %s20, 1
        %p329 = scmp.lt.s32.totalorder %s21, 0
        %s330 = scalar_select %p329, %s21, 0
        %s331 = sadd.s32 %s330, %s328
        %s332 = smul.addr %s331, 4
        %s333 = scalar_lea.vmem %s3, %s332
      $region44: #{mamba_block_forward.11} parent=39 // pred_fallthru
        _
    $region40: #{mamba_block_forward.11} parent=5 // pred_fallthru
      _
  $region6: #{mamba_block_forward.11} parent=0 // loop_footer
    %s13 = sadd.s32 1, %s9
  $region7: #{mamba_block_forward.11} parent=0 // loop_footer_branch
    %8 = sbr.rel target = $region3
  $region8: #{mamba_block_forward.11} parent=0 // loop_exit
    _

// kernel: mamba_block_forward.13
$region0: #{mamba_block_forward.13}
  #allocation0 [shape = 'u32[]', space=smem, size = 0x4, offset = 0x4, fixed_abs, tag = 'smem constant byte address 0x4 - core index']
  #allocation1 [shape = 'u32[144,128]{1,0:T(1,128)}', space=vmem, size = 0x12000, scoped, tag = 'internal scratch']
  %s0 = inlined_call_operand.vmem [shape: bf16[16,64], index: 0, kind: input, shape index: {}]
  %s1 = inlined_call_operand.vmem [shape: bf16[16,64], index: 1, kind: input, shape index: {}]
  %s2 = inlined_call_operand.vmem [shape: f32[1,64], index: 2, kind: input, shape index: {}]
  %s3 = inlined_call_operand.vmem [shape: bf16[16,64], index: 3, kind: output, shape index: {}]
  %s4 = sld [smem:[#allocation0]]
  $region22: #{mamba_block_forward.13} parent=0
    _
  %s6 = ssub.s32 1, %s4
  %s7 = scalar_select 0, %s6, %s4
  // Predicated region
  $region2: #{mamba_block_forward.13} parent=0 // pred_check
    _
  $region3: #{mamba_block_forward.13} parent=0 // pred_check_branch
    %9 = sbr.rel (0) target = $region5
  $region4: #{mamba_block_forward.13} parent=0 // pred_region
    _
  $region5: #{mamba_block_forward.13} parent=0 // pred_fallthru
    _
  // Predicated region
  $region6: #{mamba_block_forward.13} parent=0 // pred_check
    _
  $region7: #{mamba_block_forward.13} parent=0 // pred_check_branch
    %11 = sbr.rel (0) target = $region9
  $region8: #{mamba_block_forward.13} parent=0 // pred_region
    _
  $region9: #{mamba_block_forward.13} parent=0 // pred_fallthru
    _
  // Predicated region
  $region10: #{mamba_block_forward.13} parent=0 // pred_check
    _
  $region11: #{mamba_block_forward.13} parent=0 // pred_check_branch
    %13 = sbr.rel (0) target = $region13
  $region12: #{mamba_block_forward.13} parent=0 // pred_region
    _
  $region13: #{mamba_block_forward.13} parent=0 // pred_fallthru
    _
  %v14 = vld [vmem:[%s0] sm:$0xf]
  %v15 = vld [vmem:[%s0 + $0x4] sm:$0xf]
  %v16 = vunpack.c.l.bf16 %v14
  %v17 = vunpack.c.l.bf16 %v15
  %v18 = vld [vmem:[%s1] sm:$0xf]
  %v19 = vld [vmem:[%s1 + $0x4] sm:$0xf]
  %v20 = vunpack.c.l.bf16 %v18
  %v21 = vunpack.c.l.bf16 %v19
  %v22 = vsub.f32 0.0, %v20
  %v23 = vsub.f32 0.0, %v21
  %v24 = vmul.f32 %v22, 1.442695
  %v25 = vpow.pop %v24
  %v26 = vmul.f32 %v23, 1.442695
  %v27 = vpow.pop %v26
  %v28 = vadd.f32 %v25, 1.0
  %v29 = vadd.f32 %v27, 1.0
  %v30 = vrcp.pop %v28
  %v31 = vmul.f32 1.0, %v30
  %v32 = vrcp.pop %v29
  %v33 = vmul.f32 1.0, %v32
  %v34 = vmul.f32 %v20, %v31
  %v35 = vmul.f32 %v21, %v33
  %v36 = vmul.f32 %v16, %v34
  %v37 = vmul.f32 %v17, %v35
  %v38 = vmul.f32 %v36, %v36
  %v39 = vmul.f32 %v37, %v37
  %vm40 = vcmask 523264
  %v41 = vsel %vm40, %v38, 0.0
  %42 = vadd.xlane.f32.xlu0 %v41
  %v43 = vpop.xlane.xlu0 %42
  %v44 = vsel %vm40, %v39, 0.0
  %45 = vadd.xlane.f32.xlu0 %v44
  %v46 = vpop.xlane.xlu0 %45
  %v47 = vmul.f32 %v43, 0.015625
  %v48 = vmul.f32 %v46, 0.015625
  %v49 = vadd.f32 %v47, 1e-05
  %v50 = vadd.f32 %v48, 1e-05
  %v51 = vrsqrt.pop %v49
  %v52 = vrsqrt.pop %v50
  %v53 = vmul.f32 %v36, %v51
  %v54 = vmul.f32 %v37, %v52
  %v55 = vld [vmem:[%s2] sm:$0x1]
  %v57 = vlaneseq
  %v58 = vshrl.u32 %v57, 7
  %v59 = vsub.s32 0, %v58
  %v60 = vrot.slane %v55, %v59
  %v62 = vmul.f32 %v53, %v60
  %v63 = vmul.f32 %v54, %v60
  %v64 = vpack.c.bf16 %v63, %v62
  %v66 = vunpack.c.l.b16 %v64
  %v67 = vunpack.c.h.b16 %v64
  %v68 = vpack.c.b16 %v66, %v66
  %v69 = vpack.c.b16 %v67, %v67
  %vm72 = vcmask 519168
  %73 = vst.msk [vmem:[%s3] sm:$0xf] %vm72, %v68
  %74 = vst.msk [vmem:[%s3 + $0x4] sm:$0xf] %vm72, %v69
  // Predicated region
  $region14: #{mamba_block_forward.13} parent=0 // pred_check
    _
  $region15: #{mamba_block_forward.13} parent=0 // pred_check_branch
    %76 = sbr.rel (0) target = $region17
  $region16: #{mamba_block_forward.13} parent=0 // pred_region
    _
  $region17: #{mamba_block_forward.13} parent=0 // pred_fallthru
    _
  // Predicated region
  $region18: #{mamba_block_forward.13} parent=0 // pred_check
    _
  $region19: #{mamba_block_forward.13} parent=0 // pred_check_branch
    %78 = sbr.rel (0) target = $region21
  $region20: #{mamba_block_forward.13} parent=0 // pred_region
    _
  $region21: #{mamba_block_forward.13} parent=0 // pred_fallthru
    _

// kernel: mamba_block_forward.14
$region0: #{mamba_block_forward.14}
  #allocation0 [shape = 'u32[]', space=smem, size = 0x4, offset = 0x4, fixed_abs, tag = 'smem constant byte address 0x4 - core index']
  #allocation1 [shape = 'u32[144,128]{1,0:T(1,128)}', space=vmem, size = 0x12000, scoped, tag = 'internal scratch']
  #allocation2 [shape = 'f32[16,32]{1,0:T(8,128)}', space=vmem, size = 0x2000, scoped, tag = 'scratch operand']
  %s0 = inlined_call_operand.vmem [shape: bf16[16,64], index: 0, kind: input, shape index: {}]
  %s1 = inlined_call_operand.vmem [shape: bf16[64,32], index: 1, kind: input, shape index: {}]
  %s2 = inlined_call_operand.vmem [shape: f32[16,32], index: 2, kind: output, shape index: {}]
  %s3 = sld [smem:[#allocation0]]
  $region26: #{mamba_block_forward.14} parent=0
    _
  %s5 = ssub.s32 1, %s3
  %s6 = scalar_select 0, %s5, %s3
  // Predicated region
  $region2: #{mamba_block_forward.14} parent=0 // pred_check
    _
  $region3: #{mamba_block_forward.14} parent=0 // pred_check_branch
    %8 = sbr.rel (0) target = $region5
  $region4: #{mamba_block_forward.14} parent=0 // pred_region
    _
  $region5: #{mamba_block_forward.14} parent=0 // pred_fallthru
    _
  // Predicated region
  $region6: #{mamba_block_forward.14} parent=0 // pred_check
    _
  $region7: #{mamba_block_forward.14} parent=0 // pred_check_branch
    %10 = sbr.rel (0) target = $region9
  $region8: #{mamba_block_forward.14} parent=0 // pred_region
    _
  $region9: #{mamba_block_forward.14} parent=0 // pred_fallthru
    _
  %p12 = scmp.eq.s32.totalorder 0, 0
  // Predicated region
  $region10: #{mamba_block_forward.14} parent=0 // pred_check
    %p13 = pneg %p12
  $region11: #{mamba_block_forward.14} parent=0 // pred_check_branch
    %15 = sbr.rel (%p13) target = $region13
  $region12: #{mamba_block_forward.14} parent=0 // pred_region
    %vm16 = vcmask 261120
    %17 = vst.msk [vmem:[#allocation2] sm:$0xff] %vm16, 0.0
    %18 = vst.msk [vmem:[#allocation2 + $0x8] sm:$0xff] %vm16, 0.0
  $region13: #{mamba_block_forward.14} parent=0 // pred_fallthru
    _
  %v19 = vld [vmem:[#allocation2] sm:$0xff]
  %v20 = vld [vmem:[#allocation2 + $0x8] sm:$0xff]
  %v21 = vld [vmem:[%s0] sm:$0xf]
  %v22 = vld [vmem:[%s0 + $0x4] sm:$0xf]
  %v23 = vld [vmem:[%s1] sm:$0xf]
  %v24 = vld [vmem:[%s1 + $0x4] sm:$0xf]
  %v25 = vld [vmem:[%s1 + $0x8] sm:$0xf]
  %v26 = vld [vmem:[%s1 + $0xc] sm:$0xf]
  %v27 = vld [vmem:[%s1 + $0x10] sm:$0xf]
  %v28 = vld [vmem:[%s1 + $0x14] sm:$0xf]
  %v29 = vld [vmem:[%s1 + $0x18] sm:$0xf]
  %v30 = vld [vmem:[%s1 + $0x1c] sm:$0xf]
  %v33 = vunpack.c.l.b16 %v21
  %v34 = vunpack.c.l.b16 %v22
  %v35 = vpack.c.b16 %v34, %v33
  %v44 = vunpack.c.l.b16 %v23
  %v45 = vunpack.c.l.b16 %v24
  %v46 = vunpack.c.l.b16 %v25
  %v47 = vunpack.c.l.b16 %v26
  %v48 = vunpack.c.l.b16 %v27
  %v49 = vunpack.c.l.b16 %v28
  %v50 = vunpack.c.l.b16 %v29
  %v51 = vunpack.c.l.b16 %v30
  %v52 = vpack.c.b16 %v45, %v44
  %v53 = vpack.c.b16 %v47, %v46
  %v54 = vpack.c.b16 %v49, %v48
  %v55 = vpack.c.b16 %v51, %v50
  %vm60 = vcmask 523264
  %v62 = vsel %vm60, %v35, 0
  %64 = vmatprep.subr.bf16.mxu0 0
  %65 = vmatpush1.bf16.msra.mxu0 %v52
  %66 = vmatprep.subr.bf16.mxu0 0
  %67 = vmatpush1.bf16.msra.mxu0 %v53
  %68 = vmatprep.subr.bf16.mxu0 0
  %69 = vmatpush1.bf16.msra.mxu0 %v54
  %70 = vmatprep.subr.bf16.mxu0 0
  %71 = vmatpush1.bf16.msra.mxu0 %v55
  %72 = vmatprep.subr.bf16.mxu0 0
  %73 = vmatpush1.bf16.msra.mxu0 0
  %74 = vmatprep.subr.bf16.mxu0 0
  %75 = vmatpush1.bf16.msra.mxu0 0
  %76 = vmatprep.subr.bf16.mxu0 0
  %77 = vmatpush1.bf16.msra.mxu0 0
  %78 = vmatprep.subr.bf16.mxu0 0
  %79 = vmatpush1.bf16.msra.mxu0 0
  %80 = vmatprep.subr.bf16.mxu0 0
  %81 = vmatpush1.bf16.msra.mxu0 0
  %82 = vmatprep.subr.bf16.mxu0 0
  %83 = vmatpush1.bf16.msra.mxu0 0
  %84 = vmatprep.subr.bf16.mxu0 0
  %85 = vmatpush1.bf16.msra.mxu0 0
  %86 = vmatprep.subr.bf16.mxu0 0
  %87 = vmatpush1.bf16.msra.mxu0 0
  %88 = vmatprep.subr.bf16.mxu0 0
  %89 = vmatpush1.bf16.msra.mxu0 0
  %90 = vmatprep.subr.bf16.mxu0 0
  %91 = vmatpush1.bf16.msra.mxu0 0
  %92 = vmatprep.subr.bf16.mxu0 0
  %93 = vmatpush1.bf16.msra.mxu0 0
  %94 = vmatprep.subr.bf16.mxu0 0
  %95 = vmatpush1.bf16.msra.mxu0 0
  %96 = vmatprep.mubr.bf16.mxu0 0
  %97 = vmatmul.mubr.bf16.gmra.mrb[0].mxu0 %v62
  %v98 = vpop.f32.mrb[0].mxu0
  %v99 = vadd.f32 0.0, %v98
  %v100 = vpop.f32.mrb[0].mxu0
  %v101 = vpop.f32.mrb[0].mxu0
  %v102 = vadd.f32 0.0, %v101
  %v103 = vpop.f32.mrb[0].mxu0
  %104 = vdwg.mxu0
  %v105 = vadd.f32 %v19, %v99
  %v106 = vadd.f32 %v20, %v102
  %vm107 = vcmask 261120
  %108 = vst.msk [vmem:[#allocation2] sm:$0xff] %vm107, %v105
  %109 = vst.msk [vmem:[#allocation2 + $0x8] sm:$0xff] %vm107, %v106
  // Predicated region
  $region14: #{mamba_block_forward.14} parent=0 // pred_check
    %p110 = pneg %p12
  $region15: #{mamba_block_forward.14} parent=0 // pred_check_branch
    %112 = sbr.rel (%p110) target = $region17
  $region16: #{mamba_block_forward.14} parent=0 // pred_region
    %v113 = vld [vmem:[#allocation2] sm:$0xff]
    %v114 = vld [vmem:[#allocation2 + $0x8] sm:$0xff]
    %115 = vst.msk [vmem:[%s2] sm:$0xff] %vm107, %v113
    %116 = vst.msk [vmem:[%s2 + $0x8] sm:$0xff] %vm107, %v114
  $region17: #{mamba_block_forward.14} parent=0 // pred_fallthru
    _
  // Predicated region
  $region18: #{mamba_block_forward.14} parent=0 // pred_check
    _
  $region19: #{mamba_block_forward.14} parent=0 // pred_check_branch
    %118 = sbr.rel (0) target = $region21
  $region20: #{mamba_block_forward.14} parent=0 // pred_region
    _
  $region21: #{mamba_block_forward.14} parent=0 // pred_fallthru
    _
  // Predicated region
  $region22: #{mamba_block_forward.14} parent=0 // pred_check
    _
  $region23: #{mamba_block_forward.14} parent=0 // pred_check_branch
    %120 = sbr.rel (0) target = $region25
  $region24: #{mamba_block_forward.14} parent=0 // pred_region
    _
  $region25: #{mamba_block_forward.14} parent=0 // pred_fallthru
    _

// kernel: mamba_block_forward.12
$region0: #{mamba_block_forward.12}
  #allocation0 [shape = 'u32[]', space=smem, size = 0x4, offset = 0x4, fixed_abs, tag = 'smem constant byte address 0x4 - core index']
  #allocation1 [shape = 'u32[144,128]{1,0:T(1,128)}', space=vmem, size = 0x12000, scoped, tag = 'internal scratch']
  #allocation2 [shape = 'f32[1,16,64]{2,1,0:T(8,128)}', space=vmem, size = 0x2000, scoped, tag = 'scratch operand']
  #allocation3 [shape = 'f32[1,1,1]{2,1,0:T(1,128)S(1)}', space=vmem, size = 0x200, scoped, tag = 'scoped memory for mamba_block_forward.12']
  #allocation4 [shape = 'f32[1,1,1]{2,1,0:T(1,128)S(1)}', space=vmem, size = 0x200, scoped, tag = 'scoped memory for mamba_block_forward.12']
  #allocation5 [shape = 'f32[1,1,1]{2,1,0:T(1,128)S(1)}', space=vmem, size = 0x200, scoped, tag = 'scoped memory for mamba_block_forward.12']
  %s0 = inlined_call_operand.vmem [shape: bf16[2,8,64], index: 0, kind: input, shape index: {}]
  %s1 = inlined_call_operand.vmem [shape: bf16[1,2,8,1], index: 1, kind: input, shape index: {}]
  %s2 = inlined_call_operand.vmem [shape: bf16[2,8,16], index: 2, kind: input, shape index: {}]
  %s3 = inlined_call_operand.vmem [shape: bf16[2,8,16], index: 3, kind: input, shape index: {}]
  %s4 = inlined_call_operand.<no memory space> [shape: f32[1,1,1], index: 4, kind: input, shape index: {}]
  %s5 = inlined_call_operand.<no memory space> [shape: f32[1,1,1], index: 5, kind: input, shape index: {}]
  %s6 = inlined_call_operand.<no memory space> [shape: f32[1,1,1], index: 6, kind: input, shape index: {}]
  %s7 = inlined_call_operand.vmem [shape: bf16[2,8,64], index: 7, kind: output, shape index: {}]
  %s8 = sld [smem:[#allocation0]]
  $region65: #{mamba_block_forward.12} parent=0
    _
  %s10 = ssub.s32 1, %s8
  %s11 = scalar_select 0, %s10, %s8
  %v12 = vstv %s4
  %13 = vst [vmem:[#allocation3] sm:$0x1] %v12
  %v14 = vstv %s5
  %15 = vst [vmem:[#allocation4] sm:$0x1] %v14
  %v16 = vstv %s6
  %17 = vst [vmem:[#allocation5] sm:$0x1] %v16
  loop: start=0, step=1, limit=4
  $region2: #{mamba_block_forward.12} parent=0 // loop_pre_header
    _
  $region3: #{mamba_block_forward.12} parent=0 // loop_header
    %s19 = sphi 0, %s23
    %p20 = scmp.ge.s32.totalorder %s19, 4
    %s26 = sphi 0, %s45
    %s27 = sphi 0, %s41
    %s28 = sphi 0, %s37
    %s29 = sphi 0, %s26
    %s30 = sphi 0, %s27
    %s31 = sphi 0, %s28
    %s32 = sphi 0, %s29
    %s33 = sphi 0, %s30
    %s34 = sphi 0, %s31
    %s52 = sphi 0, %s54
    %s55 = sphi 0, %s52
    %s56 = sphi 0, %s55
    %s72 = sphi 0, %s56
    %s82 = sphi 0, %s84
    %s85 = sphi 0, %s82
    %s86 = sphi 0, %s85
    %s102 = sphi 0, %s86
    %s110 = sphi 0, %s112
    %s113 = sphi 0, %s110
    %s114 = sphi 0, %s113
    %s130 = sphi 0, %s114
    %s138 = sphi 0, %s140
    %s141 = sphi 0, %s138
    %s142 = sphi 0, %s141
    %s158 = sphi 0, %s142
    %s164 = sphi 0, %s166
    %s167 = sphi 0, %s164
    %s168 = sphi 0, %s167
    %s184 = sphi 0, %s168
    %s190 = sphi 0, %s192
    %s193 = sphi 0, %s190
    %s194 = sphi 0, %s193
    %s210 = sphi 0, %s194
    %s216 = sphi 0, %s218
    %s219 = sphi 0, %s216
    %s220 = sphi 0, %s219
    %s236 = sphi 0, %s220
    %s246 = sphi 0, %s248
    %s249 = sphi 0, %s246
    %s250 = sphi 0, %s249
    %s266 = sphi 0, %s250
  $region4: #{mamba_block_forward.12} parent=0 // loop_header_branch
    %22 = sbr.rel (%p20) target = $region8
  $region5: #{mamba_block_forward.12} parent=0 // loop_body
    %s24 = ssub.s32 %s19, 1
    %s25 = ssub.s32 %s19, 2
    %s35 = sadd.s32 1, %s28
    %p36 = scmp.ge.s32.totalorder %s35, 1
    %s37 = scalar_select %p36, 0, %s35
    %s38 = sadd.s32 1, %s27
    %s39 = scalar_select %p36, %s38, %s27
    %p40 = scmp.ge.s32.totalorder %s39, 2
    %s41 = scalar_select %p40, 0, %s39
    %s42 = sadd.s32 1, %s26
    %s43 = scalar_select %p40, %s42, %s26
    %p44 = scmp.ge.s32.totalorder %s43, 1
    %s45 = scalar_select %p44, 0, %s43
    %s46 = ssub.s32 %s27, %s41
    %s47 = ssub.s32 %s28, %s37
    %s48 = sor.u32 %s46, %s47
    %s49 = ssub.s32 %s26, %s45
    %s50 = sor.u32 %s48, %s49
    %p51 = scmp.eq.s32.totalorder %s50, 0
    %s53 = sadd.s32 %s52, 1
    %s54 = scalar_select %p51, %s52, %s53
    %p57 = pneg %p51
    %p58 = scmp.eq.s32.totalorder %s19, 1
    %p59 = por %p57, %p58
    %p60 = scmp.ne.s32.totalorder %s52, %s55
    %p61 = scmp.eq.s32.totalorder %s19, 0
    %p62 = por %p60, %p61
    %p63 = scmp.ne.s32.totalorder %s52, %s55
    %p64 = scmp.eq.s32.totalorder %s24, 1
    %p65 = por %p63, %p64
    %p66 = scmp.ne.s32.totalorder %s55, %s56
    %p67 = scmp.eq.s32.totalorder %s24, 0
    %p68 = por %p66, %p67
    %p69 = scmp.ne.s32.totalorder %s55, %s56
    %p70 = scmp.eq.s32.totalorder %s25, 1
    %p71 = por %p69, %p70
    %p73 = scmp.ne.s32.totalorder %s56, %s72
    %p74 = scmp.eq.s32.totalorder %s25, 0
    %p75 = por %p73, %p74
    %s76 = ssub.s32 %s26, %s45
    %s77 = ssub.s32 %s27, %s41
    %s78 = sor.u32 %s76, %s77
    %s79 = ssub.s32 %s28, %s37
    %s80 = sor.u32 %s78, %s79
    %p81 = scmp.eq.s32.totalorder %s80, 0
    %s83 = sadd.s32 %s82, 1
    %s84 = scalar_select %p81, %s82, %s83
    %p87 = pneg %p81
    %p88 = scmp.eq.s32.totalorder %s19, 1
    %p89 = por %p87, %p88
    %p90 = scmp.ne.s32.totalorder %s82, %s85
    %p91 = scmp.eq.s32.totalorder %s19, 0
    %p92 = por %p90, %p91
    %p93 = scmp.ne.s32.totalorder %s82, %s85
    %p94 = scmp.eq.s32.totalorder %s24, 1
    %p95 = por %p93, %p94
    %p96 = scmp.ne.s32.totalorder %s85, %s86
    %p97 = scmp.eq.s32.totalorder %s24, 0
    %p98 = por %p96, %p97
    %p99 = scmp.ne.s32.totalorder %s85, %s86
    %p100 = scmp.eq.s32.totalorder %s25, 1
    %p101 = por %p99, %p100
    %p103 = scmp.ne.s32.totalorder %s86, %s102
    %p104 = scmp.eq.s32.totalorder %s25, 0
    %p105 = por %p103, %p104
    %s106 = ssub.s32 %s27, %s41
    %s107 = ssub.s32 %s28, %s37
    %s108 = sor.u32 %s106, %s107
    %p109 = scmp.eq.s32.totalorder %s108, 0
    %s111 = sadd.s32 %s110, 1
    %s112 = scalar_select %p109, %s110, %s111
    %p115 = pneg %p109
    %p116 = scmp.eq.s32.totalorder %s19, 1
    %p117 = por %p115, %p116
    %p118 = scmp.ne.s32.totalorder %s110, %s113
    %p119 = scmp.eq.s32.totalorder %s19, 0
    %p120 = por %p118, %p119
    %p121 = scmp.ne.s32.totalorder %s110, %s113
    %p122 = scmp.eq.s32.totalorder %s24, 1
    %p123 = por %p121, %p122
    %p124 = scmp.ne.s32.totalorder %s113, %s114
    %p125 = scmp.eq.s32.totalorder %s24, 0
    %p126 = por %p124, %p125
    %p127 = scmp.ne.s32.totalorder %s113, %s114
    %p128 = scmp.eq.s32.totalorder %s25, 1
    %p129 = por %p127, %p128
    %p131 = scmp.ne.s32.totalorder %s114, %s130
    %p132 = scmp.eq.s32.totalorder %s25, 0
    %p133 = por %p131, %p132
    %s134 = ssub.s32 %s27, %s41
    %s135 = ssub.s32 %s28, %s37
    %s136 = sor.u32 %s134, %s135
    %p137 = scmp.eq.s32.totalorder %s136, 0
    %s139 = sadd.s32 %s138, 1
    %s140 = scalar_select %p137, %s138, %s139
    %p143 = pneg %p137
    %p144 = scmp.eq.s32.totalorder %s19, 1
    %p145 = por %p143, %p144
    %p146 = scmp.ne.s32.totalorder %s138, %s141
    %p147 = scmp.eq.s32.totalorder %s19, 0
    %p148 = por %p146, %p147
    %p149 = scmp.ne.s32.totalorder %s138, %s141
    %p150 = scmp.eq.s32.totalorder %s24, 1
    %p151 = por %p149, %p150
    %p152 = scmp.ne.s32.totalorder %s141, %s142
    %p153 = scmp.eq.s32.totalorder %s24, 0
    %p154 = por %p152, %p153
    %p155 = scmp.ne.s32.totalorder %s141, %s142
    %p156 = scmp.eq.s32.totalorder %s25, 1
    %p157 = por %p155, %p156
    %p159 = scmp.ne.s32.totalorder %s142, %s158
    %p160 = scmp.eq.s32.totalorder %s25, 0
    %p161 = por %p159, %p160
    %s162 = ssub.s32 %s26, %s45
    %p163 = scmp.eq.s32.totalorder %s162, 0
    %s165 = sadd.s32 %s164, 1
    %s166 = scalar_select %p163, %s164, %s165
    %p169 = pneg %p163
    %p170 = scmp.eq.s32.totalorder %s19, 1
    %p171 = por %p169, %p170
    %p172 = scmp.ne.s32.totalorder %s164, %s167
    %p173 = scmp.eq.s32.totalorder %s19, 0
    %p174 = por %p172, %p173
    %p175 = scmp.ne.s32.totalorder %s164, %s167
    %p176 = scmp.eq.s32.totalorder %s24, 1
    %p177 = por %p175, %p176
    %p178 = scmp.ne.s32.totalorder %s167, %s168
    %p179 = scmp.eq.s32.totalorder %s24, 0
    %p180 = por %p178, %p179
    %p181 = scmp.ne.s32.totalorder %s167, %s168
    %p182 = scmp.eq.s32.totalorder %s25, 1
    %p183 = por %p181, %p182
    %p185 = scmp.ne.s32.totalorder %s168, %s184
    %p186 = scmp.eq.s32.totalorder %s25, 0
    %p187 = por %p185, %p186
    %s188 = ssub.s32 %s26, %s45
    %p189 = scmp.eq.s32.totalorder %s188, 0
    %s191 = sadd.s32 %s190, 1
    %s192 = scalar_select %p189, %s190, %s191
    %p195 = pneg %p189
    %p196 = scmp.eq.s32.totalorder %s19, 1
    %p197 = por %p195, %p196
    %p198 = scmp.ne.s32.totalorder %s190, %s193
    %p199 = scmp.eq.s32.totalorder %s19, 0
    %p200 = por %p198, %p199
    %p201 = scmp.ne.s32.totalorder %s190, %s193
    %p202 = scmp.eq.s32.totalorder %s24, 1
    %p203 = por %p201, %p202
    %p204 = scmp.ne.s32.totalorder %s193, %s194
    %p205 = scmp.eq.s32.totalorder %s24, 0
    %p206 = por %p204, %p205
    %p207 = scmp.ne.s32.totalorder %s193, %s194
    %p208 = scmp.eq.s32.totalorder %s25, 1
    %p209 = por %p207, %p208
    %p211 = scmp.ne.s32.totalorder %s194, %s210
    %p212 = scmp.eq.s32.totalorder %s25, 0
    %p213 = por %p211, %p212
    %s214 = ssub.s32 %s26, %s45
    %p215 = scmp.eq.s32.totalorder %s214, 0
    %s217 = sadd.s32 %s216, 1
    %s218 = scalar_select %p215, %s216, %s217
    %p221 = pneg %p215
    %p222 = scmp.eq.s32.totalorder %s19, 1
    %p223 = por %p221, %p222
    %p224 = scmp.ne.s32.totalorder %s216, %s219
    %p225 = scmp.eq.s32.totalorder %s19, 0
    %p226 = por %p224, %p225
    %p227 = scmp.ne.s32.totalorder %s216, %s219
    %p228 = scmp.eq.s32.totalorder %s24, 1
    %p229 = por %p227, %p228
    %p230 = scmp.ne.s32.totalorder %s219, %s220
    %p231 = scmp.eq.s32.totalorder %s24, 0
    %p232 = por %p230, %p231
    %p233 = scmp.ne.s32.totalorder %s219, %s220
    %p234 = scmp.eq.s32.totalorder %s25, 1
    %p235 = por %p233, %p234
    %p237 = scmp.ne.s32.totalorder %s220, %s236
    %p238 = scmp.eq.s32.totalorder %s25, 0
    %p239 = por %p237, %p238
    %s240 = ssub.s32 %s27, %s41
    %s241 = ssub.s32 %s28, %s37
    %s242 = sor.u32 %s240, %s241
    %s243 = ssub.s32 %s26, %s45
    %s244 = sor.u32 %s242, %s243
    %p245 = scmp.eq.s32.totalorder %s244, 0
    %s247 = sadd.s32 %s246, 1
    %s248 = scalar_select %p245, %s246, %s247
    %p251 = pneg %p245
    %p252 = scmp.eq.s32.totalorder %s19, 1
    %p253 = por %p251, %p252
    %p254 = scmp.ne.s32.totalorder %s246, %s249
    %p255 = scmp.eq.s32.totalorder %s19, 0
    %p256 = por %p254, %p255
    %p257 = scmp.ne.s32.totalorder %s246, %s249
    %p258 = scmp.eq.s32.totalorder %s24, 1
    %p259 = por %p257, %p258
    %p260 = scmp.ne.s32.totalorder %s249, %s250
    %p261 = scmp.eq.s32.totalorder %s24, 0
    %p262 = por %p260, %p261
    %p263 = scmp.ne.s32.totalorder %s249, %s250
    %p264 = scmp.eq.s32.totalorder %s25, 1
    %p265 = por %p263, %p264
    %p267 = scmp.ne.s32.totalorder %s250, %s266
    %p268 = scmp.eq.s32.totalorder %s25, 0
    %p269 = por %p267, %p268
    %p270 = scmp.le.s32.totalorder 1, %s19
    %p271 = scmp.lt.s32.totalorder %s19, 3
    %p272 = pnand %p270, %p271
    %p273 = pneg %p272
    // Predicated region
    $region9: #{mamba_block_forward.12} parent=5 // pred_check
      _
    $region10: #{mamba_block_forward.12} parent=5 // pred_check_branch
      %275 = sbr.rel (%p272) target = $region12
    $region11: #{mamba_block_forward.12} parent=5 // pred_region
      %s276 = ssub.s32 %s19, 1
      // Predicated region
      $region13: #{mamba_block_forward.12} parent=11 // pred_check
        %p277 = pneg %p180
      $region14: #{mamba_block_forward.12} parent=11 // pred_check_branch
        %279 = sbr.rel (%p277) target = $region16
      $region15: #{mamba_block_forward.12} parent=11 // pred_region
        %p280 = scmp.lt.s32.totalorder %s29, 0
        %s281 = scalar_select %p280, %s29, 0
        %s282 = scalar_lea.vmem [#allocation3], %s281
      $region16: #{mamba_block_forward.12} parent=11 // pred_fallthru
        _
      // Predicated region
      $region17: #{mamba_block_forward.12} parent=11 // pred_check
        %p283 = pneg %p206
      $region18: #{mamba_block_forward.12} parent=11 // pred_check_branch
        %285 = sbr.rel (%p283) target = $region20
      $region19: #{mamba_block_forward.12} parent=11 // pred_region
        %p286 = scmp.lt.s32.totalorder %s29, 0
        %s287 = scalar_select %p286, %s29, 0
        %s288 = scalar_lea.vmem [#allocation4], %s287
      $region20: #{mamba_block_forward.12} parent=11 // pred_fallthru
        _
      // Predicated region
      $region21: #{mamba_block_forward.12} parent=11 // pred_check
        %p289 = pneg %p232
      $region22: #{mamba_block_forward.12} parent=11 // pred_check_branch
        %291 = sbr.rel (%p289) target = $region24
      $region23: #{mamba_block_forward.12} parent=11 // pred_region
        %p292 = scmp.lt.s32.totalorder %s29, 0
        %s293 = scalar_select %p292, %s29, 0
        %s294 = scalar_lea.vmem [#allocation5], %s293
      $region24: #{mamba_block_forward.12} parent=11 // pred_fallthru
        _
    $region12: #{mamba_block_forward.12} parent=5 // pred_fallthru
      _
    %p295 = scmp.lt.s32.totalorder %s19, 2
    // Predicated region
    $region25: #{mamba_block_forward.12} parent=5 // pred_check
      %p296 = pneg %p295
    $region26: #{mamba_block_forward.12} parent=5 // pred_check_branch
      %298 = sbr.rel (%p296) target = $region28
    $region27: #{mamba_block_forward.12} parent=5 // pred_region
      // Predicated region
      $region29: #{mamba_block_forward.12} parent=27 // pred_check
        %p299 = pneg %p62
      $region30: #{mamba_block_forward.12} parent=27 // pred_check_branch
        %301 = sbr.rel (%p299) target = $region32
      $region31: #{mamba_block_forward.12} parent=27 // pred_region
        %p302 = scmp.lt.s32.totalorder %s27, 1
        %s303 = scalar_select %p302, %s27, 1
        %p304 = scmp.lt.s32.totalorder %s28, 0
        %s305 = scalar_select %p304, %s28, 0
        %p306 = scmp.lt.s32.totalorder %s26, 0
        %s307 = scalar_select %p306, %s26, 0
        %s308 = sadd.s32 %s307, %s305
        %s309 = sadd.s32 %s308, %s303
        %s310 = smul.addr %s309, 4
        %s311 = scalar_lea.vmem %s0, %s310
      $region32: #{mamba_block_forward.12} parent=27 // pred_fallthru
        _
      // Predicated region
      $region33: #{mamba_block_forward.12} parent=27 // pred_check
        %p312 = pneg %p92
      $region34: #{mamba_block_forward.12} parent=27 // pred_check_branch
        %314 = sbr.rel (%p312) target = $region36
      $region35: #{mamba_block_forward.12} parent=27 // pred_region
        %p315 = scmp.lt.s32.totalorder %s26, 0
        %s316 = scalar_select %p315, %s26, 0
        %p317 = scmp.lt.s32.totalorder %s27, 1
        %s318 = scalar_select %p317, %s27, 1
        %p319 = scmp.lt.s32.totalorder %s28, 0
        %s320 = scalar_select %p319, %s28, 0
        %s321 = sadd.s32 %s320, %s318
        %s322 = smul.addr %s316, 2
        %s323 = sadd.s32 %s321, %s322
        %s324 = smul.addr %s323, 4
        %s325 = scalar_lea.vmem %s1, %s324
      $region36: #{mamba_block_forward.12} parent=27 // pred_fallthru
        _
      // Predicated region
      $region37: #{mamba_block_forward.12} parent=27 // pred_check
        %p326 = pneg %p120
      $region38: #{mamba_block_forward.12} parent=27 // pred_check_branch
        %328 = sbr.rel (%p326) target = $region40
      $region39: #{mamba_block_forward.12} parent=27 // pred_region
        %p329 = scmp.lt.s32.totalorder %s27, 1
        %s330 = scalar_select %p329, %s27, 1
        %p331 = scmp.lt.s32.totalorder %s28, 0
        %s332 = scalar_select %p331, %s28, 0
        %s333 = sadd.s32 %s332, %s330
        %s334 = smul.addr %s333, 4
        %s335 = scalar_lea.vmem %s2, %s334
      $region40: #{mamba_block_forward.12} parent=27 // pred_fallthru
        _
      // Predicated region
      $region41: #{mamba_block_forward.12} parent=27 // pred_check
        %p336 = pneg %p148
      $region42: #{mamba_block_forward.12} parent=27 // pred_check_branch
        %338 = sbr.rel (%p336) target = $region44
      $region43: #{mamba_block_forward.12} parent=27 // pred_region
        %p339 = scmp.lt.s32.totalorder %s27, 1
        %s340 = scalar_select %p339, %s27, 1
        %p341 = scmp.lt.s32.totalorder %s28, 0
        %s342 = scalar_select %p341, %s28, 0
        %s343 = sadd.s32 %s342, %s340
        %s344 = smul.addr %s343, 4
        %s345 = scalar_lea.vmem %s3, %s344
      $region44: #{mamba_block_forward.12} parent=27 // pred_fallthru
        _
    $region28: #{mamba_block_forward.12} parent=5 // pred_fallthru
      _
    %p346 = scmp.le.s32.totalorder 1, %s19
    %p347 = scmp.lt.s32.totalorder %s19, 3
    %p348 = pnand %p346, %p347
    %p349 = pneg %p348
    // Predicated region
    $region45: #{mamba_block_forward.12} parent=5 // pred_check
      _
    $region46: #{mamba_block_forward.12} parent=5 // pred_check_branch
      %351 = sbr.rel (%p348) target = $region48
    $region47: #{mamba_block_forward.12} parent=5 // pred_region
      %s352 = ssub.s32 %s19, 1
      %p353 = scmp.lt.s32.totalorder %s30, 1
      %s354 = scalar_select %p353, %s30, 1
      %p355 = scmp.lt.s32.totalorder %s31, 0
      %s356 = scalar_select %p355, %s31, 0
      %p357 = scmp.lt.s32.totalorder %s29, 0
      %s358 = scalar_select %p357, %s29, 0
      %s359 = sadd.s32 %s358, %s356
      %s360 = sadd.s32 %s359, %s354
      %s361 = smul.addr %s360, 4
      %s362 = scalar_lea.vmem %s0, %s361
      %p363 = pneg %p68
      %p364 = pneg %p65
      %p365 = scmp.lt.s32.totalorder %s29, 0
      %s366 = scalar_select %p365, %s29, 0
      %p367 = scmp.lt.s32.totalorder %s30, 1
      %s368 = scalar_select %p367, %s30, 1
      %p369 = scmp.lt.s32.totalorder %s31, 0
      %s370 = scalar_select %p369, %s31, 0
      %s371 = sadd.s32 %s370, %s368
      %s372 = smul.addr %s366, 2
      %s373 = sadd.s32 %s371, %s372
      %s374 = smul.addr %s373, 4
      %s375 = scalar_lea.vmem %s1, %s374
      %p376 = pneg %p98
      %p377 = pneg %p95
      %p378 = scmp.lt.s32.totalorder %s30, 1
      %s379 = scalar_select %p378, %s30, 1
      %p380 = scmp.lt.s32.totalorder %s31, 0
      %s381 = scalar_select %p380, %s31, 0
      %s382 = sadd.s32 %s381, %s379
      %s383 = smul.addr %s382, 4
      %s384 = scalar_lea.vmem %s2, %s383
      %p385 = pneg %p126
      %p386 = pneg %p123
      %p387 = scmp.lt.s32.totalorder %s30, 1
      %s388 = scalar_select %p387, %s30, 1
      %p389 = scmp.lt.s32.totalorder %s31, 0
      %s390 = scalar_select %p389, %s31, 0
      %s391 = sadd.s32 %s390, %s388
      %s392 = smul.addr %s391, 4
      %s393 = scalar_lea.vmem %s3, %s392
      %p394 = pneg %p154
      %p395 = pneg %p151
      %p396 = scmp.lt.s32.totalorder %s29, 0
      %s397 = scalar_select %p396, %s29, 0
      %s398 = scalar_lea.vmem [#allocation3], %s397
      %p399 = pneg %p180
      %p400 = pneg %p177
      %p401 = scmp.lt.s32.totalorder %s29, 0
      %s402 = scalar_select %p401, %s29, 0
      %s403 = scalar_lea.vmem [#allocation4], %s402
      %p404 = pneg %p206
      %p405 = pneg %p203
      %p406 = scmp.lt.s32.totalorder %s29, 0
      %s407 = scalar_select %p406, %s29, 0
      %s408 = scalar_lea.vmem [#allocation5], %s407
      %p409 = pneg %p232
      %p410 = pneg %p229
      %p411 = pneg %p262
      %p412 = pneg %p259
      %p413 = scmp.lt.s32.totalorder %s30, 1
      %s414 = scalar_select %p413, %s30, 1
      %p415 = scmp.lt.s32.totalorder %s31, 0
      %s416 = scalar_select %p415, %s31, 0
      %p417 = scmp.lt.s32.totalorder %s29, 0
      %s418 = scalar_select %p417, %s29, 0
      %s419 = sadd.s32 %s418, %s416
      %s420 = sadd.s32 %s419, %s414
      %s421 = smul.addr %s420, 4
      %s422 = scalar_lea.vmem %s7, %s421
      %p423 = scmp.lt.s32.totalorder %s30, 1
      %s424 = scalar_select %p423, %s30, 1
      %p425 = scmp.lt.s32.totalorder %s31, 0
      %s426 = scalar_select %p425, %s31, 0
      %p427 = scmp.lt.s32.totalorder %s29, 0
      %s428 = scalar_select %p427, %s29, 0
      %s429 = sadd.s32 %s428, %s426
      %s430 = sadd.s32 %s429, %s424
      %s431 = smul.addr %s430, 4
      %s432 = scalar_lea.vmem %s0, %s431
      %p433 = scmp.lt.s32.totalorder %s29, 0
      %s434 = scalar_select %p433, %s29, 0
      %p435 = scmp.lt.s32.totalorder %s30, 1
      %s436 = scalar_select %p435, %s30, 1
      %p437 = scmp.lt.s32.totalorder %s31, 0
      %s438 = scalar_select %p437, %s31, 0
      %s439 = sadd.s32 %s438, %s436
      %s440 = smul.addr %s434, 2
      %s441 = sadd.s32 %s439, %s440
      %s442 = smul.addr %s441, 4
      %s443 = scalar_lea.vmem %s1, %s442
      %p444 = scmp.lt.s32.totalorder %s30, 1
      %s445 = scalar_select %p444, %s30, 1
      %p446 = scmp.lt.s32.totalorder %s31, 0
      %s447 = scalar_select %p446, %s31, 0
      %s448 = sadd.s32 %s447, %s445
      %s449 = smul.addr %s448, 4
      %s450 = scalar_lea.vmem %s2, %s449
      %p451 = scmp.lt.s32.totalorder %s30, 1
      %s452 = scalar_select %p451, %s30, 1
      %p453 = scmp.lt.s32.totalorder %s31, 0
      %s454 = scalar_select %p453, %s31, 0
      %s455 = sadd.s32 %s454, %s452
      %s456 = smul.addr %s455, 4
      %s457 = scalar_lea.vmem %s3, %s456
      %p458 = scmp.lt.s32.totalorder %s29, 0
      %s459 = scalar_select %p458, %s29, 0
      %s460 = scalar_lea.vmem [#allocation3], %s459
      %p461 = scmp.lt.s32.totalorder %s29, 0
      %s462 = scalar_select %p461, %s29, 0
      %s463 = scalar_lea.vmem [#allocation4], %s462
      %p464 = scmp.lt.s32.totalorder %s29, 0
      %s465 = scalar_select %p464, %s29, 0
      %s466 = scalar_lea.vmem [#allocation5], %s465
      %p467 = scmp.lt.s32.totalorder %s30, 1
      %s468 = scalar_select %p467, %s30, 1
      %p469 = scmp.lt.s32.totalorder %s31, 0
      %s470 = scalar_select %p469, %s31, 0
      %p471 = scmp.lt.s32.totalorder %s29, 0
      %s472 = scalar_select %p471, %s29, 0
      %s473 = sadd.s32 %s472, %s470
      %s474 = sadd.s32 %s473, %s468
      %s475 = smul.addr %s474, 4
      %s476 = scalar_lea.vmem %s7, %s475
      %p478 = scmp.eq.s32.totalorder %s31, 0
      // Predicated region
      $region49: #{mamba_block_forward.12} parent=47 // pred_check
        %p479 = pneg %p478
      $region50: #{mamba_block_forward.12} parent=47 // pred_check_branch
        %481 = sbr.rel (%p479) target = $region52
      $region51: #{mamba_block_forward.12} parent=47 // pred_region
        %vm482 = vcmask 523264
        %483 = vst.msk [vmem:[#allocation2] sm:$0xff] %vm482, 0.0
        %484 = vst.msk [vmem:[#allocation2 + $0x8] sm:$0xff] %vm482, 0.0
      $region52: #{mamba_block_forward.12} parent=47 // pred_fallthru
        _
      %v485 = vld [vmem:[%s432] sm:$0xf]
      %v486 = vld [vmem:[%s450] sm:$0xf]
      %v487 = vld [vmem:[%s457] sm:$0xf]
      %v488 = vld [vmem:[%s460] sm:$0x1]
      %v489 = vld [vmem:[%s463] sm:$0x1]
      %v490 = vld [vmem:[%s466] sm:$0x1]
      %v491 = vld [vmem:[%s443] sm:$0xf]
      %v492 = vunpack.c.l.bf16 %v491
      %v494 = vlaneseq
      %v495 = vshrl.u32 %v494, 7
      %v496 = vsub.s32 0, %v495
      %v497 = vrot.slane %v490, %v496
      %v499 = vadd.f32 %v492, %v497
      %vm500 = vcmp.gt.f32.partialorder %v499, 20.0
      %v501 = vmul.f32 %v499, 1.442695
      %v502 = vpow.pop %v501
      %v503 = vadd.f32 %v502, 1.0
      %v504 = vlog2.pop %v503
      %v505 = vmul.f32 %v504, 0.6931472
      %v506 = vsel %vm500, %v499, %v505
      %v508 = vlaneseq
      %v509 = vshrl.u32 %v508, 7
      %v510 = vsub.s32 0, %v509
      %v511 = vrot.slane %v488, %v510
      %v513 = vmul.f32 %v506, %v511
      %v514 = vlaneseq
      %v515 = vshrl.u32 %v514, 7
      %v516 = vlaneseq
      %v517 = vand.u32 %v516, 127
      %vm518 = vcmp.ge.s32.totalorder %v515, %v517
      %v519 = vsel %vm518, 1, 0
      %v520 = vcvt.s32.f32 %v519
      %vm521 = vcmask 64512
      %v523 = vsel %vm521, %v520, 0
      %525 = vmatprep.subr.mxu0 0.0
      %526 = vmatpush1.msra.mxu0 %v513
      %527 = vmatprep.subr.mxu0 0.0
      %528 = vmatpush1.msra.mxu0 0.0
      %529 = vmatprep.subr.mxu0 0.0
      %530 = vmatpush1.msra.mxu0 0.0
      %531 = vmatprep.subr.mxu0 0.0
      %532 = vmatpush1.msra.mxu0 0.0
      %533 = vmatprep.subr.mxu0 0.0
      %534 = vmatpush1.msra.mxu0 0.0
      %535 = vmatprep.subr.mxu0 0.0
      %536 = vmatpush1.msra.mxu0 0.0
      %537 = vmatprep.subr.mxu0 0.0
      %538 = vmatpush1.msra.mxu0 0.0
      %539 = vmatprep.subr.mxu0 0.0
      %540 = vmatpush1.msra.mxu0 0.0
      %541 = vmatprep.subr.mxu0 0.0
      %542 = vmatpush1.msra.mxu0 0.0
      %543 = vmatprep.subr.mxu0 0.0
      %544 = vmatpush1.msra.mxu0 0.0
      %545 = vmatprep.subr.mxu0 0.0
      %546 = vmatpush1.msra.mxu0 0.0
      %547 = vmatprep.subr.mxu0 0.0
      %548 = vmatpush1.msra.mxu0 0.0
      %549 = vmatprep.subr.mxu0 0.0
      %550 = vmatpush1.msra.mxu0 0.0
      %551 = vmatprep.subr.mxu0 0.0
      %552 = vmatpush1.msra.mxu0 0.0
      %553 = vmatprep.subr.mxu0 0.0
      %554 = vmatpush1.msra.mxu0 0.0
      %555 = vmatprep.subr.mxu0 0.0
      %556 = vmatpush1.msra.mxu0 0.0
      %557 = vmatprep.subr.mxu0 0.0
      %558 = vmatpush1.msra.mxu0 0.0
      %559 = vmatprep.subr.mxu0 0.0
      %560 = vmatpush1.msra.mxu0 0.0
      %561 = vmatprep.subr.mxu0 0.0
      %562 = vmatpush1.msra.mxu0 0.0
      %563 = vmatprep.subr.mxu0 0.0
      %564 = vmatpush1.msra.mxu0 0.0
      %565 = vmatprep.subr.mxu0 0.0
      %566 = vmatpush1.msra.mxu0 0.0
      %567 = vmatprep.subr.mxu0 0.0
      %568 = vmatpush1.msra.mxu0 0.0
      %569 = vmatprep.subr.mxu0 0.0
      %570 = vmatpush1.msra.mxu0 0.0
      %571 = vmatprep.subr.mxu0 0.0
      %572 = vmatpush1.msra.mxu0 0.0
      %573 = vmatprep.subr.mxu0 0.0
      %574 = vmatpush1.msra.mxu0 0.0
      %575 = vmatprep.subr.mxu0 0.0
      %576 = vmatpush1.msra.mxu0 0.0
      %577 = vmatprep.subr.mxu0 0.0
      %578 = vmatpush1.msra.mxu0 0.0
      %579 = vmatprep.subr.mxu0 0.0
      %580 = vmatpush1.msra.mxu0 0.0
      %581 = vmatprep.subr.mxu0 0.0
      %582 = vmatpush1.msra.mxu0 0.0
      %583 = vmatprep.subr.mxu0 0.0
      %584 = vmatpush1.msra.mxu0 0.0
      %585 = vmatprep.subr.mxu0 0.0
      %586 = vmatpush1.msra.mxu0 0.0
      %587 = vmatprep.subr.mxu0 0.0
      %588 = vmatpush1.msra.mxu0 0.0
      %589 = vmatprep.mubr.f32.mxu0 0.0
      %590 = vmatmul.mubr.f32.gmra.mrb[0].mxu0 %v523
      %v591 = vpop.f32.mrb[0].mxu0
      %v592 = vadd.f32 0.0, %v591
      %v593 = vpop.f32.mrb[0].mxu0
      %594 = vdwg.mxu0
      %v595 = vmul.f32 %v592, 1.442695
      %v596 = vpow.pop %v595
      %v597 = vlaneseq
      %v598 = vshrl.u32 %v597, 7
      %v599 = vsub.s32 7, %v598
      %v600 = vrot.slane %v592, %v599
      %v601 = vsub.f32 %v600, %v592
      %v602 = vmul.f32 %v601, 1.442695
      %v603 = vpow.pop %v602
      %vm604 = vcmask 130048
      %v606 = vsel %vm604, %v487, 0
      %v609 = vsel %vm604, %v486, 0
      %611 = vmatprep.subr.bf16.mxu0 0
      %612 = vmatpush1.bf16.xpose.msra.mxu0 %v609
      %613 = vmatprep.subr.bf16.mxu0 0
      %614 = vmatpush1.bf16.xpose.msra.mxu0 0
      %615 = vmatprep.subr.bf16.mxu0 0
      %616 = vmatpush1.bf16.xpose.msra.mxu0 0
      %617 = vmatprep.subr.bf16.mxu0 0
      %618 = vmatpush1.bf16.xpose.msra.mxu0 0
      %619 = vmatprep.subr.bf16.mxu0 0
      %620 = vmatpush1.bf16.xpose.msra.mxu0 0
      %621 = vmatprep.subr.bf16.mxu0 0
      %622 = vmatpush1.bf16.xpose.msra.mxu0 0
      %623 = vmatprep.subr.bf16.mxu0 0
      %624 = vmatpush1.bf16.xpose.msra.mxu0 0
      %625 = vmatprep.subr.bf16.mxu0 0
      %626 = vmatpush1.bf16.xpose.msra.mxu0 0
      %627 = vmatprep.subr.bf16.mxu0 0
      %628 = vmatpush1.bf16.xpose.msra.mxu0 0
      %629 = vmatprep.subr.bf16.mxu0 0
      %630 = vmatpush1.bf16.xpose.msra.mxu0 0
      %631 = vmatprep.subr.bf16.mxu0 0
      %632 = vmatpush1.bf16.xpose.msra.mxu0 0
      %633 = vmatprep.subr.bf16.mxu0 0
      %634 = vmatpush1.bf16.xpose.msra.mxu0 0
      %635 = vmatprep.subr.bf16.mxu0 0
      %636 = vmatpush1.bf16.xpose.msra.mxu0 0
      %637 = vmatprep.subr.bf16.mxu0 0
      %638 = vmatpush1.bf16.xpose.msra.mxu0 0
      %639 = vmatprep.subr.bf16.mxu0 0
      %640 = vmatpush1.bf16.xpose.msra.mxu0 0
      %641 = vmatprep.subr.bf16.mxu0 0
      %642 = vmatpush1.bf16.xpose.msra.mxu0 0
      %643 = vmatprep.mubr.bf16.mxu0 0
      %644 = vmatmul.mubr.bf16.gmra.mrb[0].mxu0 %v606
      %v645 = vpop.f32.mrb[0].mxu0
      %v646 = vadd.f32 0.0, %v645
      %v647 = vpop.f32.mrb[0].mxu0
      %v648 = vpop.f32.mrb[0].mxu0
      %v649 = vpop.f32.mrb[0].mxu0
      %650 = vdwg.mxu0
      %v651 = vunpack.c.l.bf16 %v485
      %653 = vset.pattern.permute.xlu0 0
      %654 = vperm.xlu0 %653, %v506
      %v655 = vpop.permute.xlu0 %654
      %v657 = vmul.f32 %v651, %v655
      %v658 = vpack.c.bf16 %v657, %v657
      %659 = vxpose.xlu0.b32.start [1/16] %v592, 128
      %660 = vxpose.xlu0.b32.cont [2/16] 0.0, 128
      %661 = vxpose.xlu0.b32.cont [3/16] 0.0, 128
      %662 = vxpose.xlu0.b32.cont [4/16] 0.0, 128
      %663 = vxpose.xlu0.b32.cont [5/16] 0.0, 128
      %664 = vxpose.xlu0.b32.cont [6/16] 0.0, 128
      %665 = vxpose.xlu0.b32.cont [7/16] 0.0, 128
      %666 = vxpose.xlu0.b32.cont [8/16] 0.0, 128
      %667 = vxpose.xlu0.b32.cont [9/16] 0.0, 128
      %668 = vxpose.xlu0.b32.cont [10/16] 0.0, 128
      %669 = vxpose.xlu0.b32.cont [11/16] 0.0, 128
      %670 = vxpose.xlu0.b32.cont [12/16] 0.0, 128
      %671 = vxpose.xlu0.b32.cont [13/16] 0.0, 128
      %672 = vxpose.xlu0.b32.cont [14/16] 0.0, 128
      %673 = vxpose.xlu0.b32.cont [15/16] 0.0, 128
      %674 = vxpose.xlu0.b32.end [16/16] 0.0, 128
      %v675 = vpop.trf.xlu0
      %v676 = vpop.trf.xlu0
      %v677 = vpop.trf.xlu0
      %v678 = vpop.trf.xlu0
      %v679 = vpop.trf.xlu0
      %v680 = vpop.trf.xlu0
      %v681 = vpop.trf.xlu0
      %v682 = vpop.trf.xlu0
      %v683 = vpop.trf.xlu0
      %v684 = vpop.trf.xlu0
      %v685 = vpop.trf.xlu0
      %v686 = vpop.trf.xlu0
      %v687 = vpop.trf.xlu0
      %v688 = vpop.trf.xlu0
      %v689 = vpop.trf.xlu0
      %v690 = vpop.trf.xlu0
      %692 = vset.pattern.permute.xlu0 0
      %693 = vperm.xlu0 %692, %v592
      %v694 = vpop.permute.xlu0 %693
      %v696 = vlaneseq
      %v697 = vshrl.u32 %v696, 7
      %v698 = vsub.s32 0, %v697
      %v699 = vrot.slane %v675, %v698
      %v700 = vsub.f32 %v694, %v699
      %v701 = vsel %vm518, %v700, -inf
      %v702 = vpack.c.bf16 %v701, %v701
      %v704 = vmul.bf16 %v702, 1069105081
      %v705 = vpow.bf16.pop %v704
      %v706 = vunpack.c.l.bf16 %v705
      %v707 = vmul.f32 %v646, %v706
      %v708 = vpack.c.bf16 %v707, %v707
      %v709 = vunpack.c.l.bf16 %v487
      %711 = vset.pattern.permute.xlu0 0
      %712 = vperm.xlu0 %711, %v596
      %v713 = vpop.permute.xlu0 %712
      %v715 = vmul.f32 %v709, %v713
      %v716 = vpack.c.bf16 %v715, %v715
      %v717 = vld [vmem:[#allocation2] sm:$0xff]
      %v718 = vld [vmem:[#allocation2 + $0x8] sm:$0xff]
      %v719 = vpack.c.bf16 %v718, %v717
      %v721 = vsel %vm604, %v716, 0
      %723 = vmatprep.subr.bf16.mxu0 0
      %724 = vmatpush1.bf16.msra.mxu0 %v719
      %725 = vmatprep.subr.bf16.mxu0 0
      %726 = vmatpush1.bf16.msra.mxu0 0
      %727 = vmatprep.subr.bf16.mxu0 0
      %728 = vmatpush1.bf16.msra.mxu0 0
      %729 = vmatprep.subr.bf16.mxu0 0
      %730 = vmatpush1.bf16.msra.mxu0 0
      %731 = vmatprep.subr.bf16.mxu0 0
      %732 = vmatpush1.bf16.msra.mxu0 0
      %733 = vmatprep.subr.bf16.mxu0 0
      %734 = vmatpush1.bf16.msra.mxu0 0
      %735 = vmatprep.subr.bf16.mxu0 0
      %736 = vmatpush1.bf16.msra.mxu0 0
      %737 = vmatprep.subr.bf16.mxu0 0
      %738 = vmatpush1.bf16.msra.mxu0 0
      %739 = vmatprep.subr.bf16.mxu0 0
      %740 = vmatpush1.bf16.msra.mxu0 0
      %741 = vmatprep.subr.bf16.mxu0 0
      %742 = vmatpush1.bf16.msra.mxu0 0
      %743 = vmatprep.subr.bf16.mxu0 0
      %744 = vmatpush1.bf16.msra.mxu0 0
      %745 = vmatprep.subr.bf16.mxu0 0
      %746 = vmatpush1.bf16.msra.mxu0 0
      %747 = vmatprep.subr.bf16.mxu0 0
      %748 = vmatpush1.bf16.msra.mxu0 0
      %749 = vmatprep.subr.bf16.mxu0 0
      %750 = vmatpush1.bf16.msra.mxu0 0
      %751 = vmatprep.subr.bf16.mxu0 0
      %752 = vmatpush1.bf16.msra.mxu0 0
      %753 = vmatprep.subr.bf16.mxu0 0
      %754 = vmatpush1.bf16.msra.mxu0 0
      %755 = vmatprep.mubr.bf16.mxu0 0
      %756 = vmatmul.mubr.bf16.gmra.mrb[0].mxu0 %v721
      %v757 = vpop.f32.mrb[0].mxu0
      %v758 = vadd.f32 0.0, %v757
      %v759 = vpop.f32.mrb[0].mxu0
      %v760 = vpop.f32.mrb[0].mxu0
      %v761 = vpop.f32.mrb[0].mxu0
      %762 = vdwg.mxu0
      %v764 = vsel %vm521, %v708, 0
      %vm766 = vcmask 1043456
      %v768 = vsel %vm766, %v658, 0
      %770 = vmatprep.subr.bf16.mxu0 0
      %771 = vmatpush1.bf16.msra.mxu0 %v768
      %772 = vmatprep.subr.bf16.mxu0 0
      %773 = vmatpush1.bf16.msra.mxu0 0
      %774 = vmatprep.subr.bf16.mxu0 0
      %775 = vmatpush1.bf16.msra.mxu0 0
      %776 = vmatprep.subr.bf16.mxu0 0
      %777 = vmatpush1.bf16.msra.mxu0 0
      %778 = vmatprep.subr.bf16.mxu0 0
      %779 = vmatpush1.bf16.msra.mxu0 0
      %780 = vmatprep.subr.bf16.mxu0 0
      %781 = vmatpush1.bf16.msra.mxu0 0
      %782 = vmatprep.subr.bf16.mxu0 0
      %783 = vmatpush1.bf16.msra.mxu0 0
      %784 = vmatprep.subr.bf16.mxu0 0
      %785 = vmatpush1.bf16.msra.mxu0 0
      %786 = vmatprep.subr.bf16.mxu0 0
      %787 = vmatpush1.bf16.msra.mxu0 0
      %788 = vmatprep.subr.bf16.mxu0 0
      %789 = vmatpush1.bf16.msra.mxu0 0
      %790 = vmatprep.subr.bf16.mxu0 0
      %791 = vmatpush1.bf16.msra.mxu0 0
      %792 = vmatprep.subr.bf16.mxu0 0
      %793 = vmatpush1.bf16.msra.mxu0 0
      %794 = vmatprep.subr.bf16.mxu0 0
      %795 = vmatpush1.bf16.msra.mxu0 0
      %796 = vmatprep.subr.bf16.mxu0 0
      %797 = vmatpush1.bf16.msra.mxu0 0
      %798 = vmatprep.subr.bf16.mxu0 0
      %799 = vmatpush1.bf16.msra.mxu0 0
      %800 = vmatprep.subr.bf16.mxu0 0
      %801 = vmatpush1.bf16.msra.mxu0 0
      %802 = vmatprep.mubr.bf16.mxu0 0
      %803 = vmatmul.mubr.bf16.gmra.mrb[0].mxu0 %v764
      %v804 = vpop.f32.mrb[0].mxu0
      %v805 = vadd.f32 %v758, %v804
      %v806 = vpop.f32.mrb[0].mxu0
      %v807 = vpop.f32.mrb[0].mxu0
      %v808 = vpop.f32.mrb[0].mxu0
      %809 = vdwg.mxu0
      %v811 = vlaneseq
      %v812 = vshrl.u32 %v811, 7
      %v813 = vsub.s32 0, %v812
      %v814 = vrot.slane %v489, %v813
      %815 = vset.pattern.permute.xlu0 0
      %816 = vperm.xlu0 %815, %v814
      %v817 = vpop.permute.xlu0 %816
      %v819 = vmul.f32 %v817, %v651
      %v820 = vadd.f32 %v805, %v819
      %v821 = vpack.c.bf16 %v820, %v820
      %vm822 = vcmask 519168
      %823 = vst.msk [vmem:[%s476] sm:$0xf] %vm822, %v821
      %v824 = vunpack.c.l.bf16 %v486
      %826 = vset.pattern.permute.xlu0 0
      %827 = vperm.xlu0 %826, %v603
      %v828 = vpop.permute.xlu0 %827
      %v830 = vmul.f32 %v824, %v828
      %v831 = vpack.c.bf16 %v830, %v830
      %832 = vxpose.xlu0.c.b16.start [1/8] %v831, 128
      %833 = vxpose.xlu0.c.b16.cont [2/8] 0, 128
      %834 = vxpose.xlu0.c.b16.cont [3/8] 0, 128
      %835 = vxpose.xlu0.c.b16.cont [4/8] 0, 128
      %836 = vxpose.xlu0.c.b16.cont [5/8] 0, 128
      %837 = vxpose.xlu0.c.b16.cont [6/8] 0, 128
      %838 = vxpose.xlu0.c.b16.cont [7/8] 0, 128
      %839 = vxpose.xlu0.c.b16.end [8/8] 0, 128
      %v840 = vpop.trf.xlu0
      %v841 = vpop.trf.xlu0
      %v842 = vpop.trf.xlu0
      %v843 = vpop.trf.xlu0
      %v844 = vpop.trf.xlu0
      %v845 = vpop.trf.xlu0
      %v846 = vpop.trf.xlu0
      %v847 = vpop.trf.xlu0
      %v849 = vsel %vm521, %v840, 0
      %851 = vmatprep.subr.bf16.mxu0 0
      %852 = vmatpush1.bf16.msra.mxu0 %v768
      %853 = vmatprep.subr.bf16.mxu0 0
      %854 = vmatpush1.bf16.msra.mxu0 0
      %855 = vmatprep.subr.bf16.mxu0 0
      %856 = vmatpush1.bf16.msra.mxu0 0
      %857 = vmatprep.subr.bf16.mxu0 0
      %858 = vmatpush1.bf16.msra.mxu0 0
      %859 = vmatprep.subr.bf16.mxu0 0
      %860 = vmatpush1.bf16.msra.mxu0 0
      %861 = vmatprep.subr.bf16.mxu0 0
      %862 = vmatpush1.bf16.msra.mxu0 0
      %863 = vmatprep.subr.bf16.mxu0 0
      %864 = vmatpush1.bf16.msra.mxu0 0
      %865 = vmatprep.subr.bf16.mxu0 0
      %866 = vmatpush1.bf16.msra.mxu0 0
      %867 = vmatprep.subr.bf16.mxu0 0
      %868 = vmatpush1.bf16.msra.mxu0 0
      %869 = vmatprep.subr.bf16.mxu0 0
      %870 = vmatpush1.bf16.msra.mxu0 0
      %871 = vmatprep.subr.bf16.mxu0 0
      %872 = vmatpush1.bf16.msra.mxu0 0
      %873 = vmatprep.subr.bf16.mxu0 0
      %874 = vmatpush1.bf16.msra.mxu0 0
      %875 = vmatprep.subr.bf16.mxu0 0
      %876 = vmatpush1.bf16.msra.mxu0 0
      %877 = vmatprep.subr.bf16.mxu0 0
      %878 = vmatpush1.bf16.msra.mxu0 0
      %879 = vmatprep.subr.bf16.mxu0 0
      %880 = vmatpush1.bf16.msra.mxu0 0
      %881 = vmatprep.subr.bf16.mxu0 0
      %882 = vmatpush1.bf16.msra.mxu0 0
      %883 = vmatprep.mubr.bf16.mxu0 0
      %884 = vmatmul.mubr.bf16.gmra.mrb[0].mxu0 %v849
      %v885 = vpop.f32.mrb[0].mxu0
      %v886 = vadd.f32 0.0, %v885
      %v887 = vpop.f32.mrb[0].mxu0
      %v888 = vpop.f32.mrb[0].mxu0
      %v889 = vadd.f32 0.0, %v888
      %v890 = vpop.f32.mrb[0].mxu0
      %891 = vdwg.mxu0
      %v892 = vld [vmem:[#allocation2] sm:$0xff]
      %v893 = vld [vmem:[#allocation2 + $0x8] sm:$0xff]
      %v894 = vrot.slane %v596, 7
      %s895 = vtos %v894
      %v896 = vstv %s895
      %v898 = vmul.f32 %v896, %v892
      %v899 = vmul.f32 %v896, %v893
      %v900 = vadd.f32 %v898, %v886
      %v901 = vadd.f32 %v899, %v889
      %vm902 = vcmask 523264
      %903 = vst.msk [vmem:[#allocation2] sm:$0xff] %vm902, %v900
      %904 = vst.msk [vmem:[#allocation2 + $0x8] sm:$0xff] %vm902, %v901
      %p905 = scmp.lt.s32.totalorder %s30, 1
      %s906 = scalar_select %p905, %s30, 1
      %p907 = scmp.lt.s32.totalorder %s31, 0
      %s908 = scalar_select %p907, %s31, 0
      %p909 = scmp.lt.s32.totalorder %s29, 0
      %s910 = scalar_select %p909, %s29, 0
      %s911 = sadd.s32 %s910, %s908
      %s912 = sadd.s32 %s911, %s906
      %s913 = smul.addr %s912, 4
      %s914 = scalar_lea.vmem %s7, %s913
      // Predicated region
      $region53: #{mamba_block_forward.12} parent=47 // pred_check
        %p915 = pneg %p259
      $region54: #{mamba_block_forward.12} parent=47 // pred_check_branch
        %917 = sbr.rel (%p915) target = $region56
      $region55: #{mamba_block_forward.12} parent=47 // pred_region
        _
      $region56: #{mamba_block_forward.12} parent=47 // pred_fallthru
        _
    $region48: #{mamba_block_forward.12} parent=5 // pred_fallthru
      _
    %p918 = scmp.le.s32.totalorder 2, %s19
    // Predicated region
    $region57: #{mamba_block_forward.12} parent=5 // pred_check
      %p919 = pneg %p918
    $region58: #{mamba_block_forward.12} parent=5 // pred_check_branch
      %921 = sbr.rel (%p919) target = $region60
    $region59: #{mamba_block_forward.12} parent=5 // pred_region
      %s922 = ssub.s32 %s19, 2
      // Predicated region
      $region61: #{mamba_block_forward.12} parent=59 // pred_check
        %p923 = pneg %p265
      $region62: #{mamba_block_forward.12} parent=59 // pred_check_branch
        %925 = sbr.rel (%p923) target = $region64
      $region63: #{mamba_block_forward.12} parent=59 // pred_region
        %p926 = scmp.lt.s32.totalorder %s33, 1
        %s927 = scalar_select %p926, %s33, 1
        %p928 = scmp.lt.s32.totalorder %s34, 0
        %s929 = scalar_select %p928, %s34, 0
        %p930 = scmp.lt.s32.totalorder %s32, 0
        %s931 = scalar_select %p930, %s32, 0
        %s932 = sadd.s32 %s931, %s929
        %s933 = sadd.s32 %s932, %s927
        %s934 = smul.addr %s933, 4
        %s935 = scalar_lea.vmem %s7, %s934
      $region64: #{mamba_block_forward.12} parent=59 // pred_fallthru
        _
    $region60: #{mamba_block_forward.12} parent=5 // pred_fallthru
      _
  $region6: #{mamba_block_forward.12} parent=0 // loop_footer
    %s23 = sadd.s32 1, %s19
  $region7: #{mamba_block_forward.12} parent=0 // loop_footer_branch
    %18 = sbr.rel target = $region3
  $region8: #{mamba_block_forward.12} parent=0 // loop_exit
    _

// kernel: mamba_block_forward.16
$region0: #{mamba_block_forward.16}
  #allocation0 [shape = 'u32[]', space=smem, size = 0x4, offset = 0x4, fixed_abs, tag = 'smem constant byte address 0x4 - core index']
  #allocation1 [shape = 'u32[144,128]{1,0:T(1,128)}', space=vmem, size = 0x12000, scoped, tag = 'internal scratch']
  #allocation2 [shape = 'f32[16,128]{1,0:T(8,128)}', space=vmem, size = 0x2000, scoped, tag = 'scratch operand']
  %s0 = inlined_call_operand.vmem [shape: bf16[16,32], index: 0, kind: input, shape index: {}]
  %s1 = inlined_call_operand.vmem [shape: bf16[32,128], index: 1, kind: input, shape index: {}]
  %s2 = inlined_call_operand.vmem [shape: f32[1,128], index: 2, kind: input, shape index: {}]
  %s3 = inlined_call_operand.vmem [shape: bf16[16,128], index: 3, kind: output, shape index: {}]
  %s4 = sld [smem:[#allocation0]]
  $region30: #{mamba_block_forward.16} parent=0
    _
  %s6 = ssub.s32 1, %s4
  %s7 = scalar_select 0, %s6, %s4
  // Predicated region
  $region2: #{mamba_block_forward.16} parent=0 // pred_check
    _
  $region3: #{mamba_block_forward.16} parent=0 // pred_check_branch
    %9 = sbr.rel (0) target = $region5
  $region4: #{mamba_block_forward.16} parent=0 // pred_region
    _
  $region5: #{mamba_block_forward.16} parent=0 // pred_fallthru
    _
  // Predicated region
  $region6: #{mamba_block_forward.16} parent=0 // pred_check
    _
  $region7: #{mamba_block_forward.16} parent=0 // pred_check_branch
    %11 = sbr.rel (0) target = $region9
  $region8: #{mamba_block_forward.16} parent=0 // pred_region
    _
  $region9: #{mamba_block_forward.16} parent=0 // pred_fallthru
    _
  // Predicated region
  $region10: #{mamba_block_forward.16} parent=0 // pred_check
    _
  $region11: #{mamba_block_forward.16} parent=0 // pred_check_branch
    %13 = sbr.rel (0) target = $region13
  $region12: #{mamba_block_forward.16} parent=0 // pred_region
    _
  $region13: #{mamba_block_forward.16} parent=0 // pred_fallthru
    _
  %p15 = scmp.eq.s32.totalorder 0, 0
  // Predicated region
  $region14: #{mamba_block_forward.16} parent=0 // pred_check
    %p16 = pneg %p15
  $region15: #{mamba_block_forward.16} parent=0 // pred_check_branch
    %18 = sbr.rel (%p16) target = $region17
  $region16: #{mamba_block_forward.16} parent=0 // pred_region
    %19 = vst [vmem:[#allocation2] sm:$0xff] 0.0
    %20 = vst [vmem:[#allocation2 + $0x8] sm:$0xff] 0.0
  $region17: #{mamba_block_forward.16} parent=0 // pred_fallthru
    _
  %v21 = vld [vmem:[#allocation2] sm:$0xff]
  %v22 = vld [vmem:[#allocation2 + $0x8] sm:$0xff]
  %v23 = vld [vmem:[%s0] sm:$0xf]
  %v24 = vld [vmem:[%s0 + $0x4] sm:$0xf]
  %v25 = vld [vmem:[%s1] sm:$0xf]
  %v26 = vld [vmem:[%s1 + $0x4] sm:$0xf]
  %v27 = vld [vmem:[%s1 + $0x8] sm:$0xf]
  %v28 = vld [vmem:[%s1 + $0xc] sm:$0xf]
  %v31 = vunpack.c.l.b16 %v23
  %v32 = vunpack.c.l.b16 %v24
  %v33 = vpack.c.b16 %v32, %v31
  %v38 = vunpack.c.l.b16 %v25
  %v39 = vunpack.c.l.b16 %v26
  %v40 = vunpack.c.l.b16 %v27
  %v41 = vunpack.c.l.b16 %v28
  %v42 = vpack.c.b16 %v39, %v38
  %v43 = vpack.c.b16 %v41, %v40
  %vm46 = vcmask 261120
  %v48 = vsel %vm46, %v33, 0
  %50 = vmatprep.subr.bf16.mxu0 0
  %51 = vmatpush1.bf16.msra.mxu0 %v42
  %52 = vmatprep.subr.bf16.mxu0 0
  %53 = vmatpush1.bf16.msra.mxu0 %v43
  %54 = vmatprep.subr.bf16.mxu0 0
  %55 = vmatpush1.bf16.msra.mxu0 0
  %56 = vmatprep.subr.bf16.mxu0 0
  %57 = vmatpush1.bf16.msra.mxu0 0
  %58 = vmatprep.subr.bf16.mxu0 0
  %59 = vmatpush1.bf16.msra.mxu0 0
  %60 = vmatprep.subr.bf16.mxu0 0
  %61 = vmatpush1.bf16.msra.mxu0 0
  %62 = vmatprep.subr.bf16.mxu0 0
  %63 = vmatpush1.bf16.msra.mxu0 0
  %64 = vmatprep.subr.bf16.mxu0 0
  %65 = vmatpush1.bf16.msra.mxu0 0
  %66 = vmatprep.subr.bf16.mxu0 0
  %67 = vmatpush1.bf16.msra.mxu0 0
  %68 = vmatprep.subr.bf16.mxu0 0
  %69 = vmatpush1.bf16.msra.mxu0 0
  %70 = vmatprep.subr.bf16.mxu0 0
  %71 = vmatpush1.bf16.msra.mxu0 0
  %72 = vmatprep.subr.bf16.mxu0 0
  %73 = vmatpush1.bf16.msra.mxu0 0
  %74 = vmatprep.subr.bf16.mxu0 0
  %75 = vmatpush1.bf16.msra.mxu0 0
  %76 = vmatprep.subr.bf16.mxu0 0
  %77 = vmatpush1.bf16.msra.mxu0 0
  %78 = vmatprep.subr.bf16.mxu0 0
  %79 = vmatpush1.bf16.msra.mxu0 0
  %80 = vmatprep.subr.bf16.mxu0 0
  %81 = vmatpush1.bf16.msra.mxu0 0
  %82 = vmatprep.mubr.bf16.mxu0 0
  %83 = vmatmul.mubr.bf16.gmra.mrb[0].mxu0 %v48
  %v84 = vpop.f32.mrb[0].mxu0
  %v85 = vadd.f32 0.0, %v84
  %v86 = vpop.f32.mrb[0].mxu0
  %v87 = vpop.f32.mrb[0].mxu0
  %v88 = vadd.f32 0.0, %v87
  %v89 = vpop.f32.mrb[0].mxu0
  %90 = vdwg.mxu0
  %v91 = vadd.f32 %v21, %v85
  %v92 = vadd.f32 %v22, %v88
  %93 = vst [vmem:[#allocation2] sm:$0xff] %v91
  %94 = vst [vmem:[#allocation2 + $0x8] sm:$0xff] %v92
  // Predicated region
  $region18: #{mamba_block_forward.16} parent=0 // pred_check
    %p95 = pneg %p15
  $region19: #{mamba_block_forward.16} parent=0 // pred_check_branch
    %97 = sbr.rel (%p95) target = $region21
  $region20: #{mamba_block_forward.16} parent=0 // pred_region
    %v98 = vld [vmem:[#allocation2] sm:$0xff]
    %v99 = vld [vmem:[#allocation2 + $0x8] sm:$0xff]
    %v100 = vld [vmem:[%s2] sm:$0x1]
    %v102 = vlaneseq
    %v103 = vshrl.u32 %v102, 7
    %v104 = vsub.s32 0, %v103
    %v105 = vrot.slane %v100, %v104
    %v107 = vadd.f32 %v98, %v105
    %v108 = vadd.f32 %v99, %v105
    %v109 = vmul.f32 %v107, 0.5
    %v110 = vmul.f32 %v108, 0.5
    %v111 = vmul.f32 %v107, 0.70710677
    %v112 = vmul.f32 %v108, 0.70710677
    %vm113 = vcmp.ge.f32.partialorder %v111, 0.0
    %vm114 = vcmp.ge.f32.partialorder %v112, 0.0
    %v115 = vsel %vm113, 1.0, -1.0
    %v116 = vsel %vm114, 1.0, -1.0
    %v117 = vand.u32 2147483647, %v111
    %v118 = vand.u32 2147483647, %v112
    %v119 = vmul.f32 %v117, 0.3275911
    %v120 = vmul.f32 %v118, 0.3275911
    %v121 = vadd.f32 %v119, 1.0
    %v122 = vadd.f32 %v120, 1.0
    %v123 = vrcp.pop %v121
    %v124 = vmul.f32 1.0, %v123
    %v125 = vrcp.pop %v122
    %v126 = vmul.f32 1.0, %v125
    %v127 = vmul.f32 %v124, 1.0614054
    %v128 = vmul.f32 %v126, 1.0614054
    %v129 = vadd.f32 %v127, -1.4531521
    %v130 = vadd.f32 %v128, -1.4531521
    %v131 = vmul.f32 %v129, %v124
    %v132 = vmul.f32 %v130, %v126
    %v133 = vadd.f32 %v131, 1.4214138
    %v134 = vadd.f32 %v132, 1.4214138
    %v135 = vmul.f32 %v133, %v124
    %v136 = vmul.f32 %v134, %v126
    %v137 = vadd.f32 %v135, -0.28449672
    %v138 = vadd.f32 %v136, -0.28449672
    %v139 = vmul.f32 %v137, %v124
    %v140 = vmul.f32 %v138, %v126
    %v141 = vadd.f32 %v139, 0.2548296
    %v142 = vadd.f32 %v140, 0.2548296
    %v143 = vmul.f32 %v141, %v124
    %v144 = vmul.f32 %v142, %v126
    %v145 = vsub.f32 0.0, %v117
    %v146 = vsub.f32 0.0, %v118
    %v147 = vmul.f32 %v145, %v117
    %v148 = vmul.f32 %v146, %v118
    %v149 = vmul.f32 %v147, 1.442695
    %v150 = vpow.pop %v149
    %v151 = vmul.f32 %v148, 1.442695
    %v152 = vpow.pop %v151
    %v153 = vmul.f32 %v143, %v150
    %v154 = vmul.f32 %v144, %v152
    %v155 = vsub.f32 1.0, %v153
    %v156 = vsub.f32 1.0, %v154
    %v157 = vmul.f32 %v115, %v155
    %v158 = vmul.f32 %v116, %v156
    %v159 = vadd.f32 %v157, 1.0
    %v160 = vadd.f32 %v158, 1.0
    %v161 = vmul.f32 %v109, %v159
    %v162 = vmul.f32 %v110, %v160
    %v163 = vpack.c.bf16 %v162, %v161
    %v165 = vunpack.c.l.b16 %v163
    %v166 = vunpack.c.h.b16 %v163
    %v167 = vpack.c.b16 %v165, %v165
    %v168 = vpack.c.b16 %v166, %v166
    %171 = vst [vmem:[%s3] sm:$0xf] %v167
    %172 = vst [vmem:[%s3 + $0x4] sm:$0xf] %v168
  $region21: #{mamba_block_forward.16} parent=0 // pred_fallthru
    _
  // Predicated region
  $region22: #{mamba_block_forward.16} parent=0 // pred_check
    _
  $region23: #{mamba_block_forward.16} parent=0 // pred_check_branch
    %174 = sbr.rel (0) target = $region25
  $region24: #{mamba_block_forward.16} parent=0 // pred_region
    _
  $region25: #{mamba_block_forward.16} parent=0 // pred_fallthru
    _
  // Predicated region
  $region26: #{mamba_block_forward.16} parent=0 // pred_check
    _
  $region27: #{mamba_block_forward.16} parent=0 // pred_check_branch
    %176 = sbr.rel (0) target = $region29
  $region28: #{mamba_block_forward.16} parent=0 // pred_region
    _
  $region29: #{mamba_block_forward.16} parent=0 // pred_fallthru
    _

// kernel: mamba_block_forward.17
$region0: #{mamba_block_forward.17}
  #allocation0 [shape = 'u32[]', space=smem, size = 0x4, offset = 0x4, fixed_abs, tag = 'smem constant byte address 0x4 - core index']
  #allocation1 [shape = 'u32[144,128]{1,0:T(1,128)}', space=vmem, size = 0x12000, scoped, tag = 'internal scratch']
  #allocation2 [shape = 'f32[16,32]{1,0:T(8,128)}', space=vmem, size = 0x2000, scoped, tag = 'scratch operand']
  %s0 = inlined_call_operand.vmem [shape: bf16[16,128], index: 0, kind: input, shape index: {}]
  %s1 = inlined_call_operand.vmem [shape: bf16[128,32], index: 1, kind: input, shape index: {}]
  %s2 = inlined_call_operand.vmem [shape: f32[1,32], index: 2, kind: input, shape index: {}]
  %s3 = inlined_call_operand.vmem [shape: f32[16,32], index: 3, kind: output, shape index: {}]
  %s4 = sld [smem:[#allocation0]]
  $region30: #{mamba_block_forward.17} parent=0
    _
  %s6 = ssub.s32 1, %s4
  %s7 = scalar_select 0, %s6, %s4
  // Predicated region
  $region2: #{mamba_block_forward.17} parent=0 // pred_check
    _
  $region3: #{mamba_block_forward.17} parent=0 // pred_check_branch
    %9 = sbr.rel (0) target = $region5
  $region4: #{mamba_block_forward.17} parent=0 // pred_region
    _
  $region5: #{mamba_block_forward.17} parent=0 // pred_fallthru
    _
  // Predicated region
  $region6: #{mamba_block_forward.17} parent=0 // pred_check
    _
  $region7: #{mamba_block_forward.17} parent=0 // pred_check_branch
    %11 = sbr.rel (0) target = $region9
  $region8: #{mamba_block_forward.17} parent=0 // pred_region
    _
  $region9: #{mamba_block_forward.17} parent=0 // pred_fallthru
    _
  // Predicated region
  $region10: #{mamba_block_forward.17} parent=0 // pred_check
    _
  $region11: #{mamba_block_forward.17} parent=0 // pred_check_branch
    %13 = sbr.rel (0) target = $region13
  $region12: #{mamba_block_forward.17} parent=0 // pred_region
    _
  $region13: #{mamba_block_forward.17} parent=0 // pred_fallthru
    _
  %p15 = scmp.eq.s32.totalorder 0, 0
  // Predicated region
  $region14: #{mamba_block_forward.17} parent=0 // pred_check
    %p16 = pneg %p15
  $region15: #{mamba_block_forward.17} parent=0 // pred_check_branch
    %18 = sbr.rel (%p16) target = $region17
  $region16: #{mamba_block_forward.17} parent=0 // pred_region
    %vm19 = vcmask 261120
    %20 = vst.msk [vmem:[#allocation2] sm:$0xff] %vm19, 0.0
    %21 = vst.msk [vmem:[#allocation2 + $0x8] sm:$0xff] %vm19, 0.0
  $region17: #{mamba_block_forward.17} parent=0 // pred_fallthru
    _
  %v22 = vld [vmem:[#allocation2] sm:$0xff]
  %v23 = vld [vmem:[#allocation2 + $0x8] sm:$0xff]
  %v24 = vld [vmem:[%s0] sm:$0xf]
  %v25 = vld [vmem:[%s0 + $0x4] sm:$0xf]
  %v26 = vld [vmem:[%s1] sm:$0xf]
  %v27 = vld [vmem:[%s1 + $0x4] sm:$0xf]
  %v28 = vld [vmem:[%s1 + $0x8] sm:$0xf]
  %v29 = vld [vmem:[%s1 + $0xc] sm:$0xf]
  %v30 = vld [vmem:[%s1 + $0x10] sm:$0xf]
  %v31 = vld [vmem:[%s1 + $0x14] sm:$0xf]
  %v32 = vld [vmem:[%s1 + $0x18] sm:$0xf]
  %v33 = vld [vmem:[%s1 + $0x1c] sm:$0xf]
  %v34 = vld [vmem:[%s1 + $0x20] sm:$0xf]
  %v35 = vld [vmem:[%s1 + $0x24] sm:$0xf]
  %v36 = vld [vmem:[%s1 + $0x28] sm:$0xf]
  %v37 = vld [vmem:[%s1 + $0x2c] sm:$0xf]
  %v38 = vld [vmem:[%s1 + $0x30] sm:$0xf]
  %v39 = vld [vmem:[%s1 + $0x34] sm:$0xf]
  %v40 = vld [vmem:[%s1 + $0x38] sm:$0xf]
  %v41 = vld [vmem:[%s1 + $0x3c] sm:$0xf]
  %v44 = vunpack.c.l.b16 %v24
  %v45 = vunpack.c.l.b16 %v25
  %v46 = vpack.c.b16 %v45, %v44
  %v64 = vunpack.c.l.b16 %v26
  %v65 = vunpack.c.l.b16 %v27
  %v66 = vunpack.c.l.b16 %v28
  %v67 = vunpack.c.l.b16 %v29
  %v68 = vunpack.c.l.b16 %v30
  %v69 = vunpack.c.l.b16 %v31
  %v70 = vunpack.c.l.b16 %v32
  %v71 = vunpack.c.l.b16 %v33
  %v72 = vunpack.c.l.b16 %v34
  %v73 = vunpack.c.l.b16 %v35
  %v74 = vunpack.c.l.b16 %v36
  %v75 = vunpack.c.l.b16 %v37
  %v76 = vunpack.c.l.b16 %v38
  %v77 = vunpack.c.l.b16 %v39
  %v78 = vunpack.c.l.b16 %v40
  %v79 = vunpack.c.l.b16 %v41
  %v80 = vpack.c.b16 %v65, %v64
  %v81 = vpack.c.b16 %v67, %v66
  %v82 = vpack.c.b16 %v69, %v68
  %v83 = vpack.c.b16 %v71, %v70
  %v84 = vpack.c.b16 %v73, %v72
  %v85 = vpack.c.b16 %v75, %v74
  %v86 = vpack.c.b16 %v77, %v76
  %v87 = vpack.c.b16 %v79, %v78
  %96 = vmatprep.subr.bf16.mxu0 0
  %97 = vmatpush1.bf16.msra.mxu0 %v80
  %98 = vmatprep.subr.bf16.mxu0 0
  %99 = vmatpush1.bf16.msra.mxu0 %v81
  %100 = vmatprep.subr.bf16.mxu0 0
  %101 = vmatpush1.bf16.msra.mxu0 %v82
  %102 = vmatprep.subr.bf16.mxu0 0
  %103 = vmatpush1.bf16.msra.mxu0 %v83
  %104 = vmatprep.subr.bf16.mxu0 0
  %105 = vmatpush1.bf16.msra.mxu0 %v84
  %106 = vmatprep.subr.bf16.mxu0 0
  %107 = vmatpush1.bf16.msra.mxu0 %v85
  %108 = vmatprep.subr.bf16.mxu0 0
  %109 = vmatpush1.bf16.msra.mxu0 %v86
  %110 = vmatprep.subr.bf16.mxu0 0
  %111 = vmatpush1.bf16.msra.mxu0 %v87
  %112 = vmatprep.subr.bf16.mxu0 0
  %113 = vmatpush1.bf16.msra.mxu0 0
  %114 = vmatprep.subr.bf16.mxu0 0
  %115 = vmatpush1.bf16.msra.mxu0 0
  %116 = vmatprep.subr.bf16.mxu0 0
  %117 = vmatpush1.bf16.msra.mxu0 0
  %118 = vmatprep.subr.bf16.mxu0 0
  %119 = vmatpush1.bf16.msra.mxu0 0
  %120 = vmatprep.subr.bf16.mxu0 0
  %121 = vmatpush1.bf16.msra.mxu0 0
  %122 = vmatprep.subr.bf16.mxu0 0
  %123 = vmatpush1.bf16.msra.mxu0 0
  %124 = vmatprep.subr.bf16.mxu0 0
  %125 = vmatpush1.bf16.msra.mxu0 0
  %126 = vmatprep.subr.bf16.mxu0 0
  %127 = vmatpush1.bf16.msra.mxu0 0
  %128 = vmatprep.mubr.bf16.mxu0 0
  %129 = vmatmul.mubr.bf16.gmra.mrb[0].mxu0 %v46
  %v130 = vpop.f32.mrb[0].mxu0
  %v131 = vadd.f32 0.0, %v130
  %v132 = vpop.f32.mrb[0].mxu0
  %v133 = vpop.f32.mrb[0].mxu0
  %v134 = vadd.f32 0.0, %v133
  %v135 = vpop.f32.mrb[0].mxu0
  %136 = vdwg.mxu0
  %v137 = vadd.f32 %v22, %v131
  %v138 = vadd.f32 %v23, %v134
  %vm139 = vcmask 261120
  %140 = vst.msk [vmem:[#allocation2] sm:$0xff] %vm139, %v137
  %141 = vst.msk [vmem:[#allocation2 + $0x8] sm:$0xff] %vm139, %v138
  // Predicated region
  $region18: #{mamba_block_forward.17} parent=0 // pred_check
    %p142 = pneg %p15
  $region19: #{mamba_block_forward.17} parent=0 // pred_check_branch
    %144 = sbr.rel (%p142) target = $region21
  $region20: #{mamba_block_forward.17} parent=0 // pred_region
    %v145 = vld [vmem:[#allocation2] sm:$0xff]
    %v146 = vld [vmem:[#allocation2 + $0x8] sm:$0xff]
    %v147 = vld [vmem:[%s2] sm:$0x1]
    %v149 = vlaneseq
    %v150 = vshrl.u32 %v149, 7
    %v151 = vsub.s32 0, %v150
    %v152 = vrot.slane %v147, %v151
    %v154 = vadd.f32 %v145, %v152
    %v155 = vadd.f32 %v146, %v152
    %156 = vst.msk [vmem:[%s3] sm:$0xff] %vm139, %v154
    %157 = vst.msk [vmem:[%s3 + $0x8] sm:$0xff] %vm139, %v155
  $region21: #{mamba_block_forward.17} parent=0 // pred_fallthru
    _
  // Predicated region
  $region22: #{mamba_block_forward.17} parent=0 // pred_check
    _
  $region23: #{mamba_block_forward.17} parent=0 // pred_check_branch
    %159 = sbr.rel (0) target = $region25
  $region24: #{mamba_block_forward.17} parent=0 // pred_region
    _
  $region25: #{mamba_block_forward.17} parent=0 // pred_fallthru
    _
  // Predicated region
  $region26: #{mamba_block_forward.17} parent=0 // pred_check
    _
  $region27: #{mamba_block_forward.17} parent=0 // pred_check_branch
    %161 = sbr.rel (0) target = $region29
  $region28: #{mamba_block_forward.17} parent=0 // pred_region
    _
  $region29: #{mamba_block_forward.17} parent=0 // pred_fallthru
    _

</llo_original>
